<compile_context>
chip_gen: v7x
topology: tpu7x:2x2x1
jax: 0.10.0
libtpu: 0.0.40
codegen_flags: <defaults>
</compile_context>

<pallas_src>
import functools

import jax
import jax.numpy as jnp
from jax.experimental import pallas as pl
from jax.experimental.pallas import tpu as pltpu


def painn_mixing_kernel(q_ref, mu_ref, wmix_ref, w1_ref, w2_ref, rows_ref,
                        q_out_ref, mu_out_ref,
                        *, epsilon, ln_eps, compute_dtype):
    f32 = jnp.float32
    cd = compute_dtype
    tn, F = q_ref.shape

    q_f = q_ref[...].astype(f32)                      # [tn, F]  exact f32 residual

    # ---- mu_channel_mix: one fused [3*tn, F] x [F, 2F] matmul (V | W heads) ----
    mu_op = mu_ref[...].reshape(3 * tn, F).astype(cd)  # MXU operand only
    mm = jnp.dot(mu_op, wmix_ref[...], preferred_element_type=f32)   # [3*tn, 2F]
    mm = mm.reshape(3, tn, 2 * F)
    mu_V = mm[:, :, :F]                               # lane-aligned slices (free)
    mu_W = mm[:, :, F:]
    v2 = jnp.sum(mu_V * mu_V, axis=0)                 # [tn, F]
    vw = jnp.sum(mu_V * mu_W, axis=0)                 # [tn, F]
    mu_Vn = jnp.sqrt(v2 + epsilon)

    # packed rows: b1, b2_dq, b2_dmu, b2_dqmu, gamma, beta (all f32)
    b1 = rows_ref[0:1, :]
    b2_dq = rows_ref[1:2, :]
    b2_dmu = rows_ref[2:3, :]
    b2_dqmu = rows_ref[3:4, :]
    gamma = rows_ref[4:5, :]
    beta = rows_ref[5:6, :]

    # ---- intraatomic_context_net: W1 on the fused [tn, 2F] operand, one W2 ----
    ctx = jnp.concatenate([q_ref[...].astype(cd), mu_Vn.astype(cd)], axis=-1)
    h = jnp.dot(ctx, w1_ref[...], preferred_element_type=f32) + b1
    h = h * jax.nn.sigmoid(h)                         # SiLU (f32, EUP)
    x = jnp.dot(h.astype(cd), w2_ref[...], preferred_element_type=f32)  # [tn, 3F]
    dq = x[:, :F] + b2_dq
    dmu = x[:, F:2 * F] + b2_dmu
    dqmu = (x[:, 2 * F:] + b2_dqmu) * vw

    # ---- q update + LayerNorm over the feature axis (torch default eps) ----
    q_sum = q_f + dq + dqmu
    mean = jnp.mean(q_sum, axis=-1, keepdims=True)
    cen = q_sum - mean
    var = jnp.mean(cen * cen, axis=-1, keepdims=True)
    q_out_ref[...] = (cen * jax.lax.rsqrt(var + ln_eps) * gamma + beta
                      ).astype(q_out_ref.dtype)

    # ---- mu update + VectorNorm (rsqrt on EUP; residual re-read from the ref) ----
    # TODO(synk): VectorNorm source not shown in the spec; assumed L2
    # normalization over the vector axis (dim=-2) with the same epsilon.
    mu_new = mu_ref[...] + dmu[None, :, :] * mu_W     # [3, tn, F], f32
    inv = jax.lax.rsqrt(jnp.sum(mu_new * mu_new, axis=0) + epsilon)
    mu_out_ref[...] = (mu_new * inv[None, :, :]).astype(mu_out_ref.dtype)


def _round_up(x, m):
    return ((x + m - 1) // m) * m


def painn_mixing(q, mu, params, *, tn=1024, epsilon=1e-8, ln_eps=1e-5,
                 compute_dtype=jnp.bfloat16, out_dtype=None, mu_vec_first=False):
    """PaiNN mixing block.

    q : [N, 1, F] float32.
    mu: [N, 3, F] (PyTorch module layout) or [3, N, F] when mu_vec_first=True
        (preferred: no layout round-trips around the kernel).
    Returns (q', mu') with q' in q's shape and mu' in the same layout as mu.

    compute_dtype: dtype of MXU operands (weights + activation casts).
    out_dtype:     output dtype (default float32; bf16 halves write traffic).
    """
    N = q.shape[0]
    F = q.shape[-1]
    cd = jnp.dtype(compute_dtype)
    odt = jnp.dtype(out_dtype) if out_dtype is not None else jnp.dtype(jnp.float32)

    q2 = q.reshape(N, F).astype(jnp.float32)          # residual stays f32
    if mu_vec_first:
        assert mu.shape == (3, N, F)
        mu3 = mu.astype(jnp.float32)
    else:
        assert mu.shape == (N, 3, F)
        # TODO(synk): layout plumbing — upstream PaiNN blocks should keep mu
        # resident as [3, N, F] (call with mu_vec_first=True) so these two
        # HBM transpose passes disappear.
        mu3 = jnp.transpose(mu, (1, 0, 2)).astype(jnp.float32)

    w_mix, w1, b1, w2, b2, gamma, beta = params
    w_mix_c = w_mix.astype(cd)                        # [F, 2F]
    w1_c = w1.astype(cd)                              # [2F, F]
    w2_c = w2.astype(cd)                              # [F, 3F]
    rows = jnp.zeros((8, F), jnp.float32)             # packed small vectors
    rows = (rows.at[0].set(b1).at[1].set(b2[:F]).at[2].set(b2[F:2 * F])
                .at[3].set(b2[2 * F:]).at[4].set(gamma).at[5].set(beta))

    # ---- tile sizing: partial last tile allowed (no host padding); keep the
    #      grid at >= 2 steps when possible so v7x's two TCs both get work ----
    pack = 8 if odt.itemsize >= 4 else 16
    n_ceil = _round_up(N, pack)
    tn = max(pack, min(_round_up(tn, pack), n_ceil))
    if n_ceil >= 2 * pack:
        tn = min(tn, _round_up(-(-N // 2), pack))

    wsize, osize = cd.itemsize, odt.itemsize

    def vmem_bytes(t):
        io = 2 * (4 * t * F * 4 + 4 * t * F * osize)      # in/out tiles, x2 buffers
        wts = 2 * (7 * F * F * wsize + 8 * F * 4)         # weights + packed rows
        tmp = 24 * t * F * 4                              # live f32 temporaries
        return io + wts + tmp + (2 << 20)

    while vmem_bytes(tn) > (48 << 20) and tn > pack:
        tn = max(pack, _round_up(tn // 2, pack))
    vmem_limit = int(min(max(vmem_bytes(tn), 32 << 20), 56 << 20))

    grid = (pl.cdiv(N, tn),)

    cost = pl.CostEstimate(
        flops=2 * 11 * N * F * F,                         # 11 FxF matmul-equivs/atom
        transcendentals=4 * N * F,
        bytes_accessed=int(4 * N * F * (4 + osize) + 7 * F * F * wsize + 8 * F * 4))

    kernel = functools.partial(painn_mixing_kernel, epsilon=float(epsilon),
                               ln_eps=float(ln_eps), compute_dtype=cd)

    const = lambda r, c: pl.BlockSpec((r, c), lambda i: (0, 0))

    q_out, mu_out = pl.pallas_call(
        kernel,
        out_shape=(jax.ShapeDtypeStruct((N, F), odt),
                   jax.ShapeDtypeStruct((3, N, F), odt)),
        grid_spec=pltpu.PrefetchScalarGridSpec(
            num_scalar_prefetch=0,
            grid=grid,
            in_specs=[
                pl.BlockSpec((tn, F), lambda i: (i, 0)),          # q   (f32)
                pl.BlockSpec((3, tn, F), lambda i: (0, i, 0)),    # mu  [3,N,F] (f32)
                const(F, 2 * F),                                  # w_mix (compute dtype)
                const(2 * F, F),                                  # w1
                const(F, 3 * F),                                  # w2
                const(8, F),                                      # b1|b2|gamma|beta (f32)
            ],
            out_specs=[
                pl.BlockSpec((tn, F), lambda i: (i, 0)),
                pl.BlockSpec((3, tn, F), lambda i: (0, i, 0)),
            ],
        ),
        compiler_params=pltpu.CompilerParams(
            dimension_semantics=("parallel",),
            vmem_limit_bytes=vmem_limit),
        cost_estimate=cost,
    )(q2, mu3, w_mix_c, w1_c, w2_c, rows)

    q_out = q_out.reshape(q.shape)
    if not mu_vec_first:
        mu_out = jnp.transpose(mu_out, (1, 0, 2))     # back to [N, 3, F]
    return q_out, mu_out


def painn_mixing_ref(q, mu, params, *, epsilon=1e-8, ln_eps=1e-5):
    """Pure-JAX reference mirroring the PyTorch forward (q:[N,1,F], mu:[N,3,F])."""
    w_mix, w1, b1, w2, b2, gamma, beta = params
    F = q.shape[-1]
    mu_mix = mu @ w_mix                                          # [N,3,2F]
    mu_V, mu_W = mu_mix[..., :F], mu_mix[..., F:]
    mu_Vn = jnp.sqrt(jnp.sum(mu_V ** 2, axis=-2, keepdims=True) + epsilon)
    ctx = jnp.concatenate([q, mu_Vn], axis=-1)                   # [N,1,2F]
    h = ctx @ w1 + b1
    h = h * jax.nn.sigmoid(h)
    x = h @ w2 + b2                                              # [N,1,3F]
    dq, dmu, dqmu = x[..., :F], x[..., F:2 * F], x[..., 2 * F:]
    dmu = dmu * mu_W
    dqmu = dqmu * jnp.sum(mu_V * mu_W, axis=1, keepdims=True)
    q_sum = q + dq + dqmu
    mean = jnp.mean(q_sum, axis=-1, keepdims=True)
    var = jnp.mean((q_sum - mean) ** 2, axis=-1, keepdims=True)
    q_out = (q_sum - mean) * jax.lax.rsqrt(var + ln_eps) * gamma + beta
    mu_new = mu + dmu
    mu_out = mu_new / jnp.sqrt(jnp.sum(mu_new ** 2, axis=-2, keepdims=True)
                               + epsilon)
    return q_out, mu_out


def init_params(key, n_atom_basis):
    F = n_atom_basis
    ks = jax.random.split(key, 5)
    scale = lambda fan_in: 1.0 / jnp.sqrt(jnp.float32(fan_in))
    w_mix = jax.random.normal(ks[0], (F, 2 * F), jnp.float32) * scale(F)
    w1 = jax.random.normal(ks[1], (2 * F, F), jnp.float32) * scale(2 * F)
    b1 = jax.random.normal(ks[2], (F,), jnp.float32) * 0.01
    w2 = jax.random.normal(ks[3], (F, 3 * F), jnp.float32) * scale(F)
    b2 = jax.random.normal(ks[4], (3 * F,), jnp.float32) * 0.01
    gamma = jnp.ones((F,), jnp.float32)
    beta = jnp.zeros((F,), jnp.float32)
    return (w_mix, w1, b1, w2, b2, gamma, beta)


if __name__ == "__main__":
    key = jax.random.PRNGKey(0)
    n_atoms, n_atom_basis = 384, 128

    k_q, k_mu, k_p = jax.random.split(key, 3)
    q = jax.random.normal(k_q, (n_atoms, 1, n_atom_basis), jnp.float32)
    mu = jax.random.normal(k_mu, (n_atoms, 3, n_atom_basis), jnp.float32)
    params = init_params(k_p, n_atom_basis)

    q_ref, mu_ref = painn_mixing_ref(q, mu, params)

    # 1) Default path: bf16 MXU operands, PyTorch [N,3,F] mu layout.
    #    Tolerance is bf16-mantissa-limited (weights/activations quantized
    #    for the MXU; residuals stay f32).
    q_bf, mu_bf = painn_mixing(q, mu, params)
    jax.block_until_ready((q_bf, mu_bf))
    assert q_bf.shape == (n_atoms, 1, n_atom_basis)
    assert mu_bf.shape == (n_atoms, 3, n_atom_basis)
    assert jnp.allclose(q_bf, q_ref, atol=1.5e-1, rtol=5e-2)
    assert jnp.allclose(mu_bf, mu_ref, atol=1.5e-1, rtol=5e-2)

    # 2) f32 MXU path with the vector-axis-first mu layout (no transposes
    #    around the kernel — the layout upstream PaiNN blocks should keep).
    mu_vf = jnp.transpose(mu, (1, 0, 2))              # [3, N, F]
    q_f32, mu_f32 = painn_mixing(q, mu_vf, params, compute_dtype=jnp.float32,
                                 mu_vec_first=True)
    jax.block_until_ready((q_f32, mu_f32))
    assert mu_f32.shape == (3, n_atoms, n_atom_basis)
    assert jnp.allclose(q_f32, q_ref, atol=5e-4, rtol=5e-4)
    assert jnp.allclose(jnp.transpose(mu_f32, (1, 0, 2)), mu_ref,
                        atol=5e-4, rtol=5e-4)

    # 3) Ragged atom count: exercises the partial last tile (no host padding)
    #    and the >=2-grid-step clamp.
    n_small = 200
    q_s, mu_s = q[:n_small], mu[:n_small]
    q_s_out, mu_s_out = painn_mixing(q_s, mu_s, params,
                                     compute_dtype=jnp.float32)
    jax.block_until_ready((q_s_out, mu_s_out))
    q_s_ref, mu_s_ref = painn_mixing_ref(q_s, mu_s, params)
    assert jnp.allclose(q_s_out, q_s_ref, atol=5e-4, rtol=5e-4)
    assert jnp.allclose(mu_s_out, mu_s_ref, atol=5e-4, rtol=5e-4)

    print("KERNEL_OK")
</pallas_src>

<mosaic_0001>
module attributes {stable_mosaic.version = 11 : i64} {
  func.func @painn_mixing_kernel(%arg0: i32, %arg1: memref<192x128xf32, #tpu.memory_space<vmem>>, %arg2: memref<3x192x128xf32, #tpu.memory_space<vmem>>, %arg3: memref<128x256xbf16, #tpu.memory_space<vmem>>, %arg4: memref<256x128xbf16, #tpu.memory_space<vmem>>, %arg5: memref<128x384xbf16, #tpu.memory_space<vmem>>, %arg6: memref<8x128xf32, #tpu.memory_space<vmem>>, %arg7: memref<192x128xf32, #tpu.memory_space<vmem>>, %arg8: memref<3x192x128xf32, #tpu.memory_space<vmem>>) attributes {dimension_semantics = [#tpu.dimension_semantics<parallel>], iteration_bounds = array<i64: 2>, scalar_prefetch = 0 : i64, scratch_operands = 0 : i64, tpu.core_type = #tpu.core_type<tc>, window_params = [{transform_indices = @transform_0, window_bounds = array<i64: 192, 128>}, {transform_indices = @transform_1, window_bounds = array<i64: 3, 192, 128>}, {pipeline_mode = #tpu.pipeline_mode<synchronous>, transform_indices = @transform_2, window_bounds = array<i64: 128, 256>}, {pipeline_mode = #tpu.pipeline_mode<synchronous>, transform_indices = @transform_3, window_bounds = array<i64: 256, 128>}, {pipeline_mode = #tpu.pipeline_mode<synchronous>, transform_indices = @transform_4, window_bounds = array<i64: 128, 384>}, {pipeline_mode = #tpu.pipeline_mode<synchronous>, transform_indices = @transform_5, window_bounds = array<i64: 8, 128>}, {transform_indices = @transform_6, window_bounds = array<i64: 192, 128>}, {transform_indices = @transform_7, window_bounds = array<i64: 3, 192, 128>}]} {
    %c0 = arith.constant 0 : index
    %c0_0 = arith.constant 0 : index
    %0 = vector.load %arg1[%c0, %c0_0] : memref<192x128xf32, #tpu.memory_space<vmem>>, vector<192x128xf32>
    %c0_1 = arith.constant 0 : index
    %c0_2 = arith.constant 0 : index
    %c0_3 = arith.constant 0 : index
    %1 = vector.load %arg2[%c0_1, %c0_2, %c0_3] : memref<3x192x128xf32, #tpu.memory_space<vmem>>, vector<3x192x128xf32>
    %2 = vector.shape_cast %1 : vector<3x192x128xf32> to vector<576x128xf32>
    %3 = arith.truncf %2 : vector<576x128xf32> to vector<576x128xbf16>
    %c0_4 = arith.constant 0 : index
    %c0_5 = arith.constant 0 : index
    %4 = vector.load %arg3[%c0_4, %c0_5] : memref<128x256xbf16, #tpu.memory_space<vmem>>, vector<128x256xbf16>
    %cst = arith.constant dense<0.000000e+00> : vector<576x256xf32>
    %5 = tpu.matmul %3, %4, %cst {dimension_numbers = #tpu.dot_dimension_numbers<[1], [0], [0], [1], [0, 0, 1, 1], [], []>} : vector<576x128xbf16>, vector<128x256xbf16>, vector<576x256xf32> -> vector<576x256xf32>
    %6 = vector.shape_cast %5 : vector<576x256xf32> to vector<3x192x256xf32>
    %7 = vector.extract_strided_slice %6 {offsets = [0, 0, 0], sizes = [3, 192, 128], strides = [1, 1, 1]} : vector<3x192x256xf32> to vector<3x192x128xf32>
    %8 = vector.extract_strided_slice %6 {offsets = [0, 0, 128], sizes = [3, 192, 128], strides = [1, 1, 1]} : vector<3x192x256xf32> to vector<3x192x128xf32>
    %9 = arith.mulf %7, %7 : vector<3x192x128xf32>
    %cst_6 = arith.constant dense<0.000000e+00> : vector<192x128xf32>
    %10 = vector.multi_reduction <add>, %9, %cst_6 [0] : vector<3x192x128xf32> to vector<192x128xf32>
    %11 = arith.mulf %7, %8 : vector<3x192x128xf32>
    %cst_7 = arith.constant dense<0.000000e+00> : vector<192x128xf32>
    %12 = vector.multi_reduction <add>, %11, %cst_7 [0] : vector<3x192x128xf32> to vector<192x128xf32>
    %cst_8 = arith.constant 9.99999993E-9 : f32
    %13 = vector.broadcast %cst_8 : f32 to vector<192x128xf32>
    %14 = arith.addf %10, %13 : vector<192x128xf32>
    %15 = math.sqrt %14 : vector<192x128xf32>
    %c0_9 = arith.constant 0 : index
    %c0_10 = arith.constant 0 : index
    %16 = vector.load %arg6[%c0_9, %c0_10] : memref<8x128xf32, #tpu.memory_space<vmem>>, vector<1x128xf32>
    %c1 = arith.constant 1 : index
    %c0_11 = arith.constant 0 : index
    %17 = vector.load %arg6[%c1, %c0_11] : memref<8x128xf32, #tpu.memory_space<vmem>>, vector<1x128xf32>
    %c2 = arith.constant 2 : index
    %c0_12 = arith.constant 0 : index
    %18 = vector.load %arg6[%c2, %c0_12] : memref<8x128xf32, #tpu.memory_space<vmem>>, vector<1x128xf32>
    %c3 = arith.constant 3 : index
    %c0_13 = arith.constant 0 : index
    %19 = vector.load %arg6[%c3, %c0_13] : memref<8x128xf32, #tpu.memory_space<vmem>>, vector<1x128xf32>
    %c4 = arith.constant 4 : index
    %c0_14 = arith.constant 0 : index
    %20 = vector.load %arg6[%c4, %c0_14] : memref<8x128xf32, #tpu.memory_space<vmem>>, vector<1x128xf32>
    %c5 = arith.constant 5 : index
    %c0_15 = arith.constant 0 : index
    %21 = vector.load %arg6[%c5, %c0_15] : memref<8x128xf32, #tpu.memory_space<vmem>>, vector<1x128xf32>
    %c0_16 = arith.constant 0 : index
    %c0_17 = arith.constant 0 : index
    %22 = vector.load %arg1[%c0_16, %c0_17] : memref<192x128xf32, #tpu.memory_space<vmem>>, vector<192x128xf32>
    %23 = arith.truncf %22 : vector<192x128xf32> to vector<192x128xbf16>
    %24 = arith.truncf %15 : vector<192x128xf32> to vector<192x128xbf16>
    %25 = tpu.concatenate %23, %24 in 1 : vector<192x128xbf16>, vector<192x128xbf16> -> vector<192x256xbf16>
    %c0_18 = arith.constant 0 : index
    %c0_19 = arith.constant 0 : index
    %26 = vector.load %arg4[%c0_18, %c0_19] : memref<256x128xbf16, #tpu.memory_space<vmem>>, vector<256x128xbf16>
    %cst_20 = arith.constant dense<0.000000e+00> : vector<192x128xf32>
    %27 = tpu.matmul %25, %26, %cst_20 {dimension_numbers = #tpu.dot_dimension_numbers<[1], [0], [0], [1], [0, 0, 1, 1], [], []>} : vector<192x256xbf16>, vector<256x128xbf16>, vector<192x128xf32> -> vector<192x128xf32>
    %28 = vector.broadcast %16 : vector<1x128xf32> to vector<192x128xf32>
    %29 = arith.addf %27, %28 : vector<192x128xf32>
    %30 = arith.negf %29 : vector<192x128xf32>
    %31 = math.exp %30 : vector<192x128xf32>
    %cst_21 = arith.constant 1.000000e+00 : f32
    %32 = vector.broadcast %cst_21 : f32 to vector<192x128xf32>
    %33 = arith.addf %32, %31 : vector<192x128xf32>
    %34 = arith.divf %32, %33 : vector<192x128xf32>
    %35 = arith.mulf %29, %34 : vector<192x128xf32>
    %36 = arith.truncf %35 : vector<192x128xf32> to vector<192x128xbf16>
    %c0_22 = arith.constant 0 : index
    %c0_23 = arith.constant 0 : index
    %37 = vector.load %arg5[%c0_22, %c0_23] : memref<128x384xbf16, #tpu.memory_space<vmem>>, vector<128x384xbf16>
    %cst_24 = arith.constant dense<0.000000e+00> : vector<192x384xf32>
    %38 = tpu.matmul %36, %37, %cst_24 {dimension_numbers = #tpu.dot_dimension_numbers<[1], [0], [0], [1], [0, 0, 1, 1], [], []>} : vector<192x128xbf16>, vector<128x384xbf16>, vector<192x384xf32> -> vector<192x384xf32>
    %39 = vector.extract_strided_slice %38 {offsets = [0, 0], sizes = [192, 128], strides = [1, 1]} : vector<192x384xf32> to vector<192x128xf32>
    %40 = vector.broadcast %17 : vector<1x128xf32> to vector<192x128xf32>
    %41 = arith.addf %39, %40 : vector<192x128xf32>
    %42 = vector.extract_strided_slice %38 {offsets = [0, 128], sizes = [192, 128], strides = [1, 1]} : vector<192x384xf32> to vector<192x128xf32>
    %43 = vector.broadcast %18 : vector<1x128xf32> to vector<192x128xf32>
    %44 = arith.addf %42, %43 : vector<192x128xf32>
    %45 = vector.extract_strided_slice %38 {offsets = [0, 256], sizes = [192, 128], strides = [1, 1]} : vector<192x384xf32> to vector<192x128xf32>
    %46 = vector.broadcast %19 : vector<1x128xf32> to vector<192x128xf32>
    %47 = arith.addf %45, %46 : vector<192x128xf32>
    %48 = arith.mulf %47, %12 : vector<192x128xf32>
    %49 = arith.addf %0, %41 : vector<192x128xf32>
    %50 = arith.addf %49, %48 : vector<192x128xf32>
    %cst_25 = arith.constant dense<0.000000e+00> : vector<192xf32>
    %51 = vector.multi_reduction <add>, %50, %cst_25 [1] : vector<192x128xf32> to vector<192xf32>
    %52 = vector.shape_cast %51 : vector<192xf32> to vector<192x1xf32>
    %cst_26 = arith.constant 1.280000e+02 : f32
    %53 = vector.broadcast %cst_26 : f32 to vector<192x1xf32>
    %54 = arith.divf %52, %53 : vector<192x1xf32>
    %55 = vector.broadcast %54 : vector<192x1xf32> to vector<192x128xf32>
    %56 = arith.subf %50, %55 : vector<192x128xf32>
    %57 = arith.mulf %56, %56 : vector<192x128xf32>
    %cst_27 = arith.constant dense<0.000000e+00> : vector<192xf32>
    %58 = vector.multi_reduction <add>, %57, %cst_27 [1] : vector<192x128xf32> to vector<192xf32>
    %59 = vector.shape_cast %58 : vector<192xf32> to vector<192x1xf32>
    %cst_28 = arith.constant 1.280000e+02 : f32
    %60 = vector.broadcast %cst_28 : f32 to vector<192x1xf32>
    %61 = arith.divf %59, %60 : vector<192x1xf32>
    %cst_29 = arith.constant 9.99999974E-6 : f32
    %62 = vector.broadcast %cst_29 : f32 to vector<192x1xf32>
    %63 = arith.addf %61, %62 : vector<192x1xf32>
    %64 = math.rsqrt %63 : vector<192x1xf32>
    %65 = vector.broadcast %64 : vector<192x1xf32> to vector<192x128xf32>
    %66 = arith.mulf %56, %65 : vector<192x128xf32>
    %67 = vector.broadcast %20 : vector<1x128xf32> to vector<192x128xf32>
    %68 = arith.mulf %66, %67 : vector<192x128xf32>
    %69 = vector.broadcast %21 : vector<1x128xf32> to vector<192x128xf32>
    %70 = arith.addf %68, %69 : vector<192x128xf32>
    %c0_30 = arith.constant 0 : index
    %c0_31 = arith.constant 0 : index
    %71 = vector.load %arg7[%c0_30, %c0_31] : memref<192x128xf32, #tpu.memory_space<vmem>>, vector<192x128xf32>
    tpu.vector_store %arg7[%c0_30, %c0_31], %70 {strides = array<i32>} : memref<192x128xf32, #tpu.memory_space<vmem>>, vector<192x128xf32>,
    %c0_32 = arith.constant 0 : index
    %c0_33 = arith.constant 0 : index
    %c0_34 = arith.constant 0 : index
    %72 = vector.load %arg2[%c0_32, %c0_33, %c0_34] : memref<3x192x128xf32, #tpu.memory_space<vmem>>, vector<3x192x128xf32>
    %73 = vector.shape_cast %44 : vector<192x128xf32> to vector<1x192x128xf32>
    %74 = vector.broadcast %73 : vector<1x192x128xf32> to vector<3x192x128xf32>
    %75 = arith.mulf %74, %8 : vector<3x192x128xf32>
    %76 = arith.addf %72, %75 : vector<3x192x128xf32>
    %77 = arith.mulf %76, %76 : vector<3x192x128xf32>
    %cst_35 = arith.constant dense<0.000000e+00> : vector<192x128xf32>
    %78 = vector.multi_reduction <add>, %77, %cst_35 [0] : vector<3x192x128xf32> to vector<192x128xf32>
    %cst_36 = arith.constant 9.99999993E-9 : f32
    %79 = vector.broadcast %cst_36 : f32 to vector<192x128xf32>
    %80 = arith.addf %78, %79 : vector<192x128xf32>
    %81 = math.rsqrt %80 : vector<192x128xf32>
    %82 = vector.shape_cast %81 : vector<192x128xf32> to vector<1x192x128xf32>
    %83 = vector.broadcast %82 : vector<1x192x128xf32> to vector<3x192x128xf32>
    %84 = arith.mulf %76, %83 : vector<3x192x128xf32>
    %c0_37 = arith.constant 0 : index
    %c0_38 = arith.constant 0 : index
    %c0_39 = arith.constant 0 : index
    %85 = vector.load %arg8[%c0_37, %c0_38, %c0_39] : memref<3x192x128xf32, #tpu.memory_space<vmem>>, vector<3x192x128xf32>
    tpu.vector_store %arg8[%c0_37, %c0_38, %c0_39], %84 {strides = array<i32>} : memref<3x192x128xf32, #tpu.memory_space<vmem>>, vector<3x192x128xf32>,
    return
  }
  func.func @transform_0(%arg0: i32) -> (i32, i32) {
    %c0_i32 = arith.constant 0 : i32
    %c0_i32_0 = arith.constant 0 : i32
    return %arg0, %c0_i32 : i32, i32
  }
  func.func @transform_1(%arg0: i32) -> (i32, i32, i32) {
    %c0_i32 = arith.constant 0 : i32
    %c0_i32_0 = arith.constant 0 : i32
    %c0_i32_1 = arith.constant 0 : i32
    return %c0_i32, %arg0, %c0_i32_0 : i32, i32, i32
  }
  func.func @transform_2(%arg0: i32) -> (i32, i32) {
    %c0_i32 = arith.constant 0 : i32
    %c0_i32_0 = arith.constant 0 : i32
    %c0_i32_1 = arith.constant 0 : i32
    return %c0_i32, %c0_i32_0 : i32, i32
  }
  func.func @transform_3(%arg0: i32) -> (i32, i32) {
    %c0_i32 = arith.constant 0 : i32
    %c0_i32_0 = arith.constant 0 : i32
    %c0_i32_1 = arith.constant 0 : i32
    return %c0_i32, %c0_i32_0 : i32, i32
  }
  func.func @transform_4(%arg0: i32) -> (i32, i32) {
    %c0_i32 = arith.constant 0 : i32
    %c0_i32_0 = arith.constant 0 : i32
    %c0_i32_1 = arith.constant 0 : i32
    return %c0_i32, %c0_i32_0 : i32, i32
  }
  func.func @transform_5(%arg0: i32) -> (i32, i32) {
    %c0_i32 = arith.constant 0 : i32
    %c0_i32_0 = arith.constant 0 : i32
    %c0_i32_1 = arith.constant 0 : i32
    return %c0_i32, %c0_i32_0 : i32, i32
  }
  func.func @transform_6(%arg0: i32) -> (i32, i32) {
    %c0_i32 = arith.constant 0 : i32
    %c0_i32_0 = arith.constant 0 : i32
    return %arg0, %c0_i32 : i32, i32
  }
  func.func @transform_7(%arg0: i32) -> (i32, i32, i32) {
    %c0_i32 = arith.constant 0 : i32
    %c0_i32_0 = arith.constant 0 : i32
    %c0_i32_1 = arith.constant 0 : i32
    return %c0_i32, %arg0, %c0_i32_0 : i32, i32, i32
  }
}

</mosaic_0001>

<llo_original>
// kernel: tpu_custom_call.1
$region0: #{tpu_custom_call.1}
  #allocation0 [shape = 'u32[]', space=smem, size = 0x4, offset = 0x4, fixed_abs, tag = 'smem constant byte address 0x4 - core index']
  #allocation1 [shape = 'u32[144,128]{1,0:T(1,128)}', space=vmem, size = 0x12000, scoped, tag = 'internal scratch']
  #allocation14 [shape = 's32[]', space=sflag, size = 0x4, offset = 0, fixed_abs, tag = 'sflag constant byte address 0x0 - dummy sync flag']
  #allocation16 [shape = 's32[]', space=sflag, size = 0x4, offset = 0, fixed_abs, tag = 'sflag constant byte address 0x0 - dummy sync flag']
  %s0 = inlined_call_operand.hbm [shape: f32[384,128], index: 0, kind: input, shape index: {}]
  %s1 = inlined_call_operand.hbm [shape: f32[3,384,128], index: 1, kind: input, shape index: {}]
  %s2 = inlined_call_operand.hbm [shape: bf16[128,256], index: 2, kind: input, shape index: {}]
  %s3 = inlined_call_operand.hbm [shape: bf16[256,128], index: 3, kind: input, shape index: {}]
  %s4 = inlined_call_operand.hbm [shape: bf16[128,384], index: 4, kind: input, shape index: {}]
  %s5 = inlined_call_operand.vmem [shape: f32[8,128], index: 5, kind: input, shape index: {}]
  %s6 = inlined_call_operand.hbm [shape: f32[384,128], index: 6, kind: output, shape index: {0}]
  %s7 = inlined_call_operand.hbm [shape: f32[3,384,128], index: 7, kind: output, shape index: {1}]
  %8 = xla_tuple %s6, %s7
  %s9 = sld [smem:[#allocation0]]
  $region85: #{tpu_custom_call.1} parent=0
    _
  %s11 = ssub.s32 1, %s9
  %s12 = scalar_select 0, %s11, %s9
  $region1: #{tpu_custom_call.1} parent=0
    #allocation2 [shape = 'u8[196608]{0}', space=vmem, size = 0x30000, scoped, tag = 'input window, operand 0']
    #allocation3 [shape = 's32[2]{0}', space=sflag, size = 0x8, scoped, tag = 'scoped memory for tpu_custom_call.1']
    #allocation4 [shape = 's32[2]{0}', space=sflag, size = 0x8, scoped, tag = 'scoped memory for tpu_custom_call.1']
    #allocation5 [shape = 'u8[589824]{0}', space=vmem, size = 0x90000, scoped, tag = 'input window, operand 1']
    #allocation6 [shape = 's32[2]{0}', space=sflag, size = 0x8, scoped, tag = 'scoped memory for tpu_custom_call.1']
    #allocation7 [shape = 'u8[65536]{0}', space=vmem, size = 0x10000, scoped, tag = 'input window, operand 2, single buffered']
    #allocation8 [shape = 'u8[65536]{0}', space=vmem, size = 0x10000, scoped, tag = 'input window, operand 3, single buffered']
    #allocation9 [shape = 's32[1]{0}', space=sflag, size = 0x4, scoped, tag = 'scoped memory for tpu_custom_call.1']
    #allocation10 [shape = 'u8[98304]{0}', space=vmem, size = 0x18000, scoped, tag = 'input window, operand 4, single buffered']
    #allocation11 [shape = 'u8[196608]{0}', space=vmem, size = 0x30000, scoped, tag = 'output window, operand 0']
    #allocation12 [shape = 'u8[589824]{0}', space=vmem, size = 0x90000, scoped, tag = 'output window, operand 1']
    #allocation13 [shape = 's32[2]{0}', space=sflag, size = 0x8, scoped, tag = 'scoped memory for tpu_custom_call.1']
    %13 = vsyncpa [#allocation3], 0
    %s14 = scalar_lea.sflag [#allocation3], 1
    %15 = vsyncpa %s14, 0
    %16 = vsyncpa [#allocation6], 0
    %s17 = scalar_lea.sflag [#allocation6], 1
    %18 = vsyncpa %s17, 0
    %19 = vsyncpa [#allocation9], 0
    %20 = vsyncpa [#allocation4], 0
    %s21 = scalar_lea.sflag [#allocation4], 1
    %22 = vsyncpa %s21, 0
    %23 = vsyncpa [#allocation13], 0
    %s24 = scalar_lea.sflag [#allocation13], 1
    %25 = vsyncpa %s24, 0
    loop: start=0, step=1, limit=4
    $region2: #{tpu_custom_call.1} parent=1 // loop_pre_header
      _
    $region3: #{tpu_custom_call.1} parent=1 // loop_header
      %s27 = sphi 0, %s31
      %p28 = scmp.ge.s32.totalorder %s27, 4
      %s37 = sphi 0, %s39
      %s40 = sphi 0, %s37
      %s41 = sphi 0, %s40
      %s57 = sphi 0, %s41
      %s63 = sphi 0, %s65
      %s66 = sphi 0, %s63
      %s67 = sphi 0, %s66
      %s83 = sphi 0, %s67
      %s87 = sphi 0, %s87
      %s89 = sphi 0, %s87
      %s90 = sphi 0, %s89
      %s104 = sphi 0, %s90
      %s108 = sphi 0, %s108
      %s110 = sphi 0, %s108
      %s111 = sphi 0, %s110
      %s125 = sphi 0, %s111
      %s129 = sphi 0, %s129
      %s131 = sphi 0, %s129
      %s132 = sphi 0, %s131
      %s146 = sphi 0, %s132
      %s150 = sphi 0, %s150
      %s152 = sphi 0, %s150
      %s153 = sphi 0, %s152
      %s167 = sphi 0, %s153
      %s173 = sphi 0, %s175
      %s176 = sphi 0, %s173
      %s177 = sphi 0, %s176
      %s193 = sphi 0, %s177
      %s199 = sphi 0, %s201
      %s202 = sphi 0, %s199
      %s203 = sphi 0, %s202
      %s219 = sphi 0, %s203
    $region4: #{tpu_custom_call.1} parent=1 // loop_header_branch
      %30 = sbr.rel (%p28) target = $region8
    $region5: #{tpu_custom_call.1} parent=1 // loop_body
      %s32 = ssub.s32 %s27, 1
      %s33 = ssub.s32 %s27, 2
      %s34 = sadd.s32 %s27, 1
      %s35 = ssub.s32 %s27, %s34
      %p36 = scmp.eq.s32.totalorder %s35, 0
      %s38 = sadd.s32 %s37, 1
      %s39 = scalar_select %p36, %s37, %s38
      %p42 = pneg %p36
      %p43 = scmp.eq.s32.totalorder %s27, 1
      %p44 = por %p42, %p43
      %p45 = scmp.ne.s32.totalorder %s37, %s40
      %p46 = scmp.eq.s32.totalorder %s27, 0
      %p47 = por %p45, %p46
      %p48 = scmp.ne.s32.totalorder %s37, %s40
      %p49 = scmp.eq.s32.totalorder %s32, 1
      %p50 = por %p48, %p49
      %p51 = scmp.ne.s32.totalorder %s40, %s41
      %p52 = scmp.eq.s32.totalorder %s32, 0
      %p53 = por %p51, %p52
      %p54 = scmp.ne.s32.totalorder %s40, %s41
      %p55 = scmp.eq.s32.totalorder %s33, 1
      %p56 = por %p54, %p55
      %p58 = scmp.ne.s32.totalorder %s41, %s57
      %p59 = scmp.eq.s32.totalorder %s33, 0
      %p60 = por %p58, %p59
      %s61 = ssub.s32 %s27, %s34
      %p62 = scmp.eq.s32.totalorder %s61, 0
      %s64 = sadd.s32 %s63, 1
      %s65 = scalar_select %p62, %s63, %s64
      %p68 = pneg %p62
      %p69 = scmp.eq.s32.totalorder %s27, 1
      %p70 = por %p68, %p69
      %p71 = scmp.ne.s32.totalorder %s63, %s66
      %p72 = scmp.eq.s32.totalorder %s27, 0
      %p73 = por %p71, %p72
      %p74 = scmp.ne.s32.totalorder %s63, %s66
      %p75 = scmp.eq.s32.totalorder %s32, 1
      %p76 = por %p74, %p75
      %p77 = scmp.ne.s32.totalorder %s66, %s67
      %p78 = scmp.eq.s32.totalorder %s32, 0
      %p79 = por %p77, %p78
      %p80 = scmp.ne.s32.totalorder %s66, %s67
      %p81 = scmp.eq.s32.totalorder %s33, 1
      %p82 = por %p80, %p81
      %p84 = scmp.ne.s32.totalorder %s67, %s83
      %p85 = scmp.eq.s32.totalorder %s33, 0
      %p86 = por %p84, %p85
      %s88 = sadd.s32 %s87, 1
      %p91 = scmp.eq.s32.totalorder %s27, 1
      %p92 = scmp.ne.s32.totalorder %s87, %s89
      %p93 = scmp.eq.s32.totalorder %s27, 0
      %p94 = por %p92, %p93
      %p95 = scmp.ne.s32.totalorder %s87, %s89
      %p96 = scmp.eq.s32.totalorder %s32, 1
      %p97 = por %p95, %p96
      %p98 = scmp.ne.s32.totalorder %s89, %s90
      %p99 = scmp.eq.s32.totalorder %s32, 0
      %p100 = por %p98, %p99
      %p101 = scmp.ne.s32.totalorder %s89, %s90
      %p102 = scmp.eq.s32.totalorder %s33, 1
      %p103 = por %p101, %p102
      %p105 = scmp.ne.s32.totalorder %s90, %s104
      %p106 = scmp.eq.s32.totalorder %s33, 0
      %p107 = por %p105, %p106
      %s109 = sadd.s32 %s108, 1
      %p112 = scmp.eq.s32.totalorder %s27, 1
      %p113 = scmp.ne.s32.totalorder %s108, %s110
      %p114 = scmp.eq.s32.totalorder %s27, 0
      %p115 = por %p113, %p114
      %p116 = scmp.ne.s32.totalorder %s108, %s110
      %p117 = scmp.eq.s32.totalorder %s32, 1
      %p118 = por %p116, %p117
      %p119 = scmp.ne.s32.totalorder %s110, %s111
      %p120 = scmp.eq.s32.totalorder %s32, 0
      %p121 = por %p119, %p120
      %p122 = scmp.ne.s32.totalorder %s110, %s111
      %p123 = scmp.eq.s32.totalorder %s33, 1
      %p124 = por %p122, %p123
      %p126 = scmp.ne.s32.totalorder %s111, %s125
      %p127 = scmp.eq.s32.totalorder %s33, 0
      %p128 = por %p126, %p127
      %s130 = sadd.s32 %s129, 1
      %p133 = scmp.eq.s32.totalorder %s27, 1
      %p134 = scmp.ne.s32.totalorder %s129, %s131
      %p135 = scmp.eq.s32.totalorder %s27, 0
      %p136 = por %p134, %p135
      %p137 = scmp.ne.s32.totalorder %s129, %s131
      %p138 = scmp.eq.s32.totalorder %s32, 1
      %p139 = por %p137, %p138
      %p140 = scmp.ne.s32.totalorder %s131, %s132
      %p141 = scmp.eq.s32.totalorder %s32, 0
      %p142 = por %p140, %p141
      %p143 = scmp.ne.s32.totalorder %s131, %s132
      %p144 = scmp.eq.s32.totalorder %s33, 1
      %p145 = por %p143, %p144
      %p147 = scmp.ne.s32.totalorder %s132, %s146
      %p148 = scmp.eq.s32.totalorder %s33, 0
      %p149 = por %p147, %p148
      %s151 = sadd.s32 %s150, 1
      %p154 = scmp.eq.s32.totalorder %s27, 1
      %p155 = scmp.ne.s32.totalorder %s150, %s152
      %p156 = scmp.eq.s32.totalorder %s27, 0
      %p157 = por %p155, %p156
      %p158 = scmp.ne.s32.totalorder %s150, %s152
      %p159 = scmp.eq.s32.totalorder %s32, 1
      %p160 = por %p158, %p159
      %p161 = scmp.ne.s32.totalorder %s152, %s153
      %p162 = scmp.eq.s32.totalorder %s32, 0
      %p163 = por %p161, %p162
      %p164 = scmp.ne.s32.totalorder %s152, %s153
      %p165 = scmp.eq.s32.totalorder %s33, 1
      %p166 = por %p164, %p165
      %p168 = scmp.ne.s32.totalorder %s153, %s167
      %p169 = scmp.eq.s32.totalorder %s33, 0
      %p170 = por %p168, %p169
      %s171 = ssub.s32 %s27, %s34
      %p172 = scmp.eq.s32.totalorder %s171, 0
      %s174 = sadd.s32 %s173, 1
      %s175 = scalar_select %p172, %s173, %s174
      %p178 = pneg %p172
      %p179 = scmp.eq.s32.totalorder %s27, 1
      %p180 = por %p178, %p179
      %p181 = scmp.ne.s32.totalorder %s173, %s176
      %p182 = scmp.eq.s32.totalorder %s27, 0
      %p183 = por %p181, %p182
      %p184 = scmp.ne.s32.totalorder %s173, %s176
      %p185 = scmp.eq.s32.totalorder %s32, 1
      %p186 = por %p184, %p185
      %p187 = scmp.ne.s32.totalorder %s176, %s177
      %p188 = scmp.eq.s32.totalorder %s32, 0
      %p189 = por %p187, %p188
      %p190 = scmp.ne.s32.totalorder %s176, %s177
      %p191 = scmp.eq.s32.totalorder %s33, 1
      %p192 = por %p190, %p191
      %p194 = scmp.ne.s32.totalorder %s177, %s193
      %p195 = scmp.eq.s32.totalorder %s33, 0
      %p196 = por %p194, %p195
      %s197 = ssub.s32 %s27, %s34
      %p198 = scmp.eq.s32.totalorder %s197, 0
      %s200 = sadd.s32 %s199, 1
      %s201 = scalar_select %p198, %s199, %s200
      %p204 = pneg %p198
      %p205 = scmp.eq.s32.totalorder %s27, 1
      %p206 = por %p204, %p205
      %p207 = scmp.ne.s32.totalorder %s199, %s202
      %p208 = scmp.eq.s32.totalorder %s27, 0
      %p209 = por %p207, %p208
      %p210 = scmp.ne.s32.totalorder %s199, %s202
      %p211 = scmp.eq.s32.totalorder %s32, 1
      %p212 = por %p210, %p211
      %p213 = scmp.ne.s32.totalorder %s202, %s203
      %p214 = scmp.eq.s32.totalorder %s32, 0
      %p215 = por %p213, %p214
      %p216 = scmp.ne.s32.totalorder %s202, %s203
      %p217 = scmp.eq.s32.totalorder %s33, 1
      %p218 = por %p216, %p217
      %p220 = scmp.ne.s32.totalorder %s203, %s219
      %p221 = scmp.eq.s32.totalorder %s33, 0
      %p222 = por %p220, %p221
      %p223 = scmp.le.s32.totalorder 1, %s27
      %p224 = scmp.lt.s32.totalorder %s27, 3
      %p225 = pnand %p223, %p224
      %p226 = pneg %p225
      // Predicated region
      $region9: #{tpu_custom_call.1} parent=5 // pred_check
        _
      $region10: #{tpu_custom_call.1} parent=5 // pred_check_branch
        %228 = sbr.rel (%p225) target = $region12
      $region11: #{tpu_custom_call.1} parent=5 // pred_region
        %s229 = ssub.s32 %s27, 1
        // Predicated region
        $region13: #{tpu_custom_call.1} parent=11 // pred_check
          %p230 = pneg %p100
        $region14: #{tpu_custom_call.1} parent=11 // pred_check_branch
          %232 = sbr.rel (%p230) target = $region16
        $region15: #{tpu_custom_call.1} parent=11 // pred_region
          %s234 = ssub.s32 2048, 2048
          %235 = vsyncadd [#allocation6], %s234
          %s236 = sshll.u32 [#allocation7], 4
          %s237 = int_to_ptr.vmem [resolvable:$true] %s236
          %242 = dma.hbm_to_vmem [thread:$0]  %s2, 2048, %s237, [#allocation6], 128, 128, 8
        $region16: #{tpu_custom_call.1} parent=11 // pred_fallthru
          _
        // Predicated region
        $region17: #{tpu_custom_call.1} parent=11 // pred_check
          %p243 = pneg %p121
        $region18: #{tpu_custom_call.1} parent=11 // pred_check_branch
          %245 = sbr.rel (%p243) target = $region20
        $region19: #{tpu_custom_call.1} parent=11 // pred_region
          %s247 = ssub.s32 2048, 2048
          %248 = vsyncadd [#allocation9], %s247
          %s249 = sshll.u32 [#allocation8], 4
          %s250 = int_to_ptr.vmem [resolvable:$true] %s249
          %255 = dma.hbm_to_vmem [thread:$0]  %s3, 2048, %s250, [#allocation9], 64, 64, 4
        $region20: #{tpu_custom_call.1} parent=11 // pred_fallthru
          _
        // Predicated region
        $region21: #{tpu_custom_call.1} parent=11 // pred_check
          %p256 = pneg %p142
        $region22: #{tpu_custom_call.1} parent=11 // pred_check_branch
          %258 = sbr.rel (%p256) target = $region24
        $region23: #{tpu_custom_call.1} parent=11 // pred_region
          %s260 = ssub.s32 3072, 3072
          %261 = vsyncadd [#allocation9], %s260
          %s262 = sshll.u32 [#allocation10], 4
          %s263 = int_to_ptr.vmem [resolvable:$true] %s262
          %268 = dma.hbm_to_vmem [thread:$0]  %s4, 3072, %s263, [#allocation9], 192, 192, 12
        $region24: #{tpu_custom_call.1} parent=11 // pred_fallthru
          _
        // Predicated region
        $region25: #{tpu_custom_call.1} parent=11 // pred_check
          %p269 = pneg %p163
        $region26: #{tpu_custom_call.1} parent=11 // pred_check_branch
          %271 = sbr.rel (%p269) target = $region28
        $region27: #{tpu_custom_call.1} parent=11 // pred_region
          _
        $region28: #{tpu_custom_call.1} parent=11 // pred_fallthru
          _
      $region12: #{tpu_custom_call.1} parent=5 // pred_fallthru
        _
      %p272 = scmp.lt.s32.totalorder %s27, 2
      // Predicated region
      $region29: #{tpu_custom_call.1} parent=5 // pred_check
        %p273 = pneg %p272
      $region30: #{tpu_custom_call.1} parent=5 // pred_check_branch
        %275 = sbr.rel (%p273) target = $region32
      $region31: #{tpu_custom_call.1} parent=5 // pred_region
        // Predicated region
        $region33: #{tpu_custom_call.1} parent=31 // pred_check
          %p276 = pneg %p47
        $region34: #{tpu_custom_call.1} parent=31 // pred_check_branch
          %278 = sbr.rel (%p276) target = $region36
        $region35: #{tpu_custom_call.1} parent=31 // pred_region
          %s279 = sand.u32 %s37, 1
          %s280 = scalar_lea.sflag [#allocation3], %s279
          %s281 = sand.u32 %s37, 1
          %s282 = smul.addr %s281, 192
          %s283 = scalar_lea.vmem [#allocation2], %s282
          %s284 = smul.u32 24, %s27
          %s286 = ssub.s32 3072, 3072
          %287 = vsyncadd %s280, %s286
          %s288 = smul.addr %s284, 128
          %s289 = scalar_lea.hbm %s0, %s288
          %s290 = sshll.u32 %s283, 4
          %s291 = int_to_ptr.vmem [resolvable:$true] %s290
          %296 = dma.hbm_to_vmem [thread:$0]  %s289, 3072, %s291, %s280, 128, 128, 8
        $region36: #{tpu_custom_call.1} parent=31 // pred_fallthru
          _
        // Predicated region
        $region37: #{tpu_custom_call.1} parent=31 // pred_check
          %p297 = pneg %p73
        $region38: #{tpu_custom_call.1} parent=31 // pred_check_branch
          %299 = sbr.rel (%p297) target = $region40
        $region39: #{tpu_custom_call.1} parent=31 // pred_region
          #allocation15 [shape = 'u32[6]{0}', space=smem, size = 0x18, scoped, tag = 'DMA stride descriptor']
          %s300 = sand.u32 %s27, 1
          %s301 = scalar_lea.sflag [#allocation6], %s300
          %s302 = sand.u32 %s63, 1
          %s303 = smul.addr %s302, 576
          %s304 = scalar_lea.vmem [#allocation5], %s303
          %s305 = smul.u32 24, %s27
          %s307 = ssub.s32 9216, 9216
          %308 = vsyncadd %s301, %s307
          %s309 = smul.addr %s305, 128
          %s310 = scalar_lea.hbm %s1, %s309
          %s312 = sshll.u32 1, 14
          %s313 = sxor.u32 4294967295, %s312
          %s315 = sld [smem:[#allocation0]]
          %s316 = sadd.s32 2, %s315
          %s318 = sshll.u32 7, 26
          %s319 = sxor.u32 4294967295, %s318
          %s320 = sand.u32 0, %s319
          %s321 = sshll.u32 %s316, 26
          %s322 = sor.u32 %s320, %s321
          %s323 = sshll.u32 %s304, 4
          %s324 = int_to_ptr.vmem [resolvable:$true] %s323
          %330 = sst [smem:[#allocation15]] 6144
          %s331 = scalar_lea.smem [#allocation15], 1
          %332 = sst [smem:[%s331]] 3072
          %s333 = scalar_lea.smem [#allocation15], 2
          %334 = sst [smem:[%s333]] 24
          %s335 = scalar_lea.smem [#allocation15], 3
          %336 = sst [smem:[%s335]] 128
          %s337 = scalar_lea.smem [#allocation15], 4
          %338 = sst [smem:[%s337]] 128
          %s339 = scalar_lea.smem [#allocation15], 5
          %340 = sst [smem:[%s339]] 8
          %342 = dma.general %s310, 9216, %s324, %s301, [#allocation14], [#allocation15], %s322, 0
        $region40: #{tpu_custom_call.1} parent=31 // pred_fallthru
          _
      $region32: #{tpu_custom_call.1} parent=5 // pred_fallthru
        _
      %p343 = scmp.le.s32.totalorder 1, %s27
      %p344 = scmp.lt.s32.totalorder %s27, 3
      %p345 = pnand %p343, %p344
      %p346 = pneg %p345
      // Predicated region
      $region41: #{tpu_custom_call.1} parent=5 // pred_check
        _
      $region42: #{tpu_custom_call.1} parent=5 // pred_check_branch
        %348 = sbr.rel (%p345) target = $region44
      $region43: #{tpu_custom_call.1} parent=5 // pred_region
        %s349 = ssub.s32 %s27, 1
        %s350 = sand.u32 %s40, 1
        %s351 = scalar_lea.sflag [#allocation3], %s350
        %s352 = sand.u32 %s40, 1
        %s353 = smul.addr %s352, 192
        %s354 = scalar_lea.vmem [#allocation2], %s353
        // Predicated region
        $region45: #{tpu_custom_call.1} parent=43 // pred_check
          %p355 = pneg %p53
        $region46: #{tpu_custom_call.1} parent=43 // pred_check_branch
          %357 = sbr.rel (%p355) target = $region48
        $region47: #{tpu_custom_call.1} parent=43 // pred_region
          %358 = dma.done %s351, 3072
        $region48: #{tpu_custom_call.1} parent=43 // pred_fallthru
          _
        %s359 = sand.u32 %s32, 1
        %s360 = scalar_lea.sflag [#allocation6], %s359
        %s361 = sand.u32 %s66, 1
        %s362 = smul.addr %s361, 576
        %s363 = scalar_lea.vmem [#allocation5], %s362
        // Predicated region
        $region49: #{tpu_custom_call.1} parent=43 // pred_check
          %p364 = pneg %p79
        $region50: #{tpu_custom_call.1} parent=43 // pred_check_branch
          %366 = sbr.rel (%p364) target = $region52
        $region51: #{tpu_custom_call.1} parent=43 // pred_region
          %367 = dma.done %s360, 9216
        $region52: #{tpu_custom_call.1} parent=43 // pred_fallthru
          _
        // Predicated region
        $region53: #{tpu_custom_call.1} parent=43 // pred_check
          %p368 = pneg %p100
        $region54: #{tpu_custom_call.1} parent=43 // pred_check_branch
          %370 = sbr.rel (%p368) target = $region56
        $region55: #{tpu_custom_call.1} parent=43 // pred_region
          %371 = dma.done [#allocation6], 2048
        $region56: #{tpu_custom_call.1} parent=43 // pred_fallthru
          _
        // Predicated region
        $region57: #{tpu_custom_call.1} parent=43 // pred_check
          %p372 = pneg %p121
        $region58: #{tpu_custom_call.1} parent=43 // pred_check_branch
          %374 = sbr.rel (%p372) target = $region60
        $region59: #{tpu_custom_call.1} parent=43 // pred_region
          %375 = dma.done [#allocation9], 2048
        $region60: #{tpu_custom_call.1} parent=43 // pred_fallthru
          _
        // Predicated region
        $region61: #{tpu_custom_call.1} parent=43 // pred_check
          %p376 = pneg %p142
        $region62: #{tpu_custom_call.1} parent=43 // pred_check_branch
          %378 = sbr.rel (%p376) target = $region64
        $region63: #{tpu_custom_call.1} parent=43 // pred_region
          %379 = dma.done [#allocation9], 3072
        $region64: #{tpu_custom_call.1} parent=43 // pred_fallthru
          _
        %s380 = sand.u32 %s40, 1
        %s381 = scalar_lea.sflag [#allocation3], %s380
        %s382 = sand.u32 %s40, 1
        %s383 = smul.addr %s382, 192
        %s384 = scalar_lea.vmem [#allocation2], %s383
        %p385 = pneg %p53
        %p386 = pneg %p50
        %s387 = sand.u32 %s32, 1
        %s388 = scalar_lea.sflag [#allocation6], %s387
        %s389 = sand.u32 %s66, 1
        %s390 = smul.addr %s389, 576
        %s391 = scalar_lea.vmem [#allocation5], %s390
        %p392 = pneg %p79
        %p393 = pneg %p76
        %p394 = pneg %p100
        %p395 = pneg %p97
        %p396 = pneg %p121
        %p397 = pneg %p118
        %p398 = pneg %p142
        %p399 = pneg %p139
        %p400 = pneg %p163
        %p401 = pneg %p160
        %p402 = pneg %p189
        %p403 = pneg %p186
        %s404 = sand.u32 %s176, 1
        %s405 = scalar_lea.sflag [#allocation4], %s404
        %s406 = sand.u32 %s176, 1
        %s407 = smul.addr %s406, 192
        %s408 = scalar_lea.vmem [#allocation11], %s407
        %p409 = pneg %p215
        %p410 = pneg %p212
        %s411 = sand.u32 %s202, 1
        %s412 = scalar_lea.sflag [#allocation13], %s411
        %s413 = sand.u32 %s202, 1
        %s414 = smul.addr %s413, 576
        %s415 = scalar_lea.vmem [#allocation12], %s414
        %s416 = smul.u32 24, %s32
        %s417 = smul.u32 24, %s32
        %s418 = smul.u32 24, %s32
        %s419 = smul.u32 24, %s32
        %v421 = vld [vmem:[%s354] sm:$0xff]
        %v422 = vld [vmem:[%s354 + $0x8] sm:$0xff]
        %v423 = vld [vmem:[%s354 + $0x10] sm:$0xff]
        %v424 = vld [vmem:[%s354 + $0x18] sm:$0xff]
        %v425 = vld [vmem:[%s354 + $0x20] sm:$0xff]
        %v426 = vld [vmem:[%s354 + $0x28] sm:$0xff]
        %v427 = vld [vmem:[%s354 + $0x30] sm:$0xff]
        %v428 = vld [vmem:[%s354 + $0x38] sm:$0xff]
        %v429 = vld [vmem:[%s354 + $0x40] sm:$0xff]
        %v430 = vld [vmem:[%s354 + $0x48] sm:$0xff]
        %v431 = vld [vmem:[%s354 + $0x50] sm:$0xff]
        %v432 = vld [vmem:[%s354 + $0x58] sm:$0xff]
        %v433 = vld [vmem:[%s354 + $0x60] sm:$0xff]
        %v434 = vld [vmem:[%s354 + $0x68] sm:$0xff]
        %v435 = vld [vmem:[%s354 + $0x70] sm:$0xff]
        %v436 = vld [vmem:[%s354 + $0x78] sm:$0xff]
        %v437 = vld [vmem:[%s354 + $0x80] sm:$0xff]
        %v438 = vld [vmem:[%s354 + $0x88] sm:$0xff]
        %v439 = vld [vmem:[%s354 + $0x90] sm:$0xff]
        %v440 = vld [vmem:[%s354 + $0x98] sm:$0xff]
        %v441 = vld [vmem:[%s354 + $0xa0] sm:$0xff]
        %v442 = vld [vmem:[%s354 + $0xa8] sm:$0xff]
        %v443 = vld [vmem:[%s354 + $0xb0] sm:$0xff]
        %v444 = vld [vmem:[%s354 + $0xb8] sm:$0xff]
        %v445 = vld [vmem:[%s363] sm:$0xff]
        %v446 = vld [vmem:[%s363 + $0x8] sm:$0xff]
        %v447 = vld [vmem:[%s363 + $0x10] sm:$0xff]
        %v448 = vld [vmem:[%s363 + $0x18] sm:$0xff]
        %v449 = vld [vmem:[%s363 + $0x20] sm:$0xff]
        %v450 = vld [vmem:[%s363 + $0x28] sm:$0xff]
        %v451 = vld [vmem:[%s363 + $0x30] sm:$0xff]
        %v452 = vld [vmem:[%s363 + $0x38] sm:$0xff]
        %v453 = vld [vmem:[%s363 + $0x40] sm:$0xff]
        %v454 = vld [vmem:[%s363 + $0x48] sm:$0xff]
        %v455 = vld [vmem:[%s363 + $0x50] sm:$0xff]
        %v456 = vld [vmem:[%s363 + $0x58] sm:$0xff]
        %v457 = vld [vmem:[%s363 + $0x60] sm:$0xff]
        %v458 = vld [vmem:[%s363 + $0x68] sm:$0xff]
        %v459 = vld [vmem:[%s363 + $0x70] sm:$0xff]
        %v460 = vld [vmem:[%s363 + $0x78] sm:$0xff]
        %v461 = vld [vmem:[%s363 + $0x80] sm:$0xff]
        %v462 = vld [vmem:[%s363 + $0x88] sm:$0xff]
        %v463 = vld [vmem:[%s363 + $0x90] sm:$0xff]
        %v464 = vld [vmem:[%s363 + $0x98] sm:$0xff]
        %v465 = vld [vmem:[%s363 + $0xa0] sm:$0xff]
        %v466 = vld [vmem:[%s363 + $0xa8] sm:$0xff]
        %v467 = vld [vmem:[%s363 + $0xb0] sm:$0xff]
        %v468 = vld [vmem:[%s363 + $0xb8] sm:$0xff]
        %v469 = vld [vmem:[%s363 + $0xc0] sm:$0xff]
        %v470 = vld [vmem:[%s363 + $0xc8] sm:$0xff]
        %v471 = vld [vmem:[%s363 + $0xd0] sm:$0xff]
        %v472 = vld [vmem:[%s363 + $0xd8] sm:$0xff]
        %v473 = vld [vmem:[%s363 + $0xe0] sm:$0xff]
        %v474 = vld [vmem:[%s363 + $0xe8] sm:$0xff]
        %v475 = vld [vmem:[%s363 + $0xf0] sm:$0xff]
        %v476 = vld [vmem:[%s363 + $0xf8] sm:$0xff]
        %v477 = vld [vmem:[%s363 + $0x100] sm:$0xff]
        %v478 = vld [vmem:[%s363 + $0x108] sm:$0xff]
        %v479 = vld [vmem:[%s363 + $0x110] sm:$0xff]
        %v480 = vld [vmem:[%s363 + $0x118] sm:$0xff]
        %v481 = vld [vmem:[%s363 + $0x120] sm:$0xff]
        %v482 = vld [vmem:[%s363 + $0x128] sm:$0xff]
        %v483 = vld [vmem:[%s363 + $0x130] sm:$0xff]
        %v484 = vld [vmem:[%s363 + $0x138] sm:$0xff]
        %v485 = vld [vmem:[%s363 + $0x140] sm:$0xff]
        %v486 = vld [vmem:[%s363 + $0x148] sm:$0xff]
        %v487 = vld [vmem:[%s363 + $0x150] sm:$0xff]
        %v488 = vld [vmem:[%s363 + $0x158] sm:$0xff]
        %v489 = vld [vmem:[%s363 + $0x160] sm:$0xff]
        %v490 = vld [vmem:[%s363 + $0x168] sm:$0xff]
        %v491 = vld [vmem:[%s363 + $0x170] sm:$0xff]
        %v492 = vld [vmem:[%s363 + $0x178] sm:$0xff]
        %v493 = vld [vmem:[%s363 + $0x180] sm:$0xff]
        %v494 = vld [vmem:[%s363 + $0x188] sm:$0xff]
        %v495 = vld [vmem:[%s363 + $0x190] sm:$0xff]
        %v496 = vld [vmem:[%s363 + $0x198] sm:$0xff]
        %v497 = vld [vmem:[%s363 + $0x1a0] sm:$0xff]
        %v498 = vld [vmem:[%s363 + $0x1a8] sm:$0xff]
        %v499 = vld [vmem:[%s363 + $0x1b0] sm:$0xff]
        %v500 = vld [vmem:[%s363 + $0x1b8] sm:$0xff]
        %v501 = vld [vmem:[%s363 + $0x1c0] sm:$0xff]
        %v502 = vld [vmem:[%s363 + $0x1c8] sm:$0xff]
        %v503 = vld [vmem:[%s363 + $0x1d0] sm:$0xff]
        %v504 = vld [vmem:[%s363 + $0x1d8] sm:$0xff]
        %v505 = vld [vmem:[%s363 + $0x1e0] sm:$0xff]
        %v506 = vld [vmem:[%s363 + $0x1e8] sm:$0xff]
        %v507 = vld [vmem:[%s363 + $0x1f0] sm:$0xff]
        %v508 = vld [vmem:[%s363 + $0x1f8] sm:$0xff]
        %v509 = vld [vmem:[%s363 + $0x200] sm:$0xff]
        %v510 = vld [vmem:[%s363 + $0x208] sm:$0xff]
        %v511 = vld [vmem:[%s363 + $0x210] sm:$0xff]
        %v512 = vld [vmem:[%s363 + $0x218] sm:$0xff]
        %v513 = vld [vmem:[%s363 + $0x220] sm:$0xff]
        %v514 = vld [vmem:[%s363 + $0x228] sm:$0xff]
        %v515 = vld [vmem:[%s363 + $0x230] sm:$0xff]
        %v516 = vld [vmem:[%s363 + $0x238] sm:$0xff]
        %v517 = vpack.c.bf16 %v446, %v445
        %v518 = vpack.c.bf16 %v448, %v447
        %v519 = vpack.c.bf16 %v450, %v449
        %v520 = vpack.c.bf16 %v452, %v451
        %v521 = vpack.c.bf16 %v454, %v453
        %v522 = vpack.c.bf16 %v456, %v455
        %v523 = vpack.c.bf16 %v458, %v457
        %v524 = vpack.c.bf16 %v460, %v459
        %v525 = vpack.c.bf16 %v462, %v461
        %v526 = vpack.c.bf16 %v464, %v463
        %v527 = vpack.c.bf16 %v466, %v465
        %v528 = vpack.c.bf16 %v468, %v467
        %v529 = vpack.c.bf16 %v470, %v469
        %v530 = vpack.c.bf16 %v472, %v471
        %v531 = vpack.c.bf16 %v474, %v473
        %v532 = vpack.c.bf16 %v476, %v475
        %v533 = vpack.c.bf16 %v478, %v477
        %v534 = vpack.c.bf16 %v480, %v479
        %v535 = vpack.c.bf16 %v482, %v481
        %v536 = vpack.c.bf16 %v484, %v483
        %v537 = vpack.c.bf16 %v486, %v485
        %v538 = vpack.c.bf16 %v488, %v487
        %v539 = vpack.c.bf16 %v490, %v489
        %v540 = vpack.c.bf16 %v492, %v491
        %v541 = vpack.c.bf16 %v494, %v493
        %v542 = vpack.c.bf16 %v496, %v495
        %v543 = vpack.c.bf16 %v498, %v497
        %v544 = vpack.c.bf16 %v500, %v499
        %v545 = vpack.c.bf16 %v502, %v501
        %v546 = vpack.c.bf16 %v504, %v503
        %v547 = vpack.c.bf16 %v506, %v505
        %v548 = vpack.c.bf16 %v508, %v507
        %v549 = vpack.c.bf16 %v510, %v509
        %v550 = vpack.c.bf16 %v512, %v511
        %v551 = vpack.c.bf16 %v514, %v513
        %v552 = vpack.c.bf16 %v516, %v515
        %v553 = vld [vmem:[#allocation7] sm:$0xff]
        %v554 = vld [vmem:[#allocation7 + $0x8] sm:$0xff]
        %v555 = vld [vmem:[#allocation7 + $0x10] sm:$0xff]
        %v556 = vld [vmem:[#allocation7 + $0x18] sm:$0xff]
        %v557 = vld [vmem:[#allocation7 + $0x20] sm:$0xff]
        %v558 = vld [vmem:[#allocation7 + $0x28] sm:$0xff]
        %v559 = vld [vmem:[#allocation7 + $0x30] sm:$0xff]
        %v560 = vld [vmem:[#allocation7 + $0x38] sm:$0xff]
        %v561 = vld [vmem:[#allocation7 + $0x40] sm:$0xff]
        %v562 = vld [vmem:[#allocation7 + $0x48] sm:$0xff]
        %v563 = vld [vmem:[#allocation7 + $0x50] sm:$0xff]
        %v564 = vld [vmem:[#allocation7 + $0x58] sm:$0xff]
        %v565 = vld [vmem:[#allocation7 + $0x60] sm:$0xff]
        %v566 = vld [vmem:[#allocation7 + $0x68] sm:$0xff]
        %v567 = vld [vmem:[#allocation7 + $0x70] sm:$0xff]
        %v568 = vld [vmem:[#allocation7 + $0x78] sm:$0xff]
        %v585 = vunpack.c.l.b16 %v553
        %v586 = vunpack.c.h.b16 %v553
        %v587 = vunpack.c.l.b16 %v554
        %v588 = vunpack.c.h.b16 %v554
        %v589 = vunpack.c.l.b16 %v555
        %v590 = vunpack.c.h.b16 %v555
        %v591 = vunpack.c.l.b16 %v556
        %v592 = vunpack.c.h.b16 %v556
        %v593 = vunpack.c.l.b16 %v557
        %v594 = vunpack.c.h.b16 %v557
        %v595 = vunpack.c.l.b16 %v558
        %v596 = vunpack.c.h.b16 %v558
        %v597 = vunpack.c.l.b16 %v559
        %v598 = vunpack.c.h.b16 %v559
        %v599 = vunpack.c.l.b16 %v560
        %v600 = vunpack.c.h.b16 %v560
        %v601 = vunpack.c.l.b16 %v561
        %v602 = vunpack.c.h.b16 %v561
        %v603 = vunpack.c.l.b16 %v562
        %v604 = vunpack.c.h.b16 %v562
        %v605 = vunpack.c.l.b16 %v563
        %v606 = vunpack.c.h.b16 %v563
        %v607 = vunpack.c.l.b16 %v564
        %v608 = vunpack.c.h.b16 %v564
        %v609 = vunpack.c.l.b16 %v565
        %v610 = vunpack.c.h.b16 %v565
        %v611 = vunpack.c.l.b16 %v566
        %v612 = vunpack.c.h.b16 %v566
        %v613 = vunpack.c.l.b16 %v567
        %v614 = vunpack.c.h.b16 %v567
        %v615 = vunpack.c.l.b16 %v568
        %v616 = vunpack.c.h.b16 %v568
        %v617 = vpack.c.b16 %v587, %v585
        %v618 = vpack.c.b16 %v588, %v586
        %v619 = vpack.c.b16 %v591, %v589
        %v620 = vpack.c.b16 %v592, %v590
        %v621 = vpack.c.b16 %v595, %v593
        %v622 = vpack.c.b16 %v596, %v594
        %v623 = vpack.c.b16 %v599, %v597
        %v624 = vpack.c.b16 %v600, %v598
        %v625 = vpack.c.b16 %v603, %v601
        %v626 = vpack.c.b16 %v604, %v602
        %v627 = vpack.c.b16 %v607, %v605
        %v628 = vpack.c.b16 %v608, %v606
        %v629 = vpack.c.b16 %v611, %v609
        %v630 = vpack.c.b16 %v612, %v610
        %v631 = vpack.c.b16 %v615, %v613
        %v632 = vpack.c.b16 %v616, %v614
        %649 = vmatprep.subr.bf16.mxu0 %v618
        %650 = vmatpush1.bf16.msra.mxu0 %v617
        %651 = vmatprep.subr.bf16.mxu0 %v620
        %652 = vmatpush1.bf16.msra.mxu0 %v619
        %653 = vmatprep.subr.bf16.mxu0 %v622
        %654 = vmatpush1.bf16.msra.mxu0 %v621
        %655 = vmatprep.subr.bf16.mxu0 %v624
        %656 = vmatpush1.bf16.msra.mxu0 %v623
        %657 = vmatprep.subr.bf16.mxu0 %v626
        %658 = vmatpush1.bf16.msra.mxu0 %v625
        %659 = vmatprep.subr.bf16.mxu0 %v628
        %660 = vmatpush1.bf16.msra.mxu0 %v627
        %661 = vmatprep.subr.bf16.mxu0 %v630
        %662 = vmatpush1.bf16.msra.mxu0 %v629
        %663 = vmatprep.subr.bf16.mxu0 %v632
        %664 = vmatpush1.bf16.msra.mxu0 %v631
        %665 = vmatprep.subr.bf16.mxu0 0
        %666 = vmatpush1.bf16.msra.mxu0 0
        %667 = vmatprep.subr.bf16.mxu0 0
        %668 = vmatpush1.bf16.msra.mxu0 0
        %669 = vmatprep.subr.bf16.mxu0 0
        %670 = vmatpush1.bf16.msra.mxu0 0
        %671 = vmatprep.subr.bf16.mxu0 0
        %672 = vmatpush1.bf16.msra.mxu0 0
        %673 = vmatprep.subr.bf16.mxu0 0
        %674 = vmatpush1.bf16.msra.mxu0 0
        %675 = vmatprep.subr.bf16.mxu0 0
        %676 = vmatpush1.bf16.msra.mxu0 0
        %677 = vmatprep.subr.bf16.mxu0 0
        %678 = vmatpush1.bf16.msra.mxu0 0
        %679 = vmatprep.subr.bf16.mxu0 0
        %680 = vmatpush1.bf16.msra.mxu0 0
        %681 = vmatprep.mubr.bf16.mxu0 0
        %682 = vmatmul.mubr.bf16.gmra.mrb[0].mxu0 %v517
        %v683 = vpop.f32.mrb[0].mxu0
        %v684 = vadd.f32 0.0, %v683
        %v685 = vpop.f32.mrb[0].mxu0
        %v686 = vadd.f32 0.0, %v685
        %v687 = vpop.f32.mrb[0].mxu0
        %v688 = vadd.f32 0.0, %v687
        %v689 = vpop.f32.mrb[0].mxu0
        %v690 = vadd.f32 0.0, %v689
        %691 = vmatprep.mubr.bf16.mxu0 0
        %692 = vmatmul.mubr.bf16.gmra.mrb[0].mxu0 %v518
        %v693 = vpop.f32.mrb[0].mxu0
        %v694 = vadd.f32 0.0, %v693
        %v695 = vpop.f32.mrb[0].mxu0
        %v696 = vadd.f32 0.0, %v695
        %v697 = vpop.f32.mrb[0].mxu0
        %v698 = vadd.f32 0.0, %v697
        %v699 = vpop.f32.mrb[0].mxu0
        %v700 = vadd.f32 0.0, %v699
        %701 = vmatprep.mubr.bf16.mxu0 0
        %702 = vmatmul.mubr.bf16.gmra.mrb[0].mxu0 %v519
        %v703 = vpop.f32.mrb[0].mxu0
        %v704 = vadd.f32 0.0, %v703
        %v705 = vpop.f32.mrb[0].mxu0
        %v706 = vadd.f32 0.0, %v705
        %v707 = vpop.f32.mrb[0].mxu0
        %v708 = vadd.f32 0.0, %v707
        %v709 = vpop.f32.mrb[0].mxu0
        %v710 = vadd.f32 0.0, %v709
        %711 = vmatprep.mubr.bf16.mxu0 0
        %712 = vmatmul.mubr.bf16.gmra.mrb[0].mxu0 %v520
        %v713 = vpop.f32.mrb[0].mxu0
        %v714 = vadd.f32 0.0, %v713
        %v715 = vpop.f32.mrb[0].mxu0
        %v716 = vadd.f32 0.0, %v715
        %v717 = vpop.f32.mrb[0].mxu0
        %v718 = vadd.f32 0.0, %v717
        %v719 = vpop.f32.mrb[0].mxu0
        %v720 = vadd.f32 0.0, %v719
        %721 = vmatprep.mubr.bf16.mxu0 0
        %722 = vmatmul.mubr.bf16.gmra.mrb[0].mxu0 %v521
        %v723 = vpop.f32.mrb[0].mxu0
        %v724 = vadd.f32 0.0, %v723
        %v725 = vpop.f32.mrb[0].mxu0
        %v726 = vadd.f32 0.0, %v725
        %v727 = vpop.f32.mrb[0].mxu0
        %v728 = vadd.f32 0.0, %v727
        %v729 = vpop.f32.mrb[0].mxu0
        %v730 = vadd.f32 0.0, %v729
        %731 = vmatprep.mubr.bf16.mxu0 0
        %732 = vmatmul.mubr.bf16.gmra.mrb[0].mxu0 %v522
        %v733 = vpop.f32.mrb[0].mxu0
        %v734 = vadd.f32 0.0, %v733
        %v735 = vpop.f32.mrb[0].mxu0
        %v736 = vadd.f32 0.0, %v735
        %v737 = vpop.f32.mrb[0].mxu0
        %v738 = vadd.f32 0.0, %v737
        %v739 = vpop.f32.mrb[0].mxu0
        %v740 = vadd.f32 0.0, %v739
        %741 = vmatprep.mubr.bf16.mxu0 0
        %742 = vmatmul.mubr.bf16.gmra.mrb[0].mxu0 %v523
        %v743 = vpop.f32.mrb[0].mxu0
        %v744 = vadd.f32 0.0, %v743
        %v745 = vpop.f32.mrb[0].mxu0
        %v746 = vadd.f32 0.0, %v745
        %v747 = vpop.f32.mrb[0].mxu0
        %v748 = vadd.f32 0.0, %v747
        %v749 = vpop.f32.mrb[0].mxu0
        %v750 = vadd.f32 0.0, %v749
        %751 = vmatprep.mubr.bf16.mxu0 0
        %752 = vmatmul.mubr.bf16.gmra.mrb[0].mxu0 %v524
        %v753 = vpop.f32.mrb[0].mxu0
        %v754 = vadd.f32 0.0, %v753
        %v755 = vpop.f32.mrb[0].mxu0
        %v756 = vadd.f32 0.0, %v755
        %v757 = vpop.f32.mrb[0].mxu0
        %v758 = vadd.f32 0.0, %v757
        %v759 = vpop.f32.mrb[0].mxu0
        %v760 = vadd.f32 0.0, %v759
        %761 = vmatprep.mubr.bf16.mxu0 0
        %762 = vmatmul.mubr.bf16.gmra.mrb[0].mxu0 %v525
        %v763 = vpop.f32.mrb[0].mxu0
        %v764 = vadd.f32 0.0, %v763
        %v765 = vpop.f32.mrb[0].mxu0
        %v766 = vadd.f32 0.0, %v765
        %v767 = vpop.f32.mrb[0].mxu0
        %v768 = vadd.f32 0.0, %v767
        %v769 = vpop.f32.mrb[0].mxu0
        %v770 = vadd.f32 0.0, %v769
        %771 = vmatprep.mubr.bf16.mxu0 0
        %772 = vmatmul.mubr.bf16.gmra.mrb[0].mxu0 %v526
        %v773 = vpop.f32.mrb[0].mxu0
        %v774 = vadd.f32 0.0, %v773
        %v775 = vpop.f32.mrb[0].mxu0
        %v776 = vadd.f32 0.0, %v775
        %v777 = vpop.f32.mrb[0].mxu0
        %v778 = vadd.f32 0.0, %v777
        %v779 = vpop.f32.mrb[0].mxu0
        %v780 = vadd.f32 0.0, %v779
        %781 = vmatprep.mubr.bf16.mxu0 0
        %782 = vmatmul.mubr.bf16.gmra.mrb[0].mxu0 %v527
        %v783 = vpop.f32.mrb[0].mxu0
        %v784 = vadd.f32 0.0, %v783
        %v785 = vpop.f32.mrb[0].mxu0
        %v786 = vadd.f32 0.0, %v785
        %v787 = vpop.f32.mrb[0].mxu0
        %v788 = vadd.f32 0.0, %v787
        %v789 = vpop.f32.mrb[0].mxu0
        %v790 = vadd.f32 0.0, %v789
        %791 = vmatprep.mubr.bf16.mxu0 0
        %792 = vmatmul.mubr.bf16.gmra.mrb[0].mxu0 %v528
        %v793 = vpop.f32.mrb[0].mxu0
        %v794 = vadd.f32 0.0, %v793
        %v795 = vpop.f32.mrb[0].mxu0
        %v796 = vadd.f32 0.0, %v795
        %v797 = vpop.f32.mrb[0].mxu0
        %v798 = vadd.f32 0.0, %v797
        %v799 = vpop.f32.mrb[0].mxu0
        %v800 = vadd.f32 0.0, %v799
        %801 = vmatprep.mubr.bf16.mxu0 0
        %802 = vmatmul.mubr.bf16.gmra.mrb[0].mxu0 %v529
        %v803 = vpop.f32.mrb[0].mxu0
        %v804 = vadd.f32 0.0, %v803
        %v805 = vpop.f32.mrb[0].mxu0
        %v806 = vadd.f32 0.0, %v805
        %v807 = vpop.f32.mrb[0].mxu0
        %v808 = vadd.f32 0.0, %v807
        %v809 = vpop.f32.mrb[0].mxu0
        %v810 = vadd.f32 0.0, %v809
        %811 = vmatprep.mubr.bf16.mxu0 0
        %812 = vmatmul.mubr.bf16.gmra.mrb[0].mxu0 %v530
        %v813 = vpop.f32.mrb[0].mxu0
        %v814 = vadd.f32 0.0, %v813
        %v815 = vpop.f32.mrb[0].mxu0
        %v816 = vadd.f32 0.0, %v815
        %v817 = vpop.f32.mrb[0].mxu0
        %v818 = vadd.f32 0.0, %v817
        %v819 = vpop.f32.mrb[0].mxu0
        %v820 = vadd.f32 0.0, %v819
        %821 = vmatprep.mubr.bf16.mxu0 0
        %822 = vmatmul.mubr.bf16.gmra.mrb[0].mxu0 %v531
        %v823 = vpop.f32.mrb[0].mxu0
        %v824 = vadd.f32 0.0, %v823
        %v825 = vpop.f32.mrb[0].mxu0
        %v826 = vadd.f32 0.0, %v825
        %v827 = vpop.f32.mrb[0].mxu0
        %v828 = vadd.f32 0.0, %v827
        %v829 = vpop.f32.mrb[0].mxu0
        %v830 = vadd.f32 0.0, %v829
        %831 = vmatprep.mubr.bf16.mxu0 0
        %832 = vmatmul.mubr.bf16.gmra.mrb[0].mxu0 %v532
        %v833 = vpop.f32.mrb[0].mxu0
        %v834 = vadd.f32 0.0, %v833
        %v835 = vpop.f32.mrb[0].mxu0
        %v836 = vadd.f32 0.0, %v835
        %v837 = vpop.f32.mrb[0].mxu0
        %v838 = vadd.f32 0.0, %v837
        %v839 = vpop.f32.mrb[0].mxu0
        %v840 = vadd.f32 0.0, %v839
        %841 = vmatprep.mubr.bf16.mxu0 0
        %842 = vmatmul.mubr.bf16.gmra.mrb[0].mxu0 %v533
        %v843 = vpop.f32.mrb[0].mxu0
        %v844 = vadd.f32 0.0, %v843
        %v845 = vpop.f32.mrb[0].mxu0
        %v846 = vadd.f32 0.0, %v845
        %v847 = vpop.f32.mrb[0].mxu0
        %v848 = vadd.f32 0.0, %v847
        %v849 = vpop.f32.mrb[0].mxu0
        %v850 = vadd.f32 0.0, %v849
        %851 = vmatprep.mubr.bf16.mxu0 0
        %852 = vmatmul.mubr.bf16.gmra.mrb[0].mxu0 %v534
        %v853 = vpop.f32.mrb[0].mxu0
        %v854 = vadd.f32 0.0, %v853
        %v855 = vpop.f32.mrb[0].mxu0
        %v856 = vadd.f32 0.0, %v855
        %v857 = vpop.f32.mrb[0].mxu0
        %v858 = vadd.f32 0.0, %v857
        %v859 = vpop.f32.mrb[0].mxu0
        %v860 = vadd.f32 0.0, %v859
        %861 = vmatprep.mubr.bf16.mxu0 0
        %862 = vmatmul.mubr.bf16.gmra.mrb[0].mxu0 %v535
        %v863 = vpop.f32.mrb[0].mxu0
        %v864 = vadd.f32 0.0, %v863
        %v865 = vpop.f32.mrb[0].mxu0
        %v866 = vadd.f32 0.0, %v865
        %v867 = vpop.f32.mrb[0].mxu0
        %v868 = vadd.f32 0.0, %v867
        %v869 = vpop.f32.mrb[0].mxu0
        %v870 = vadd.f32 0.0, %v869
        %871 = vmatprep.mubr.bf16.mxu0 0
        %872 = vmatmul.mubr.bf16.gmra.mrb[0].mxu0 %v536
        %v873 = vpop.f32.mrb[0].mxu0
        %v874 = vadd.f32 0.0, %v873
        %v875 = vpop.f32.mrb[0].mxu0
        %v876 = vadd.f32 0.0, %v875
        %v877 = vpop.f32.mrb[0].mxu0
        %v878 = vadd.f32 0.0, %v877
        %v879 = vpop.f32.mrb[0].mxu0
        %v880 = vadd.f32 0.0, %v879
        %881 = vmatprep.mubr.bf16.mxu0 0
        %882 = vmatmul.mubr.bf16.gmra.mrb[0].mxu0 %v537
        %v883 = vpop.f32.mrb[0].mxu0
        %v884 = vadd.f32 0.0, %v883
        %v885 = vpop.f32.mrb[0].mxu0
        %v886 = vadd.f32 0.0, %v885
        %v887 = vpop.f32.mrb[0].mxu0
        %v888 = vadd.f32 0.0, %v887
        %v889 = vpop.f32.mrb[0].mxu0
        %v890 = vadd.f32 0.0, %v889
        %891 = vmatprep.mubr.bf16.mxu0 0
        %892 = vmatmul.mubr.bf16.gmra.mrb[0].mxu0 %v538
        %v893 = vpop.f32.mrb[0].mxu0
        %v894 = vadd.f32 0.0, %v893
        %v895 = vpop.f32.mrb[0].mxu0
        %v896 = vadd.f32 0.0, %v895
        %v897 = vpop.f32.mrb[0].mxu0
        %v898 = vadd.f32 0.0, %v897
        %v899 = vpop.f32.mrb[0].mxu0
        %v900 = vadd.f32 0.0, %v899
        %901 = vmatprep.mubr.bf16.mxu0 0
        %902 = vmatmul.mubr.bf16.gmra.mrb[0].mxu0 %v539
        %v903 = vpop.f32.mrb[0].mxu0
        %v904 = vadd.f32 0.0, %v903
        %v905 = vpop.f32.mrb[0].mxu0
        %v906 = vadd.f32 0.0, %v905
        %v907 = vpop.f32.mrb[0].mxu0
        %v908 = vadd.f32 0.0, %v907
        %v909 = vpop.f32.mrb[0].mxu0
        %v910 = vadd.f32 0.0, %v909
        %911 = vmatprep.mubr.bf16.mxu0 0
        %912 = vmatmul.mubr.bf16.gmra.mrb[0].mxu0 %v540
        %v913 = vpop.f32.mrb[0].mxu0
        %v914 = vadd.f32 0.0, %v913
        %v915 = vpop.f32.mrb[0].mxu0
        %v916 = vadd.f32 0.0, %v915
        %v917 = vpop.f32.mrb[0].mxu0
        %v918 = vadd.f32 0.0, %v917
        %v919 = vpop.f32.mrb[0].mxu0
        %v920 = vadd.f32 0.0, %v919
        %921 = vmatprep.mubr.bf16.mxu0 0
        %922 = vmatmul.mubr.bf16.gmra.mrb[0].mxu0 %v541
        %v923 = vpop.f32.mrb[0].mxu0
        %v924 = vadd.f32 0.0, %v923
        %v925 = vpop.f32.mrb[0].mxu0
        %v926 = vadd.f32 0.0, %v925
        %v927 = vpop.f32.mrb[0].mxu0
        %v928 = vadd.f32 0.0, %v927
        %v929 = vpop.f32.mrb[0].mxu0
        %v930 = vadd.f32 0.0, %v929
        %931 = vmatprep.mubr.bf16.mxu0 0
        %932 = vmatmul.mubr.bf16.gmra.mrb[0].mxu0 %v542
        %v933 = vpop.f32.mrb[0].mxu0
        %v934 = vadd.f32 0.0, %v933
        %v935 = vpop.f32.mrb[0].mxu0
        %v936 = vadd.f32 0.0, %v935
        %v937 = vpop.f32.mrb[0].mxu0
        %v938 = vadd.f32 0.0, %v937
        %v939 = vpop.f32.mrb[0].mxu0
        %v940 = vadd.f32 0.0, %v939
        %941 = vmatprep.mubr.bf16.mxu0 0
        %942 = vmatmul.mubr.bf16.gmra.mrb[0].mxu0 %v543
        %v943 = vpop.f32.mrb[0].mxu0
        %v944 = vadd.f32 0.0, %v943
        %v945 = vpop.f32.mrb[0].mxu0
        %v946 = vadd.f32 0.0, %v945
        %v947 = vpop.f32.mrb[0].mxu0
        %v948 = vadd.f32 0.0, %v947
        %v949 = vpop.f32.mrb[0].mxu0
        %v950 = vadd.f32 0.0, %v949
        %951 = vmatprep.mubr.bf16.mxu0 0
        %952 = vmatmul.mubr.bf16.gmra.mrb[0].mxu0 %v544
        %v953 = vpop.f32.mrb[0].mxu0
        %v954 = vadd.f32 0.0, %v953
        %v955 = vpop.f32.mrb[0].mxu0
        %v956 = vadd.f32 0.0, %v955
        %v957 = vpop.f32.mrb[0].mxu0
        %v958 = vadd.f32 0.0, %v957
        %v959 = vpop.f32.mrb[0].mxu0
        %v960 = vadd.f32 0.0, %v959
        %961 = vmatprep.mubr.bf16.mxu0 0
        %962 = vmatmul.mubr.bf16.gmra.mrb[0].mxu0 %v545
        %v963 = vpop.f32.mrb[0].mxu0
        %v964 = vadd.f32 0.0, %v963
        %v965 = vpop.f32.mrb[0].mxu0
        %v966 = vadd.f32 0.0, %v965
        %v967 = vpop.f32.mrb[0].mxu0
        %v968 = vadd.f32 0.0, %v967
        %v969 = vpop.f32.mrb[0].mxu0
        %v970 = vadd.f32 0.0, %v969
        %971 = vmatprep.mubr.bf16.mxu0 0
        %972 = vmatmul.mubr.bf16.gmra.mrb[0].mxu0 %v546
        %v973 = vpop.f32.mrb[0].mxu0
        %v974 = vadd.f32 0.0, %v973
        %v975 = vpop.f32.mrb[0].mxu0
        %v976 = vadd.f32 0.0, %v975
        %v977 = vpop.f32.mrb[0].mxu0
        %v978 = vadd.f32 0.0, %v977
        %v979 = vpop.f32.mrb[0].mxu0
        %v980 = vadd.f32 0.0, %v979
        %981 = vmatprep.mubr.bf16.mxu0 0
        %982 = vmatmul.mubr.bf16.gmra.mrb[0].mxu0 %v547
        %v983 = vpop.f32.mrb[0].mxu0
        %v984 = vadd.f32 0.0, %v983
        %v985 = vpop.f32.mrb[0].mxu0
        %v986 = vadd.f32 0.0, %v985
        %v987 = vpop.f32.mrb[0].mxu0
        %v988 = vadd.f32 0.0, %v987
        %v989 = vpop.f32.mrb[0].mxu0
        %v990 = vadd.f32 0.0, %v989
        %991 = vmatprep.mubr.bf16.mxu0 0
        %992 = vmatmul.mubr.bf16.gmra.mrb[0].mxu0 %v548
        %v993 = vpop.f32.mrb[0].mxu0
        %v994 = vadd.f32 0.0, %v993
        %v995 = vpop.f32.mrb[0].mxu0
        %v996 = vadd.f32 0.0, %v995
        %v997 = vpop.f32.mrb[0].mxu0
        %v998 = vadd.f32 0.0, %v997
        %v999 = vpop.f32.mrb[0].mxu0
        %v1000 = vadd.f32 0.0, %v999
        %1001 = vmatprep.mubr.bf16.mxu0 0
        %1002 = vmatmul.mubr.bf16.gmra.mrb[0].mxu0 %v549
        %v1003 = vpop.f32.mrb[0].mxu0
        %v1004 = vadd.f32 0.0, %v1003
        %v1005 = vpop.f32.mrb[0].mxu0
        %v1006 = vadd.f32 0.0, %v1005
        %v1007 = vpop.f32.mrb[0].mxu0
        %v1008 = vadd.f32 0.0, %v1007
        %v1009 = vpop.f32.mrb[0].mxu0
        %v1010 = vadd.f32 0.0, %v1009
        %1011 = vmatprep.mubr.bf16.mxu0 0
        %1012 = vmatmul.mubr.bf16.gmra.mrb[0].mxu0 %v550
        %v1013 = vpop.f32.mrb[0].mxu0
        %v1014 = vadd.f32 0.0, %v1013
        %v1015 = vpop.f32.mrb[0].mxu0
        %v1016 = vadd.f32 0.0, %v1015
        %v1017 = vpop.f32.mrb[0].mxu0
        %v1018 = vadd.f32 0.0, %v1017
        %v1019 = vpop.f32.mrb[0].mxu0
        %v1020 = vadd.f32 0.0, %v1019
        %1021 = vmatprep.mubr.bf16.mxu0 0
        %1022 = vmatmul.mubr.bf16.gmra.mrb[0].mxu0 %v551
        %v1023 = vpop.f32.mrb[0].mxu0
        %v1024 = vadd.f32 0.0, %v1023
        %v1025 = vpop.f32.mrb[0].mxu0
        %v1026 = vadd.f32 0.0, %v1025
        %v1027 = vpop.f32.mrb[0].mxu0
        %v1028 = vadd.f32 0.0, %v1027
        %v1029 = vpop.f32.mrb[0].mxu0
        %v1030 = vadd.f32 0.0, %v1029
        %1031 = vmatprep.mubr.bf16.mxu0 0
        %1032 = vmatmul.mubr.bf16.gmra.mrb[0].mxu0 %v552
        %v1033 = vpop.f32.mrb[0].mxu0
        %v1034 = vadd.f32 0.0, %v1033
        %v1035 = vpop.f32.mrb[0].mxu0
        %v1036 = vadd.f32 0.0, %v1035
        %v1037 = vpop.f32.mrb[0].mxu0
        %v1038 = vadd.f32 0.0, %v1037
        %v1039 = vpop.f32.mrb[0].mxu0
        %v1040 = vadd.f32 0.0, %v1039
        %1041 = vdwg.mxu0
        %v1042 = vmul.f32 %v684, %v684
        %v1043 = vmul.f32 %v688, %v688
        %v1044 = vmul.f32 %v694, %v694
        %v1045 = vmul.f32 %v698, %v698
        %v1046 = vmul.f32 %v704, %v704
        %v1047 = vmul.f32 %v708, %v708
        %v1048 = vmul.f32 %v714, %v714
        %v1049 = vmul.f32 %v718, %v718
        %v1050 = vmul.f32 %v724, %v724
        %v1051 = vmul.f32 %v728, %v728
        %v1052 = vmul.f32 %v734, %v734
        %v1053 = vmul.f32 %v738, %v738
        %v1054 = vmul.f32 %v744, %v744
        %v1055 = vmul.f32 %v748, %v748
        %v1056 = vmul.f32 %v754, %v754
        %v1057 = vmul.f32 %v758, %v758
        %v1058 = vmul.f32 %v764, %v764
        %v1059 = vmul.f32 %v768, %v768
        %v1060 = vmul.f32 %v774, %v774
        %v1061 = vmul.f32 %v778, %v778
        %v1062 = vmul.f32 %v784, %v784
        %v1063 = vmul.f32 %v788, %v788
        %v1064 = vmul.f32 %v794, %v794
        %v1065 = vmul.f32 %v798, %v798
        %v1066 = vmul.f32 %v804, %v804
        %v1067 = vmul.f32 %v808, %v808
        %v1068 = vmul.f32 %v814, %v814
        %v1069 = vmul.f32 %v818, %v818
        %v1070 = vmul.f32 %v824, %v824
        %v1071 = vmul.f32 %v828, %v828
        %v1072 = vmul.f32 %v834, %v834
        %v1073 = vmul.f32 %v838, %v838
        %v1074 = vmul.f32 %v844, %v844
        %v1075 = vmul.f32 %v848, %v848
        %v1076 = vmul.f32 %v854, %v854
        %v1077 = vmul.f32 %v858, %v858
        %v1078 = vmul.f32 %v864, %v864
        %v1079 = vmul.f32 %v868, %v868
        %v1080 = vmul.f32 %v874, %v874
        %v1081 = vmul.f32 %v878, %v878
        %v1082 = vmul.f32 %v884, %v884
        %v1083 = vmul.f32 %v888, %v888
        %v1084 = vmul.f32 %v894, %v894
        %v1085 = vmul.f32 %v898, %v898
        %v1086 = vmul.f32 %v904, %v904
        %v1087 = vmul.f32 %v908, %v908
        %v1088 = vmul.f32 %v914, %v914
        %v1089 = vmul.f32 %v918, %v918
        %v1090 = vmul.f32 %v924, %v924
        %v1091 = vmul.f32 %v928, %v928
        %v1092 = vmul.f32 %v934, %v934
        %v1093 = vmul.f32 %v938, %v938
        %v1094 = vmul.f32 %v944, %v944
        %v1095 = vmul.f32 %v948, %v948
        %v1096 = vmul.f32 %v954, %v954
        %v1097 = vmul.f32 %v958, %v958
        %v1098 = vmul.f32 %v964, %v964
        %v1099 = vmul.f32 %v968, %v968
        %v1100 = vmul.f32 %v974, %v974
        %v1101 = vmul.f32 %v978, %v978
        %v1102 = vmul.f32 %v984, %v984
        %v1103 = vmul.f32 %v988, %v988
        %v1104 = vmul.f32 %v994, %v994
        %v1105 = vmul.f32 %v998, %v998
        %v1106 = vmul.f32 %v1004, %v1004
        %v1107 = vmul.f32 %v1008, %v1008
        %v1108 = vmul.f32 %v1014, %v1014
        %v1109 = vmul.f32 %v1018, %v1018
        %v1110 = vmul.f32 %v1024, %v1024
        %v1111 = vmul.f32 %v1028, %v1028
        %v1112 = vmul.f32 %v1034, %v1034
        %v1113 = vmul.f32 %v1038, %v1038
        %v1114 = vadd.f32 %v1042, %v1066
        %v1115 = vadd.f32 %v1114, %v1090
        %v1116 = vadd.f32 %v1043, %v1067
        %v1117 = vadd.f32 %v1116, %v1091
        %v1118 = vadd.f32 %v1044, %v1068
        %v1119 = vadd.f32 %v1118, %v1092
        %v1120 = vadd.f32 %v1045, %v1069
        %v1121 = vadd.f32 %v1120, %v1093
        %v1122 = vadd.f32 %v1046, %v1070
        %v1123 = vadd.f32 %v1122, %v1094
        %v1124 = vadd.f32 %v1047, %v1071
        %v1125 = vadd.f32 %v1124, %v1095
        %v1126 = vadd.f32 %v1048, %v1072
        %v1127 = vadd.f32 %v1126, %v1096
        %v1128 = vadd.f32 %v1049, %v1073
        %v1129 = vadd.f32 %v1128, %v1097
        %v1130 = vadd.f32 %v1050, %v1074
        %v1131 = vadd.f32 %v1130, %v1098
        %v1132 = vadd.f32 %v1051, %v1075
        %v1133 = vadd.f32 %v1132, %v1099
        %v1134 = vadd.f32 %v1052, %v1076
        %v1135 = vadd.f32 %v1134, %v1100
        %v1136 = vadd.f32 %v1053, %v1077
        %v1137 = vadd.f32 %v1136, %v1101
        %v1138 = vadd.f32 %v1054, %v1078
        %v1139 = vadd.f32 %v1138, %v1102
        %v1140 = vadd.f32 %v1055, %v1079
        %v1141 = vadd.f32 %v1140, %v1103
        %v1142 = vadd.f32 %v1056, %v1080
        %v1143 = vadd.f32 %v1142, %v1104
        %v1144 = vadd.f32 %v1057, %v1081
        %v1145 = vadd.f32 %v1144, %v1105
        %v1146 = vadd.f32 %v1058, %v1082
        %v1147 = vadd.f32 %v1146, %v1106
        %v1148 = vadd.f32 %v1059, %v1083
        %v1149 = vadd.f32 %v1148, %v1107
        %v1150 = vadd.f32 %v1060, %v1084
        %v1151 = vadd.f32 %v1150, %v1108
        %v1152 = vadd.f32 %v1061, %v1085
        %v1153 = vadd.f32 %v1152, %v1109
        %v1154 = vadd.f32 %v1062, %v1086
        %v1155 = vadd.f32 %v1154, %v1110
        %v1156 = vadd.f32 %v1063, %v1087
        %v1157 = vadd.f32 %v1156, %v1111
        %v1158 = vadd.f32 %v1064, %v1088
        %v1159 = vadd.f32 %v1158, %v1112
        %v1160 = vadd.f32 %v1065, %v1089
        %v1161 = vadd.f32 %v1160, %v1113
        %v1162 = vmul.f32 %v684, %v686
        %v1163 = vmul.f32 %v688, %v690
        %v1164 = vmul.f32 %v694, %v696
        %v1165 = vmul.f32 %v698, %v700
        %v1166 = vmul.f32 %v704, %v706
        %v1167 = vmul.f32 %v708, %v710
        %v1168 = vmul.f32 %v714, %v716
        %v1169 = vmul.f32 %v718, %v720
        %v1170 = vmul.f32 %v724, %v726
        %v1171 = vmul.f32 %v728, %v730
        %v1172 = vmul.f32 %v734, %v736
        %v1173 = vmul.f32 %v738, %v740
        %v1174 = vmul.f32 %v744, %v746
        %v1175 = vmul.f32 %v748, %v750
        %v1176 = vmul.f32 %v754, %v756
        %v1177 = vmul.f32 %v758, %v760
        %v1178 = vmul.f32 %v764, %v766
        %v1179 = vmul.f32 %v768, %v770
        %v1180 = vmul.f32 %v774, %v776
        %v1181 = vmul.f32 %v778, %v780
        %v1182 = vmul.f32 %v784, %v786
        %v1183 = vmul.f32 %v788, %v790
        %v1184 = vmul.f32 %v794, %v796
        %v1185 = vmul.f32 %v798, %v800
        %v1186 = vmul.f32 %v804, %v806
        %v1187 = vmul.f32 %v808, %v810
        %v1188 = vmul.f32 %v814, %v816
        %v1189 = vmul.f32 %v818, %v820
        %v1190 = vmul.f32 %v824, %v826
        %v1191 = vmul.f32 %v828, %v830
        %v1192 = vmul.f32 %v834, %v836
        %v1193 = vmul.f32 %v838, %v840
        %v1194 = vmul.f32 %v844, %v846
        %v1195 = vmul.f32 %v848, %v850
        %v1196 = vmul.f32 %v854, %v856
        %v1197 = vmul.f32 %v858, %v860
        %v1198 = vmul.f32 %v864, %v866
        %v1199 = vmul.f32 %v868, %v870
        %v1200 = vmul.f32 %v874, %v876
        %v1201 = vmul.f32 %v878, %v880
        %v1202 = vmul.f32 %v884, %v886
        %v1203 = vmul.f32 %v888, %v890
        %v1204 = vmul.f32 %v894, %v896
        %v1205 = vmul.f32 %v898, %v900
        %v1206 = vmul.f32 %v904, %v906
        %v1207 = vmul.f32 %v908, %v910
        %v1208 = vmul.f32 %v914, %v916
        %v1209 = vmul.f32 %v918, %v920
        %v1210 = vmul.f32 %v924, %v926
        %v1211 = vmul.f32 %v928, %v930
        %v1212 = vmul.f32 %v934, %v936
        %v1213 = vmul.f32 %v938, %v940
        %v1214 = vmul.f32 %v944, %v946
        %v1215 = vmul.f32 %v948, %v950
        %v1216 = vmul.f32 %v954, %v956
        %v1217 = vmul.f32 %v958, %v960
        %v1218 = vmul.f32 %v964, %v966
        %v1219 = vmul.f32 %v968, %v970
        %v1220 = vmul.f32 %v974, %v976
        %v1221 = vmul.f32 %v978, %v980
        %v1222 = vmul.f32 %v984, %v986
        %v1223 = vmul.f32 %v988, %v990
        %v1224 = vmul.f32 %v994, %v996
        %v1225 = vmul.f32 %v998, %v1000
        %v1226 = vmul.f32 %v1004, %v1006
        %v1227 = vmul.f32 %v1008, %v1010
        %v1228 = vmul.f32 %v1014, %v1016
        %v1229 = vmul.f32 %v1018, %v1020
        %v1230 = vmul.f32 %v1024, %v1026
        %v1231 = vmul.f32 %v1028, %v1030
        %v1232 = vmul.f32 %v1034, %v1036
        %v1233 = vmul.f32 %v1038, %v1040
        %v1234 = vadd.f32 %v1162, %v1186
        %v1235 = vadd.f32 %v1234, %v1210
        %v1236 = vadd.f32 %v1163, %v1187
        %v1237 = vadd.f32 %v1236, %v1211
        %v1238 = vadd.f32 %v1164, %v1188
        %v1239 = vadd.f32 %v1238, %v1212
        %v1240 = vadd.f32 %v1165, %v1189
        %v1241 = vadd.f32 %v1240, %v1213
        %v1242 = vadd.f32 %v1166, %v1190
        %v1243 = vadd.f32 %v1242, %v1214
        %v1244 = vadd.f32 %v1167, %v1191
        %v1245 = vadd.f32 %v1244, %v1215
        %v1246 = vadd.f32 %v1168, %v1192
        %v1247 = vadd.f32 %v1246, %v1216
        %v1248 = vadd.f32 %v1169, %v1193
        %v1249 = vadd.f32 %v1248, %v1217
        %v1250 = vadd.f32 %v1170, %v1194
        %v1251 = vadd.f32 %v1250, %v1218
        %v1252 = vadd.f32 %v1171, %v1195
        %v1253 = vadd.f32 %v1252, %v1219
        %v1254 = vadd.f32 %v1172, %v1196
        %v1255 = vadd.f32 %v1254, %v1220
        %v1256 = vadd.f32 %v1173, %v1197
        %v1257 = vadd.f32 %v1256, %v1221
        %v1258 = vadd.f32 %v1174, %v1198
        %v1259 = vadd.f32 %v1258, %v1222
        %v1260 = vadd.f32 %v1175, %v1199
        %v1261 = vadd.f32 %v1260, %v1223
        %v1262 = vadd.f32 %v1176, %v1200
        %v1263 = vadd.f32 %v1262, %v1224
        %v1264 = vadd.f32 %v1177, %v1201
        %v1265 = vadd.f32 %v1264, %v1225
        %v1266 = vadd.f32 %v1178, %v1202
        %v1267 = vadd.f32 %v1266, %v1226
        %v1268 = vadd.f32 %v1179, %v1203
        %v1269 = vadd.f32 %v1268, %v1227
        %v1270 = vadd.f32 %v1180, %v1204
        %v1271 = vadd.f32 %v1270, %v1228
        %v1272 = vadd.f32 %v1181, %v1205
        %v1273 = vadd.f32 %v1272, %v1229
        %v1274 = vadd.f32 %v1182, %v1206
        %v1275 = vadd.f32 %v1274, %v1230
        %v1276 = vadd.f32 %v1183, %v1207
        %v1277 = vadd.f32 %v1276, %v1231
        %v1278 = vadd.f32 %v1184, %v1208
        %v1279 = vadd.f32 %v1278, %v1232
        %v1280 = vadd.f32 %v1185, %v1209
        %v1281 = vadd.f32 %v1280, %v1233
        %v1282 = vadd.f32 %v1115, 1e-08
        %v1283 = vadd.f32 %v1117, 1e-08
        %v1284 = vadd.f32 %v1119, 1e-08
        %v1285 = vadd.f32 %v1121, 1e-08
        %v1286 = vadd.f32 %v1123, 1e-08
        %v1287 = vadd.f32 %v1125, 1e-08
        %v1288 = vadd.f32 %v1127, 1e-08
        %v1289 = vadd.f32 %v1129, 1e-08
        %v1290 = vadd.f32 %v1131, 1e-08
        %v1291 = vadd.f32 %v1133, 1e-08
        %v1292 = vadd.f32 %v1135, 1e-08
        %v1293 = vadd.f32 %v1137, 1e-08
        %v1294 = vadd.f32 %v1139, 1e-08
        %v1295 = vadd.f32 %v1141, 1e-08
        %v1296 = vadd.f32 %v1143, 1e-08
        %v1297 = vadd.f32 %v1145, 1e-08
        %v1298 = vadd.f32 %v1147, 1e-08
        %v1299 = vadd.f32 %v1149, 1e-08
        %v1300 = vadd.f32 %v1151, 1e-08
        %v1301 = vadd.f32 %v1153, 1e-08
        %v1302 = vadd.f32 %v1155, 1e-08
        %v1303 = vadd.f32 %v1157, 1e-08
        %v1304 = vadd.f32 %v1159, 1e-08
        %v1305 = vadd.f32 %v1161, 1e-08
        %v1306 = vrsqrt.pop %v1282
        %v1307 = vmul.f32 %v1282, %v1306
        %vm1308 = vcmp.eq.f32.partialorder %v1282, inf
        %v1309 = vsel %vm1308, %v1282, %v1307
        %vm1310 = vcmp.eq.f32.partialorder %v1282, 0.0
        %v1311 = vand.u32 %v1282, 2147483648
        %v1312 = vsel %vm1310, %v1311, %v1309
        %v1313 = vrsqrt.pop %v1283
        %v1314 = vmul.f32 %v1283, %v1313
        %vm1315 = vcmp.eq.f32.partialorder %v1283, inf
        %v1316 = vsel %vm1315, %v1283, %v1314
        %vm1317 = vcmp.eq.f32.partialorder %v1283, 0.0
        %v1318 = vand.u32 %v1283, 2147483648
        %v1319 = vsel %vm1317, %v1318, %v1316
        %v1320 = vrsqrt.pop %v1284
        %v1321 = vmul.f32 %v1284, %v1320
        %vm1322 = vcmp.eq.f32.partialorder %v1284, inf
        %v1323 = vsel %vm1322, %v1284, %v1321
        %vm1324 = vcmp.eq.f32.partialorder %v1284, 0.0
        %v1325 = vand.u32 %v1284, 2147483648
        %v1326 = vsel %vm1324, %v1325, %v1323
        %v1327 = vrsqrt.pop %v1285
        %v1328 = vmul.f32 %v1285, %v1327
        %vm1329 = vcmp.eq.f32.partialorder %v1285, inf
        %v1330 = vsel %vm1329, %v1285, %v1328
        %vm1331 = vcmp.eq.f32.partialorder %v1285, 0.0
        %v1332 = vand.u32 %v1285, 2147483648
        %v1333 = vsel %vm1331, %v1332, %v1330
        %v1334 = vrsqrt.pop %v1286
        %v1335 = vmul.f32 %v1286, %v1334
        %vm1336 = vcmp.eq.f32.partialorder %v1286, inf
        %v1337 = vsel %vm1336, %v1286, %v1335
        %vm1338 = vcmp.eq.f32.partialorder %v1286, 0.0
        %v1339 = vand.u32 %v1286, 2147483648
        %v1340 = vsel %vm1338, %v1339, %v1337
        %v1341 = vrsqrt.pop %v1287
        %v1342 = vmul.f32 %v1287, %v1341
        %vm1343 = vcmp.eq.f32.partialorder %v1287, inf
        %v1344 = vsel %vm1343, %v1287, %v1342
        %vm1345 = vcmp.eq.f32.partialorder %v1287, 0.0
        %v1346 = vand.u32 %v1287, 2147483648
        %v1347 = vsel %vm1345, %v1346, %v1344
        %v1348 = vrsqrt.pop %v1288
        %v1349 = vmul.f32 %v1288, %v1348
        %vm1350 = vcmp.eq.f32.partialorder %v1288, inf
        %v1351 = vsel %vm1350, %v1288, %v1349
        %vm1352 = vcmp.eq.f32.partialorder %v1288, 0.0
        %v1353 = vand.u32 %v1288, 2147483648
        %v1354 = vsel %vm1352, %v1353, %v1351
        %v1355 = vrsqrt.pop %v1289
        %v1356 = vmul.f32 %v1289, %v1355
        %vm1357 = vcmp.eq.f32.partialorder %v1289, inf
        %v1358 = vsel %vm1357, %v1289, %v1356
        %vm1359 = vcmp.eq.f32.partialorder %v1289, 0.0
        %v1360 = vand.u32 %v1289, 2147483648
        %v1361 = vsel %vm1359, %v1360, %v1358
        %v1362 = vrsqrt.pop %v1290
        %v1363 = vmul.f32 %v1290, %v1362
        %vm1364 = vcmp.eq.f32.partialorder %v1290, inf
        %v1365 = vsel %vm1364, %v1290, %v1363
        %vm1366 = vcmp.eq.f32.partialorder %v1290, 0.0
        %v1367 = vand.u32 %v1290, 2147483648
        %v1368 = vsel %vm1366, %v1367, %v1365
        %v1369 = vrsqrt.pop %v1291
        %v1370 = vmul.f32 %v1291, %v1369
        %vm1371 = vcmp.eq.f32.partialorder %v1291, inf
        %v1372 = vsel %vm1371, %v1291, %v1370
        %vm1373 = vcmp.eq.f32.partialorder %v1291, 0.0
        %v1374 = vand.u32 %v1291, 2147483648
        %v1375 = vsel %vm1373, %v1374, %v1372
        %v1376 = vrsqrt.pop %v1292
        %v1377 = vmul.f32 %v1292, %v1376
        %vm1378 = vcmp.eq.f32.partialorder %v1292, inf
        %v1379 = vsel %vm1378, %v1292, %v1377
        %vm1380 = vcmp.eq.f32.partialorder %v1292, 0.0
        %v1381 = vand.u32 %v1292, 2147483648
        %v1382 = vsel %vm1380, %v1381, %v1379
        %v1383 = vrsqrt.pop %v1293
        %v1384 = vmul.f32 %v1293, %v1383
        %vm1385 = vcmp.eq.f32.partialorder %v1293, inf
        %v1386 = vsel %vm1385, %v1293, %v1384
        %vm1387 = vcmp.eq.f32.partialorder %v1293, 0.0
        %v1388 = vand.u32 %v1293, 2147483648
        %v1389 = vsel %vm1387, %v1388, %v1386
        %v1390 = vrsqrt.pop %v1294
        %v1391 = vmul.f32 %v1294, %v1390
        %vm1392 = vcmp.eq.f32.partialorder %v1294, inf
        %v1393 = vsel %vm1392, %v1294, %v1391
        %vm1394 = vcmp.eq.f32.partialorder %v1294, 0.0
        %v1395 = vand.u32 %v1294, 2147483648
        %v1396 = vsel %vm1394, %v1395, %v1393
        %v1397 = vrsqrt.pop %v1295
        %v1398 = vmul.f32 %v1295, %v1397
        %vm1399 = vcmp.eq.f32.partialorder %v1295, inf
        %v1400 = vsel %vm1399, %v1295, %v1398
        %vm1401 = vcmp.eq.f32.partialorder %v1295, 0.0
        %v1402 = vand.u32 %v1295, 2147483648
        %v1403 = vsel %vm1401, %v1402, %v1400
        %v1404 = vrsqrt.pop %v1296
        %v1405 = vmul.f32 %v1296, %v1404
        %vm1406 = vcmp.eq.f32.partialorder %v1296, inf
        %v1407 = vsel %vm1406, %v1296, %v1405
        %vm1408 = vcmp.eq.f32.partialorder %v1296, 0.0
        %v1409 = vand.u32 %v1296, 2147483648
        %v1410 = vsel %vm1408, %v1409, %v1407
        %v1411 = vrsqrt.pop %v1297
        %v1412 = vmul.f32 %v1297, %v1411
        %vm1413 = vcmp.eq.f32.partialorder %v1297, inf
        %v1414 = vsel %vm1413, %v1297, %v1412
        %vm1415 = vcmp.eq.f32.partialorder %v1297, 0.0
        %v1416 = vand.u32 %v1297, 2147483648
        %v1417 = vsel %vm1415, %v1416, %v1414
        %v1418 = vrsqrt.pop %v1298
        %v1419 = vmul.f32 %v1298, %v1418
        %vm1420 = vcmp.eq.f32.partialorder %v1298, inf
        %v1421 = vsel %vm1420, %v1298, %v1419
        %vm1422 = vcmp.eq.f32.partialorder %v1298, 0.0
        %v1423 = vand.u32 %v1298, 2147483648
        %v1424 = vsel %vm1422, %v1423, %v1421
        %v1425 = vrsqrt.pop %v1299
        %v1426 = vmul.f32 %v1299, %v1425
        %vm1427 = vcmp.eq.f32.partialorder %v1299, inf
        %v1428 = vsel %vm1427, %v1299, %v1426
        %vm1429 = vcmp.eq.f32.partialorder %v1299, 0.0
        %v1430 = vand.u32 %v1299, 2147483648
        %v1431 = vsel %vm1429, %v1430, %v1428
        %v1432 = vrsqrt.pop %v1300
        %v1433 = vmul.f32 %v1300, %v1432
        %vm1434 = vcmp.eq.f32.partialorder %v1300, inf
        %v1435 = vsel %vm1434, %v1300, %v1433
        %vm1436 = vcmp.eq.f32.partialorder %v1300, 0.0
        %v1437 = vand.u32 %v1300, 2147483648
        %v1438 = vsel %vm1436, %v1437, %v1435
        %v1439 = vrsqrt.pop %v1301
        %v1440 = vmul.f32 %v1301, %v1439
        %vm1441 = vcmp.eq.f32.partialorder %v1301, inf
        %v1442 = vsel %vm1441, %v1301, %v1440
        %vm1443 = vcmp.eq.f32.partialorder %v1301, 0.0
        %v1444 = vand.u32 %v1301, 2147483648
        %v1445 = vsel %vm1443, %v1444, %v1442
        %v1446 = vrsqrt.pop %v1302
        %v1447 = vmul.f32 %v1302, %v1446
        %vm1448 = vcmp.eq.f32.partialorder %v1302, inf
        %v1449 = vsel %vm1448, %v1302, %v1447
        %vm1450 = vcmp.eq.f32.partialorder %v1302, 0.0
        %v1451 = vand.u32 %v1302, 2147483648
        %v1452 = vsel %vm1450, %v1451, %v1449
        %v1453 = vrsqrt.pop %v1303
        %v1454 = vmul.f32 %v1303, %v1453
        %vm1455 = vcmp.eq.f32.partialorder %v1303, inf
        %v1456 = vsel %vm1455, %v1303, %v1454
        %vm1457 = vcmp.eq.f32.partialorder %v1303, 0.0
        %v1458 = vand.u32 %v1303, 2147483648
        %v1459 = vsel %vm1457, %v1458, %v1456
        %v1460 = vrsqrt.pop %v1304
        %v1461 = vmul.f32 %v1304, %v1460
        %vm1462 = vcmp.eq.f32.partialorder %v1304, inf
        %v1463 = vsel %vm1462, %v1304, %v1461
        %vm1464 = vcmp.eq.f32.partialorder %v1304, 0.0
        %v1465 = vand.u32 %v1304, 2147483648
        %v1466 = vsel %vm1464, %v1465, %v1463
        %v1467 = vrsqrt.pop %v1305
        %v1468 = vmul.f32 %v1305, %v1467
        %vm1469 = vcmp.eq.f32.partialorder %v1305, inf
        %v1470 = vsel %vm1469, %v1305, %v1468
        %vm1471 = vcmp.eq.f32.partialorder %v1305, 0.0
        %v1472 = vand.u32 %v1305, 2147483648
        %v1473 = vsel %vm1471, %v1472, %v1470
        %v1474 = vld [vmem:[%s5] sm:$0x1]
        %v1475 = vld [vmem:[%s5 + $0x1] sm:$0x1]
        %v1476 = vld [vmem:[%s5 + $0x2] sm:$0x1]
        %v1477 = vld [vmem:[%s5 + $0x3] sm:$0x1]
        %v1478 = vld [vmem:[%s5 + $0x4] sm:$0x1]
        %v1479 = vld [vmem:[%s5 + $0x5] sm:$0x1]
        %v1480 = vpack.c.bf16 %v422, %v421
        %v1481 = vpack.c.bf16 %v424, %v423
        %v1482 = vpack.c.bf16 %v426, %v425
        %v1483 = vpack.c.bf16 %v428, %v427
        %v1484 = vpack.c.bf16 %v430, %v429
        %v1485 = vpack.c.bf16 %v432, %v431
        %v1486 = vpack.c.bf16 %v434, %v433
        %v1487 = vpack.c.bf16 %v436, %v435
        %v1488 = vpack.c.bf16 %v438, %v437
        %v1489 = vpack.c.bf16 %v440, %v439
        %v1490 = vpack.c.bf16 %v442, %v441
        %v1491 = vpack.c.bf16 %v444, %v443
        %v1492 = vpack.c.bf16 %v1319, %v1312
        %v1493 = vpack.c.bf16 %v1333, %v1326
        %v1494 = vpack.c.bf16 %v1347, %v1340
        %v1495 = vpack.c.bf16 %v1361, %v1354
        %v1496 = vpack.c.bf16 %v1375, %v1368
        %v1497 = vpack.c.bf16 %v1389, %v1382
        %v1498 = vpack.c.bf16 %v1403, %v1396
        %v1499 = vpack.c.bf16 %v1417, %v1410
        %v1500 = vpack.c.bf16 %v1431, %v1424
        %v1501 = vpack.c.bf16 %v1445, %v1438
        %v1502 = vpack.c.bf16 %v1459, %v1452
        %v1503 = vpack.c.bf16 %v1473, %v1466
        %v1504 = vld [vmem:[#allocation8] sm:$0xf]
        %v1505 = vld [vmem:[#allocation8 + $0x4] sm:$0xf]
        %v1506 = vld [vmem:[#allocation8 + $0x8] sm:$0xf]
        %v1507 = vld [vmem:[#allocation8 + $0xc] sm:$0xf]
        %v1508 = vld [vmem:[#allocation8 + $0x10] sm:$0xf]
        %v1509 = vld [vmem:[#allocation8 + $0x14] sm:$0xf]
        %v1510 = vld [vmem:[#allocation8 + $0x18] sm:$0xf]
        %v1511 = vld [vmem:[#allocation8 + $0x1c] sm:$0xf]
        %v1512 = vld [vmem:[#allocation8 + $0x20] sm:$0xf]
        %v1513 = vld [vmem:[#allocation8 + $0x24] sm:$0xf]
        %v1514 = vld [vmem:[#allocation8 + $0x28] sm:$0xf]
        %v1515 = vld [vmem:[#allocation8 + $0x2c] sm:$0xf]
        %v1516 = vld [vmem:[#allocation8 + $0x30] sm:$0xf]
        %v1517 = vld [vmem:[#allocation8 + $0x34] sm:$0xf]
        %v1518 = vld [vmem:[#allocation8 + $0x38] sm:$0xf]
        %v1519 = vld [vmem:[#allocation8 + $0x3c] sm:$0xf]
        %v1520 = vld [vmem:[#allocation8 + $0x40] sm:$0xf]
        %v1521 = vld [vmem:[#allocation8 + $0x44] sm:$0xf]
        %v1522 = vld [vmem:[#allocation8 + $0x48] sm:$0xf]
        %v1523 = vld [vmem:[#allocation8 + $0x4c] sm:$0xf]
        %v1524 = vld [vmem:[#allocation8 + $0x50] sm:$0xf]
        %v1525 = vld [vmem:[#allocation8 + $0x54] sm:$0xf]
        %v1526 = vld [vmem:[#allocation8 + $0x58] sm:$0xf]
        %v1527 = vld [vmem:[#allocation8 + $0x5c] sm:$0xf]
        %v1528 = vld [vmem:[#allocation8 + $0x60] sm:$0xf]
        %v1529 = vld [vmem:[#allocation8 + $0x64] sm:$0xf]
        %v1530 = vld [vmem:[#allocation8 + $0x68] sm:$0xf]
        %v1531 = vld [vmem:[#allocation8 + $0x6c] sm:$0xf]
        %v1532 = vld [vmem:[#allocation8 + $0x70] sm:$0xf]
        %v1533 = vld [vmem:[#allocation8 + $0x74] sm:$0xf]
        %v1534 = vld [vmem:[#allocation8 + $0x78] sm:$0xf]
        %v1535 = vld [vmem:[#allocation8 + $0x7c] sm:$0xf]
        %v1536 = vlaneseq
        %v1537 = vshrl.u32 %v1536, 7
        %v1538 = vsub.s32 0, %v1537
        %v1539 = vrot.slane %v1474, %v1538
        %v1572 = vunpack.c.l.b16 %v1504
        %v1573 = vunpack.c.l.b16 %v1505
        %v1574 = vunpack.c.l.b16 %v1506
        %v1575 = vunpack.c.l.b16 %v1507
        %v1576 = vunpack.c.l.b16 %v1508
        %v1577 = vunpack.c.l.b16 %v1509
        %v1578 = vunpack.c.l.b16 %v1510
        %v1579 = vunpack.c.l.b16 %v1511
        %v1580 = vunpack.c.l.b16 %v1512
        %v1581 = vunpack.c.l.b16 %v1513
        %v1582 = vunpack.c.l.b16 %v1514
        %v1583 = vunpack.c.l.b16 %v1515
        %v1584 = vunpack.c.l.b16 %v1516
        %v1585 = vunpack.c.l.b16 %v1517
        %v1586 = vunpack.c.l.b16 %v1518
        %v1587 = vunpack.c.l.b16 %v1519
        %v1588 = vunpack.c.l.b16 %v1520
        %v1589 = vunpack.c.l.b16 %v1521
        %v1590 = vunpack.c.l.b16 %v1522
        %v1591 = vunpack.c.l.b16 %v1523
        %v1592 = vunpack.c.l.b16 %v1524
        %v1593 = vunpack.c.l.b16 %v1525
        %v1594 = vunpack.c.l.b16 %v1526
        %v1595 = vunpack.c.l.b16 %v1527
        %v1596 = vunpack.c.l.b16 %v1528
        %v1597 = vunpack.c.l.b16 %v1529
        %v1598 = vunpack.c.l.b16 %v1530
        %v1599 = vunpack.c.l.b16 %v1531
        %v1600 = vunpack.c.l.b16 %v1532
        %v1601 = vunpack.c.l.b16 %v1533
        %v1602 = vunpack.c.l.b16 %v1534
        %v1603 = vunpack.c.l.b16 %v1535
        %v1604 = vpack.c.b16 %v1573, %v1572
        %v1605 = vpack.c.b16 %v1575, %v1574
        %v1606 = vpack.c.b16 %v1577, %v1576
        %v1607 = vpack.c.b16 %v1579, %v1578
        %v1608 = vpack.c.b16 %v1581, %v1580
        %v1609 = vpack.c.b16 %v1583, %v1582
        %v1610 = vpack.c.b16 %v1585, %v1584
        %v1611 = vpack.c.b16 %v1587, %v1586
        %v1612 = vpack.c.b16 %v1589, %v1588
        %v1613 = vpack.c.b16 %v1591, %v1590
        %v1614 = vpack.c.b16 %v1593, %v1592
        %v1615 = vpack.c.b16 %v1595, %v1594
        %v1616 = vpack.c.b16 %v1597, %v1596
        %v1617 = vpack.c.b16 %v1599, %v1598
        %v1618 = vpack.c.b16 %v1601, %v1600
        %v1619 = vpack.c.b16 %v1603, %v1602
        %1636 = vmatprep.subr.bf16.mxu0 0
        %1637 = vmatpush1.bf16.msra.mxu0 %v1604
        %1638 = vmatprep.subr.bf16.mxu0 0
        %1639 = vmatpush1.bf16.msra.mxu0 %v1605
        %1640 = vmatprep.subr.bf16.mxu0 0
        %1641 = vmatpush1.bf16.msra.mxu0 %v1606
        %1642 = vmatprep.subr.bf16.mxu0 0
        %1643 = vmatpush1.bf16.msra.mxu0 %v1607
        %1644 = vmatprep.subr.bf16.mxu0 0
        %1645 = vmatpush1.bf16.msra.mxu0 %v1608
        %1646 = vmatprep.subr.bf16.mxu0 0
        %1647 = vmatpush1.bf16.msra.mxu0 %v1609
        %1648 = vmatprep.subr.bf16.mxu0 0
        %1649 = vmatpush1.bf16.msra.mxu0 %v1610
        %1650 = vmatprep.subr.bf16.mxu0 0
        %1651 = vmatpush1.bf16.msra.mxu0 %v1611
        %1652 = vmatprep.subr.bf16.mxu0 0
        %1653 = vmatpush1.bf16.msra.mxu0 %v1612
        %1654 = vmatprep.subr.bf16.mxu0 0
        %1655 = vmatpush1.bf16.msra.mxu0 %v1613
        %1656 = vmatprep.subr.bf16.mxu0 0
        %1657 = vmatpush1.bf16.msra.mxu0 %v1614
        %1658 = vmatprep.subr.bf16.mxu0 0
        %1659 = vmatpush1.bf16.msra.mxu0 %v1615
        %1660 = vmatprep.subr.bf16.mxu0 0
        %1661 = vmatpush1.bf16.msra.mxu0 %v1616
        %1662 = vmatprep.subr.bf16.mxu0 0
        %1663 = vmatpush1.bf16.msra.mxu0 %v1617
        %1664 = vmatprep.subr.bf16.mxu0 0
        %1665 = vmatpush1.bf16.msra.mxu0 %v1618
        %1666 = vmatprep.subr.bf16.mxu0 0
        %1667 = vmatpush1.bf16.msra.mxu0 %v1619
        %1668 = vmatprep.mubr.bf16.mxu0 %v1492
        %1669 = vmatmul.mubr.bf16.gmra.mrb[0].mxu0 %v1480
        %v1670 = vpop.f32.mrb[0].mxu0
        %v1671 = vadd.f32 %v1539, %v1670
        %v1672 = vpop.f32.mrb[0].mxu0
        %v1673 = vpop.f32.mrb[0].mxu0
        %v1674 = vadd.f32 %v1539, %v1673
        %v1675 = vpop.f32.mrb[0].mxu0
        %1676 = vmatprep.mubr.bf16.mxu0 %v1493
        %1677 = vmatmul.mubr.bf16.gmra.mrb[0].mxu0 %v1481
        %v1678 = vpop.f32.mrb[0].mxu0
        %v1679 = vadd.f32 %v1539, %v1678
        %v1680 = vpop.f32.mrb[0].mxu0
        %v1681 = vpop.f32.mrb[0].mxu0
        %v1682 = vadd.f32 %v1539, %v1681
        %v1683 = vpop.f32.mrb[0].mxu0
        %1684 = vmatprep.mubr.bf16.mxu0 %v1494
        %1685 = vmatmul.mubr.bf16.gmra.mrb[0].mxu0 %v1482
        %v1686 = vpop.f32.mrb[0].mxu0
        %v1687 = vadd.f32 %v1539, %v1686
        %v1688 = vpop.f32.mrb[0].mxu0
        %v1689 = vpop.f32.mrb[0].mxu0
        %v1690 = vadd.f32 %v1539, %v1689
        %v1691 = vpop.f32.mrb[0].mxu0
        %1692 = vmatprep.mubr.bf16.mxu0 %v1495
        %1693 = vmatmul.mubr.bf16.gmra.mrb[0].mxu0 %v1483
        %v1694 = vpop.f32.mrb[0].mxu0
        %v1695 = vadd.f32 %v1539, %v1694
        %v1696 = vpop.f32.mrb[0].mxu0
        %v1697 = vpop.f32.mrb[0].mxu0
        %v1698 = vadd.f32 %v1539, %v1697
        %v1699 = vpop.f32.mrb[0].mxu0
        %1700 = vmatprep.mubr.bf16.mxu0 %v1496
        %1701 = vmatmul.mubr.bf16.gmra.mrb[0].mxu0 %v1484
        %v1702 = vpop.f32.mrb[0].mxu0
        %v1703 = vadd.f32 %v1539, %v1702
        %v1704 = vpop.f32.mrb[0].mxu0
        %v1705 = vpop.f32.mrb[0].mxu0
        %v1706 = vadd.f32 %v1539, %v1705
        %v1707 = vpop.f32.mrb[0].mxu0
        %1708 = vmatprep.mubr.bf16.mxu0 %v1497
        %1709 = vmatmul.mubr.bf16.gmra.mrb[0].mxu0 %v1485
        %v1710 = vpop.f32.mrb[0].mxu0
        %v1711 = vadd.f32 %v1539, %v1710
        %v1712 = vpop.f32.mrb[0].mxu0
        %v1713 = vpop.f32.mrb[0].mxu0
        %v1714 = vadd.f32 %v1539, %v1713
        %v1715 = vpop.f32.mrb[0].mxu0
        %1716 = vmatprep.mubr.bf16.mxu0 %v1498
        %1717 = vmatmul.mubr.bf16.gmra.mrb[0].mxu0 %v1486
        %v1718 = vpop.f32.mrb[0].mxu0
        %v1719 = vadd.f32 %v1539, %v1718
        %v1720 = vpop.f32.mrb[0].mxu0
        %v1721 = vpop.f32.mrb[0].mxu0
        %v1722 = vadd.f32 %v1539, %v1721
        %v1723 = vpop.f32.mrb[0].mxu0
        %1724 = vmatprep.mubr.bf16.mxu0 %v1499
        %1725 = vmatmul.mubr.bf16.gmra.mrb[0].mxu0 %v1487
        %v1726 = vpop.f32.mrb[0].mxu0
        %v1727 = vadd.f32 %v1539, %v1726
        %v1728 = vpop.f32.mrb[0].mxu0
        %v1729 = vpop.f32.mrb[0].mxu0
        %v1730 = vadd.f32 %v1539, %v1729
        %v1731 = vpop.f32.mrb[0].mxu0
        %1732 = vmatprep.mubr.bf16.mxu0 %v1500
        %1733 = vmatmul.mubr.bf16.gmra.mrb[0].mxu0 %v1488
        %v1734 = vpop.f32.mrb[0].mxu0
        %v1735 = vadd.f32 %v1539, %v1734
        %v1736 = vpop.f32.mrb[0].mxu0
        %v1737 = vpop.f32.mrb[0].mxu0
        %v1738 = vadd.f32 %v1539, %v1737
        %v1739 = vpop.f32.mrb[0].mxu0
        %1740 = vmatprep.mubr.bf16.mxu0 %v1501
        %1741 = vmatmul.mubr.bf16.gmra.mrb[0].mxu0 %v1489
        %v1742 = vpop.f32.mrb[0].mxu0
        %v1743 = vadd.f32 %v1539, %v1742
        %v1744 = vpop.f32.mrb[0].mxu0
        %v1745 = vpop.f32.mrb[0].mxu0
        %v1746 = vadd.f32 %v1539, %v1745
        %v1747 = vpop.f32.mrb[0].mxu0
        %1748 = vmatprep.mubr.bf16.mxu0 %v1502
        %1749 = vmatmul.mubr.bf16.gmra.mrb[0].mxu0 %v1490
        %v1750 = vpop.f32.mrb[0].mxu0
        %v1751 = vadd.f32 %v1539, %v1750
        %v1752 = vpop.f32.mrb[0].mxu0
        %v1753 = vpop.f32.mrb[0].mxu0
        %v1754 = vadd.f32 %v1539, %v1753
        %v1755 = vpop.f32.mrb[0].mxu0
        %1756 = vmatprep.mubr.bf16.mxu0 %v1503
        %1757 = vmatmul.mubr.bf16.gmra.mrb[0].mxu0 %v1491
        %v1758 = vpop.f32.mrb[0].mxu0
        %v1759 = vadd.f32 %v1539, %v1758
        %v1760 = vpop.f32.mrb[0].mxu0
        %v1761 = vpop.f32.mrb[0].mxu0
        %v1762 = vadd.f32 %v1539, %v1761
        %v1763 = vpop.f32.mrb[0].mxu0
        %1764 = vdwg.mxu0
        %v1765 = vxor.u32 %v1671, 2147483648
        %v1766 = vxor.u32 %v1674, 2147483648
        %v1767 = vxor.u32 %v1679, 2147483648
        %v1768 = vxor.u32 %v1682, 2147483648
        %v1769 = vxor.u32 %v1687, 2147483648
        %v1770 = vxor.u32 %v1690, 2147483648
        %v1771 = vxor.u32 %v1695, 2147483648
        %v1772 = vxor.u32 %v1698, 2147483648
        %v1773 = vxor.u32 %v1703, 2147483648
        %v1774 = vxor.u32 %v1706, 2147483648
        %v1775 = vxor.u32 %v1711, 2147483648
        %v1776 = vxor.u32 %v1714, 2147483648
        %v1777 = vxor.u32 %v1719, 2147483648
        %v1778 = vxor.u32 %v1722, 2147483648
        %v1779 = vxor.u32 %v1727, 2147483648
        %v1780 = vxor.u32 %v1730, 2147483648
        %v1781 = vxor.u32 %v1735, 2147483648
        %v1782 = vxor.u32 %v1738, 2147483648
        %v1783 = vxor.u32 %v1743, 2147483648
        %v1784 = vxor.u32 %v1746, 2147483648
        %v1785 = vxor.u32 %v1751, 2147483648
        %v1786 = vxor.u32 %v1754, 2147483648
        %v1787 = vxor.u32 %v1759, 2147483648
        %v1788 = vxor.u32 %v1762, 2147483648
        %v1789 = vmul.f32 %v1765, 1.442695
        %v1790 = vpow.pop %v1789
        %v1791 = vmul.f32 %v1766, 1.442695
        %v1792 = vpow.pop %v1791
        %v1793 = vmul.f32 %v1767, 1.442695
        %v1794 = vpow.pop %v1793
        %v1795 = vmul.f32 %v1768, 1.442695
        %v1796 = vpow.pop %v1795
        %v1797 = vmul.f32 %v1769, 1.442695
        %v1798 = vpow.pop %v1797
        %v1799 = vmul.f32 %v1770, 1.442695
        %v1800 = vpow.pop %v1799
        %v1801 = vmul.f32 %v1771, 1.442695
        %v1802 = vpow.pop %v1801
        %v1803 = vmul.f32 %v1772, 1.442695
        %v1804 = vpow.pop %v1803
        %v1805 = vmul.f32 %v1773, 1.442695
        %v1806 = vpow.pop %v1805
        %v1807 = vmul.f32 %v1774, 1.442695
        %v1808 = vpow.pop %v1807
        %v1809 = vmul.f32 %v1775, 1.442695
        %v1810 = vpow.pop %v1809
        %v1811 = vmul.f32 %v1776, 1.442695
        %v1812 = vpow.pop %v1811
        %v1813 = vmul.f32 %v1777, 1.442695
        %v1814 = vpow.pop %v1813
        %v1815 = vmul.f32 %v1778, 1.442695
        %v1816 = vpow.pop %v1815
        %v1817 = vmul.f32 %v1779, 1.442695
        %v1818 = vpow.pop %v1817
        %v1819 = vmul.f32 %v1780, 1.442695
        %v1820 = vpow.pop %v1819
        %v1821 = vmul.f32 %v1781, 1.442695
        %v1822 = vpow.pop %v1821
        %v1823 = vmul.f32 %v1782, 1.442695
        %v1824 = vpow.pop %v1823
        %v1825 = vmul.f32 %v1783, 1.442695
        %v1826 = vpow.pop %v1825
        %v1827 = vmul.f32 %v1784, 1.442695
        %v1828 = vpow.pop %v1827
        %v1829 = vmul.f32 %v1785, 1.442695
        %v1830 = vpow.pop %v1829
        %v1831 = vmul.f32 %v1786, 1.442695
        %v1832 = vpow.pop %v1831
        %v1833 = vmul.f32 %v1787, 1.442695
        %v1834 = vpow.pop %v1833
        %v1835 = vmul.f32 %v1788, 1.442695
        %v1836 = vpow.pop %v1835
        %v1837 = vadd.f32 %v1790, 1.0
        %v1838 = vadd.f32 %v1792, 1.0
        %v1839 = vadd.f32 %v1794, 1.0
        %v1840 = vadd.f32 %v1796, 1.0
        %v1841 = vadd.f32 %v1798, 1.0
        %v1842 = vadd.f32 %v1800, 1.0
        %v1843 = vadd.f32 %v1802, 1.0
        %v1844 = vadd.f32 %v1804, 1.0
        %v1845 = vadd.f32 %v1806, 1.0
        %v1846 = vadd.f32 %v1808, 1.0
        %v1847 = vadd.f32 %v1810, 1.0
        %v1848 = vadd.f32 %v1812, 1.0
        %v1849 = vadd.f32 %v1814, 1.0
        %v1850 = vadd.f32 %v1816, 1.0
        %v1851 = vadd.f32 %v1818, 1.0
        %v1852 = vadd.f32 %v1820, 1.0
        %v1853 = vadd.f32 %v1822, 1.0
        %v1854 = vadd.f32 %v1824, 1.0
        %v1855 = vadd.f32 %v1826, 1.0
        %v1856 = vadd.f32 %v1828, 1.0
        %v1857 = vadd.f32 %v1830, 1.0
        %v1858 = vadd.f32 %v1832, 1.0
        %v1859 = vadd.f32 %v1834, 1.0
        %v1860 = vadd.f32 %v1836, 1.0
        %v1861 = vrcp.pop %v1837
        %v1862 = vmul.f32 1.0, %v1861
        %v1863 = vrcp.pop %v1838
        %v1864 = vmul.f32 1.0, %v1863
        %v1865 = vrcp.pop %v1839
        %v1866 = vmul.f32 1.0, %v1865
        %v1867 = vrcp.pop %v1840
        %v1868 = vmul.f32 1.0, %v1867
        %v1869 = vrcp.pop %v1841
        %v1870 = vmul.f32 1.0, %v1869
        %v1871 = vrcp.pop %v1842
        %v1872 = vmul.f32 1.0, %v1871
        %v1873 = vrcp.pop %v1843
        %v1874 = vmul.f32 1.0, %v1873
        %v1875 = vrcp.pop %v1844
        %v1876 = vmul.f32 1.0, %v1875
        %v1877 = vrcp.pop %v1845
        %v1878 = vmul.f32 1.0, %v1877
        %v1879 = vrcp.pop %v1846
        %v1880 = vmul.f32 1.0, %v1879
        %v1881 = vrcp.pop %v1847
        %v1882 = vmul.f32 1.0, %v1881
        %v1883 = vrcp.pop %v1848
        %v1884 = vmul.f32 1.0, %v1883
        %v1885 = vrcp.pop %v1849
        %v1886 = vmul.f32 1.0, %v1885
        %v1887 = vrcp.pop %v1850
        %v1888 = vmul.f32 1.0, %v1887
        %v1889 = vrcp.pop %v1851
        %v1890 = vmul.f32 1.0, %v1889
        %v1891 = vrcp.pop %v1852
        %v1892 = vmul.f32 1.0, %v1891
        %v1893 = vrcp.pop %v1853
        %v1894 = vmul.f32 1.0, %v1893
        %v1895 = vrcp.pop %v1854
        %v1896 = vmul.f32 1.0, %v1895
        %v1897 = vrcp.pop %v1855
        %v1898 = vmul.f32 1.0, %v1897
        %v1899 = vrcp.pop %v1856
        %v1900 = vmul.f32 1.0, %v1899
        %v1901 = vrcp.pop %v1857
        %v1902 = vmul.f32 1.0, %v1901
        %v1903 = vrcp.pop %v1858
        %v1904 = vmul.f32 1.0, %v1903
        %v1905 = vrcp.pop %v1859
        %v1906 = vmul.f32 1.0, %v1905
        %v1907 = vrcp.pop %v1860
        %v1908 = vmul.f32 1.0, %v1907
        %v1909 = vmul.f32 %v1671, %v1862
        %v1910 = vmul.f32 %v1674, %v1864
        %v1911 = vmul.f32 %v1679, %v1866
        %v1912 = vmul.f32 %v1682, %v1868
        %v1913 = vmul.f32 %v1687, %v1870
        %v1914 = vmul.f32 %v1690, %v1872
        %v1915 = vmul.f32 %v1695, %v1874
        %v1916 = vmul.f32 %v1698, %v1876
        %v1917 = vmul.f32 %v1703, %v1878
        %v1918 = vmul.f32 %v1706, %v1880
        %v1919 = vmul.f32 %v1711, %v1882
        %v1920 = vmul.f32 %v1714, %v1884
        %v1921 = vmul.f32 %v1719, %v1886
        %v1922 = vmul.f32 %v1722, %v1888
        %v1923 = vmul.f32 %v1727, %v1890
        %v1924 = vmul.f32 %v1730, %v1892
        %v1925 = vmul.f32 %v1735, %v1894
        %v1926 = vmul.f32 %v1738, %v1896
        %v1927 = vmul.f32 %v1743, %v1898
        %v1928 = vmul.f32 %v1746, %v1900
        %v1929 = vmul.f32 %v1751, %v1902
        %v1930 = vmul.f32 %v1754, %v1904
        %v1931 = vmul.f32 %v1759, %v1906
        %v1932 = vmul.f32 %v1762, %v1908
        %v1933 = vpack.c.bf16 %v1910, %v1909
        %v1934 = vpack.c.bf16 %v1912, %v1911
        %v1935 = vpack.c.bf16 %v1914, %v1913
        %v1936 = vpack.c.bf16 %v1916, %v1915
        %v1937 = vpack.c.bf16 %v1918, %v1917
        %v1938 = vpack.c.bf16 %v1920, %v1919
        %v1939 = vpack.c.bf16 %v1922, %v1921
        %v1940 = vpack.c.bf16 %v1924, %v1923
        %v1941 = vpack.c.bf16 %v1926, %v1925
        %v1942 = vpack.c.bf16 %v1928, %v1927
        %v1943 = vpack.c.bf16 %v1930, %v1929
        %v1944 = vpack.c.bf16 %v1932, %v1931
        %v1945 = vld [vmem:[#allocation10] sm:$0xff]
        %v1946 = vld [vmem:[#allocation10 + $0x8] sm:$0xf]
        %v1947 = vld [vmem:[#allocation10 + $0xc] sm:$0xff]
        %v1948 = vld [vmem:[#allocation10 + $0x14] sm:$0xf]
        %v1949 = vld [vmem:[#allocation10 + $0x18] sm:$0xff]
        %v1950 = vld [vmem:[#allocation10 + $0x20] sm:$0xf]
        %v1951 = vld [vmem:[#allocation10 + $0x24] sm:$0xff]
        %v1952 = vld [vmem:[#allocation10 + $0x2c] sm:$0xf]
        %v1953 = vld [vmem:[#allocation10 + $0x30] sm:$0xff]
        %v1954 = vld [vmem:[#allocation10 + $0x38] sm:$0xf]
        %v1955 = vld [vmem:[#allocation10 + $0x3c] sm:$0xff]
        %v1956 = vld [vmem:[#allocation10 + $0x44] sm:$0xf]
        %v1957 = vld [vmem:[#allocation10 + $0x48] sm:$0xff]
        %v1958 = vld [vmem:[#allocation10 + $0x50] sm:$0xf]
        %v1959 = vld [vmem:[#allocation10 + $0x54] sm:$0xff]
        %v1960 = vld [vmem:[#allocation10 + $0x5c] sm:$0xf]
        %v1961 = vld [vmem:[#allocation10 + $0x60] sm:$0xff]
        %v1962 = vld [vmem:[#allocation10 + $0x68] sm:$0xf]
        %v1963 = vld [vmem:[#allocation10 + $0x6c] sm:$0xff]
        %v1964 = vld [vmem:[#allocation10 + $0x74] sm:$0xf]
        %v1965 = vld [vmem:[#allocation10 + $0x78] sm:$0xff]
        %v1966 = vld [vmem:[#allocation10 + $0x80] sm:$0xf]
        %v1967 = vld [vmem:[#allocation10 + $0x84] sm:$0xff]
        %v1968 = vld [vmem:[#allocation10 + $0x8c] sm:$0xf]
        %v1969 = vld [vmem:[#allocation10 + $0x90] sm:$0xff]
        %v1970 = vld [vmem:[#allocation10 + $0x98] sm:$0xf]
        %v1971 = vld [vmem:[#allocation10 + $0x9c] sm:$0xff]
        %v1972 = vld [vmem:[#allocation10 + $0xa4] sm:$0xf]
        %v1973 = vld [vmem:[#allocation10 + $0xa8] sm:$0xff]
        %v1974 = vld [vmem:[#allocation10 + $0xb0] sm:$0xf]
        %v1975 = vld [vmem:[#allocation10 + $0xb4] sm:$0xff]
        %v1976 = vld [vmem:[#allocation10 + $0xbc] sm:$0xf]
        %v2009 = vunpack.c.l.b16 %v1945
        %v2010 = vunpack.c.h.b16 %v1945
        %v2011 = vunpack.c.l.b16 %v1946
        %v2012 = vunpack.c.l.b16 %v1947
        %v2013 = vunpack.c.h.b16 %v1947
        %v2014 = vunpack.c.l.b16 %v1948
        %v2015 = vunpack.c.l.b16 %v1949
        %v2016 = vunpack.c.h.b16 %v1949
        %v2017 = vunpack.c.l.b16 %v1950
        %v2018 = vunpack.c.l.b16 %v1951
        %v2019 = vunpack.c.h.b16 %v1951
        %v2020 = vunpack.c.l.b16 %v1952
        %v2021 = vunpack.c.l.b16 %v1953
        %v2022 = vunpack.c.h.b16 %v1953
        %v2023 = vunpack.c.l.b16 %v1954
        %v2024 = vunpack.c.l.b16 %v1955
        %v2025 = vunpack.c.h.b16 %v1955
        %v2026 = vunpack.c.l.b16 %v1956
        %v2027 = vunpack.c.l.b16 %v1957
        %v2028 = vunpack.c.h.b16 %v1957
        %v2029 = vunpack.c.l.b16 %v1958
        %v2030 = vunpack.c.l.b16 %v1959
        %v2031 = vunpack.c.h.b16 %v1959
        %v2032 = vunpack.c.l.b16 %v1960
        %v2033 = vunpack.c.l.b16 %v1961
        %v2034 = vunpack.c.h.b16 %v1961
        %v2035 = vunpack.c.l.b16 %v1962
        %v2036 = vunpack.c.l.b16 %v1963
        %v2037 = vunpack.c.h.b16 %v1963
        %v2038 = vunpack.c.l.b16 %v1964
        %v2039 = vunpack.c.l.b16 %v1965
        %v2040 = vunpack.c.h.b16 %v1965
        %v2041 = vunpack.c.l.b16 %v1966
        %v2042 = vunpack.c.l.b16 %v1967
        %v2043 = vunpack.c.h.b16 %v1967
        %v2044 = vunpack.c.l.b16 %v1968
        %v2045 = vunpack.c.l.b16 %v1969
        %v2046 = vunpack.c.h.b16 %v1969
        %v2047 = vunpack.c.l.b16 %v1970
        %v2048 = vunpack.c.l.b16 %v1971
        %v2049 = vunpack.c.h.b16 %v1971
        %v2050 = vunpack.c.l.b16 %v1972
        %v2051 = vunpack.c.l.b16 %v1973
        %v2052 = vunpack.c.h.b16 %v1973
        %v2053 = vunpack.c.l.b16 %v1974
        %v2054 = vunpack.c.l.b16 %v1975
        %v2055 = vunpack.c.h.b16 %v1975
        %v2056 = vunpack.c.l.b16 %v1976
        %v2057 = vpack.c.b16 %v2012, %v2009
        %v2058 = vpack.c.b16 %v2013, %v2010
        %v2059 = vpack.c.b16 %v2014, %v2011
        %v2060 = vpack.c.b16 %v2018, %v2015
        %v2061 = vpack.c.b16 %v2019, %v2016
        %v2062 = vpack.c.b16 %v2020, %v2017
        %v2063 = vpack.c.b16 %v2024, %v2021
        %v2064 = vpack.c.b16 %v2025, %v2022
        %v2065 = vpack.c.b16 %v2026, %v2023
        %v2066 = vpack.c.b16 %v2030, %v2027
        %v2067 = vpack.c.b16 %v2031, %v2028
        %v2068 = vpack.c.b16 %v2032, %v2029
        %v2069 = vpack.c.b16 %v2036, %v2033
        %v2070 = vpack.c.b16 %v2037, %v2034
        %v2071 = vpack.c.b16 %v2038, %v2035
        %v2072 = vpack.c.b16 %v2042, %v2039
        %v2073 = vpack.c.b16 %v2043, %v2040
        %v2074 = vpack.c.b16 %v2044, %v2041
        %v2075 = vpack.c.b16 %v2048, %v2045
        %v2076 = vpack.c.b16 %v2049, %v2046
        %v2077 = vpack.c.b16 %v2050, %v2047
        %v2078 = vpack.c.b16 %v2054, %v2051
        %v2079 = vpack.c.b16 %v2055, %v2052
        %v2080 = vpack.c.b16 %v2056, %v2053
        %2105 = vmatprep.subr.bf16.mxu0 %v2058
        %2106 = vmatpush1.bf16.msra.mxu0 %v2057
        %2107 = vmatprep.subr.bf16.mxu0 %v2061
        %2108 = vmatpush1.bf16.msra.mxu0 %v2060
        %2109 = vmatprep.subr.bf16.mxu0 %v2064
        %2110 = vmatpush1.bf16.msra.mxu0 %v2063
        %2111 = vmatprep.subr.bf16.mxu0 %v2067
        %2112 = vmatpush1.bf16.msra.mxu0 %v2066
        %2113 = vmatprep.subr.bf16.mxu0 %v2070
        %2114 = vmatpush1.bf16.msra.mxu0 %v2069
        %2115 = vmatprep.subr.bf16.mxu0 %v2073
        %2116 = vmatpush1.bf16.msra.mxu0 %v2072
        %2117 = vmatprep.subr.bf16.mxu0 %v2076
        %2118 = vmatpush1.bf16.msra.mxu0 %v2075
        %2119 = vmatprep.subr.bf16.mxu0 %v2079
        %2120 = vmatpush1.bf16.msra.mxu0 %v2078
        %2121 = vmatprep.subr.bf16.mxu0 0
        %2122 = vmatpush1.bf16.msra.mxu0 0
        %2123 = vmatprep.subr.bf16.mxu0 0
        %2124 = vmatpush1.bf16.msra.mxu0 0
        %2125 = vmatprep.subr.bf16.mxu0 0
        %2126 = vmatpush1.bf16.msra.mxu0 0
        %2127 = vmatprep.subr.bf16.mxu0 0
        %2128 = vmatpush1.bf16.msra.mxu0 0
        %2129 = vmatprep.subr.bf16.mxu0 0
        %2130 = vmatpush1.bf16.msra.mxu0 0
        %2131 = vmatprep.subr.bf16.mxu0 0
        %2132 = vmatpush1.bf16.msra.mxu0 0
        %2133 = vmatprep.subr.bf16.mxu0 0
        %2134 = vmatpush1.bf16.msra.mxu0 0
        %2135 = vmatprep.subr.bf16.mxu0 0
        %2136 = vmatpush1.bf16.msra.mxu0 0
        %2137 = vmatprep.mubr.bf16.mxu0 0
        %2138 = vmatmul.mubr.bf16.gmra.mrb[0].mxu0 %v1933
        %v2139 = vpop.f32.mrb[0].mxu0
        %v2140 = vadd.f32 0.0, %v2139
        %v2141 = vpop.f32.mrb[0].mxu0
        %v2142 = vadd.f32 0.0, %v2141
        %v2143 = vpop.f32.mrb[0].mxu0
        %v2144 = vadd.f32 0.0, %v2143
        %v2145 = vpop.f32.mrb[0].mxu0
        %v2146 = vadd.f32 0.0, %v2145
        %2147 = vmatprep.mubr.bf16.mxu0 0
        %2148 = vmatmul.mubr.bf16.gmra.mrb[0].mxu0 %v1934
        %v2149 = vpop.f32.mrb[0].mxu0
        %v2150 = vadd.f32 0.0, %v2149
        %v2151 = vpop.f32.mrb[0].mxu0
        %v2152 = vadd.f32 0.0, %v2151
        %v2153 = vpop.f32.mrb[0].mxu0
        %v2154 = vadd.f32 0.0, %v2153
        %v2155 = vpop.f32.mrb[0].mxu0
        %v2156 = vadd.f32 0.0, %v2155
        %2157 = vmatprep.mubr.bf16.mxu0 0
        %2158 = vmatmul.mubr.bf16.gmra.mrb[0].mxu0 %v1935
        %v2159 = vpop.f32.mrb[0].mxu0
        %v2160 = vadd.f32 0.0, %v2159
        %v2161 = vpop.f32.mrb[0].mxu0
        %v2162 = vadd.f32 0.0, %v2161
        %v2163 = vpop.f32.mrb[0].mxu0
        %v2164 = vadd.f32 0.0, %v2163
        %v2165 = vpop.f32.mrb[0].mxu0
        %v2166 = vadd.f32 0.0, %v2165
        %2167 = vmatprep.mubr.bf16.mxu0 0
        %2168 = vmatmul.mubr.bf16.gmra.mrb[0].mxu0 %v1936
        %v2169 = vpop.f32.mrb[0].mxu0
        %v2170 = vadd.f32 0.0, %v2169
        %v2171 = vpop.f32.mrb[0].mxu0
        %v2172 = vadd.f32 0.0, %v2171
        %v2173 = vpop.f32.mrb[0].mxu0
        %v2174 = vadd.f32 0.0, %v2173
        %v2175 = vpop.f32.mrb[0].mxu0
        %v2176 = vadd.f32 0.0, %v2175
        %2177 = vmatprep.mubr.bf16.mxu0 0
        %2178 = vmatmul.mubr.bf16.gmra.mrb[0].mxu0 %v1937
        %v2179 = vpop.f32.mrb[0].mxu0
        %v2180 = vadd.f32 0.0, %v2179
        %v2181 = vpop.f32.mrb[0].mxu0
        %v2182 = vadd.f32 0.0, %v2181
        %v2183 = vpop.f32.mrb[0].mxu0
        %v2184 = vadd.f32 0.0, %v2183
        %v2185 = vpop.f32.mrb[0].mxu0
        %v2186 = vadd.f32 0.0, %v2185
        %2187 = vmatprep.mubr.bf16.mxu0 0
        %2188 = vmatmul.mubr.bf16.gmra.mrb[0].mxu0 %v1938
        %v2189 = vpop.f32.mrb[0].mxu0
        %v2190 = vadd.f32 0.0, %v2189
        %v2191 = vpop.f32.mrb[0].mxu0
        %v2192 = vadd.f32 0.0, %v2191
        %v2193 = vpop.f32.mrb[0].mxu0
        %v2194 = vadd.f32 0.0, %v2193
        %v2195 = vpop.f32.mrb[0].mxu0
        %v2196 = vadd.f32 0.0, %v2195
        %2197 = vmatprep.mubr.bf16.mxu0 0
        %2198 = vmatmul.mubr.bf16.gmra.mrb[0].mxu0 %v1939
        %v2199 = vpop.f32.mrb[0].mxu0
        %v2200 = vadd.f32 0.0, %v2199
        %v2201 = vpop.f32.mrb[0].mxu0
        %v2202 = vadd.f32 0.0, %v2201
        %v2203 = vpop.f32.mrb[0].mxu0
        %v2204 = vadd.f32 0.0, %v2203
        %v2205 = vpop.f32.mrb[0].mxu0
        %v2206 = vadd.f32 0.0, %v2205
        %2207 = vmatprep.mubr.bf16.mxu0 0
        %2208 = vmatmul.mubr.bf16.gmra.mrb[0].mxu0 %v1940
        %v2209 = vpop.f32.mrb[0].mxu0
        %v2210 = vadd.f32 0.0, %v2209
        %v2211 = vpop.f32.mrb[0].mxu0
        %v2212 = vadd.f32 0.0, %v2211
        %v2213 = vpop.f32.mrb[0].mxu0
        %v2214 = vadd.f32 0.0, %v2213
        %v2215 = vpop.f32.mrb[0].mxu0
        %v2216 = vadd.f32 0.0, %v2215
        %2217 = vmatprep.mubr.bf16.mxu0 0
        %2218 = vmatmul.mubr.bf16.gmra.mrb[0].mxu0 %v1941
        %v2219 = vpop.f32.mrb[0].mxu0
        %v2220 = vadd.f32 0.0, %v2219
        %v2221 = vpop.f32.mrb[0].mxu0
        %v2222 = vadd.f32 0.0, %v2221
        %v2223 = vpop.f32.mrb[0].mxu0
        %v2224 = vadd.f32 0.0, %v2223
        %v2225 = vpop.f32.mrb[0].mxu0
        %v2226 = vadd.f32 0.0, %v2225
        %2227 = vmatprep.mubr.bf16.mxu0 0
        %2228 = vmatmul.mubr.bf16.gmra.mrb[0].mxu0 %v1942
        %v2229 = vpop.f32.mrb[0].mxu0
        %v2230 = vadd.f32 0.0, %v2229
        %v2231 = vpop.f32.mrb[0].mxu0
        %v2232 = vadd.f32 0.0, %v2231
        %v2233 = vpop.f32.mrb[0].mxu0
        %v2234 = vadd.f32 0.0, %v2233
        %v2235 = vpop.f32.mrb[0].mxu0
        %v2236 = vadd.f32 0.0, %v2235
        %2237 = vmatprep.mubr.bf16.mxu0 0
        %2238 = vmatmul.mubr.bf16.gmra.mrb[0].mxu0 %v1943
        %v2239 = vpop.f32.mrb[0].mxu0
        %v2240 = vadd.f32 0.0, %v2239
        %v2241 = vpop.f32.mrb[0].mxu0
        %v2242 = vadd.f32 0.0, %v2241
        %v2243 = vpop.f32.mrb[0].mxu0
        %v2244 = vadd.f32 0.0, %v2243
        %v2245 = vpop.f32.mrb[0].mxu0
        %v2246 = vadd.f32 0.0, %v2245
        %2247 = vmatprep.mubr.bf16.mxu0 0
        %2248 = vmatmul.mubr.bf16.gmra.mrb[0].mxu0 %v1944
        %v2249 = vpop.f32.mrb[0].mxu0
        %v2250 = vadd.f32 0.0, %v2249
        %v2251 = vpop.f32.mrb[0].mxu0
        %v2252 = vadd.f32 0.0, %v2251
        %v2253 = vpop.f32.mrb[0].mxu0
        %v2254 = vadd.f32 0.0, %v2253
        %v2255 = vpop.f32.mrb[0].mxu0
        %v2256 = vadd.f32 0.0, %v2255
        %2257 = vdwg.mxu0
        %2258 = vmatprep.subr.bf16.mxu0 0
        %2259 = vmatpush1.bf16.msra.mxu0 %v2059
        %2260 = vmatprep.subr.bf16.mxu0 0
        %2261 = vmatpush1.bf16.msra.mxu0 %v2062
        %2262 = vmatprep.subr.bf16.mxu0 0
        %2263 = vmatpush1.bf16.msra.mxu0 %v2065
        %2264 = vmatprep.subr.bf16.mxu0 0
        %2265 = vmatpush1.bf16.msra.mxu0 %v2068
        %2266 = vmatprep.subr.bf16.mxu0 0
        %2267 = vmatpush1.bf16.msra.mxu0 %v2071
        %2268 = vmatprep.subr.bf16.mxu0 0
        %2269 = vmatpush1.bf16.msra.mxu0 %v2074
        %2270 = vmatprep.subr.bf16.mxu0 0
        %2271 = vmatpush1.bf16.msra.mxu0 %v2077
        %2272 = vmatprep.subr.bf16.mxu0 0
        %2273 = vmatpush1.bf16.msra.mxu0 %v2080
        %2274 = vmatprep.subr.bf16.mxu0 0
        %2275 = vmatpush1.bf16.msra.mxu0 0
        %2276 = vmatprep.subr.bf16.mxu0 0
        %2277 = vmatpush1.bf16.msra.mxu0 0
        %2278 = vmatprep.subr.bf16.mxu0 0
        %2279 = vmatpush1.bf16.msra.mxu0 0
        %2280 = vmatprep.subr.bf16.mxu0 0
        %2281 = vmatpush1.bf16.msra.mxu0 0
        %2282 = vmatprep.subr.bf16.mxu0 0
        %2283 = vmatpush1.bf16.msra.mxu0 0
        %2284 = vmatprep.subr.bf16.mxu0 0
        %2285 = vmatpush1.bf16.msra.mxu0 0
        %2286 = vmatprep.subr.bf16.mxu0 0
        %2287 = vmatpush1.bf16.msra.mxu0 0
        %2288 = vmatprep.subr.bf16.mxu0 0
        %2289 = vmatpush1.bf16.msra.mxu0 0
        %2290 = vmatprep.mubr.bf16.mxu0 0
        %2291 = vmatmul.mubr.bf16.gmra.mrb[0].mxu0 %v1933
        %v2292 = vpop.f32.mrb[0].mxu0
        %v2293 = vadd.f32 0.0, %v2292
        %v2294 = vpop.f32.mrb[0].mxu0
        %v2295 = vpop.f32.mrb[0].mxu0
        %v2296 = vadd.f32 0.0, %v2295
        %v2297 = vpop.f32.mrb[0].mxu0
        %2298 = vmatprep.mubr.bf16.mxu0 0
        %2299 = vmatmul.mubr.bf16.gmra.mrb[0].mxu0 %v1934
        %v2300 = vpop.f32.mrb[0].mxu0
        %v2301 = vadd.f32 0.0, %v2300
        %v2302 = vpop.f32.mrb[0].mxu0
        %v2303 = vpop.f32.mrb[0].mxu0
        %v2304 = vadd.f32 0.0, %v2303
        %v2305 = vpop.f32.mrb[0].mxu0
        %2306 = vmatprep.mubr.bf16.mxu0 0
        %2307 = vmatmul.mubr.bf16.gmra.mrb[0].mxu0 %v1935
        %v2308 = vpop.f32.mrb[0].mxu0
        %v2309 = vadd.f32 0.0, %v2308
        %v2310 = vpop.f32.mrb[0].mxu0
        %v2311 = vpop.f32.mrb[0].mxu0
        %v2312 = vadd.f32 0.0, %v2311
        %v2313 = vpop.f32.mrb[0].mxu0
        %2314 = vmatprep.mubr.bf16.mxu0 0
        %2315 = vmatmul.mubr.bf16.gmra.mrb[0].mxu0 %v1936
        %v2316 = vpop.f32.mrb[0].mxu0
        %v2317 = vadd.f32 0.0, %v2316
        %v2318 = vpop.f32.mrb[0].mxu0
        %v2319 = vpop.f32.mrb[0].mxu0
        %v2320 = vadd.f32 0.0, %v2319
        %v2321 = vpop.f32.mrb[0].mxu0
        %2322 = vmatprep.mubr.bf16.mxu0 0
        %2323 = vmatmul.mubr.bf16.gmra.mrb[0].mxu0 %v1937
        %v2324 = vpop.f32.mrb[0].mxu0
        %v2325 = vadd.f32 0.0, %v2324
        %v2326 = vpop.f32.mrb[0].mxu0
        %v2327 = vpop.f32.mrb[0].mxu0
        %v2328 = vadd.f32 0.0, %v2327
        %v2329 = vpop.f32.mrb[0].mxu0
        %2330 = vmatprep.mubr.bf16.mxu0 0
        %2331 = vmatmul.mubr.bf16.gmra.mrb[0].mxu0 %v1938
        %v2332 = vpop.f32.mrb[0].mxu0
        %v2333 = vadd.f32 0.0, %v2332
        %v2334 = vpop.f32.mrb[0].mxu0
        %v2335 = vpop.f32.mrb[0].mxu0
        %v2336 = vadd.f32 0.0, %v2335
        %v2337 = vpop.f32.mrb[0].mxu0
        %2338 = vmatprep.mubr.bf16.mxu0 0
        %2339 = vmatmul.mubr.bf16.gmra.mrb[0].mxu0 %v1939
        %v2340 = vpop.f32.mrb[0].mxu0
        %v2341 = vadd.f32 0.0, %v2340
        %v2342 = vpop.f32.mrb[0].mxu0
        %v2343 = vpop.f32.mrb[0].mxu0
        %v2344 = vadd.f32 0.0, %v2343
        %v2345 = vpop.f32.mrb[0].mxu0
        %2346 = vmatprep.mubr.bf16.mxu0 0
        %2347 = vmatmul.mubr.bf16.gmra.mrb[0].mxu0 %v1940
        %v2348 = vpop.f32.mrb[0].mxu0
        %v2349 = vadd.f32 0.0, %v2348
        %v2350 = vpop.f32.mrb[0].mxu0
        %v2351 = vpop.f32.mrb[0].mxu0
        %v2352 = vadd.f32 0.0, %v2351
        %v2353 = vpop.f32.mrb[0].mxu0
        %2354 = vmatprep.mubr.bf16.mxu0 0
        %2355 = vmatmul.mubr.bf16.gmra.mrb[0].mxu0 %v1941
        %v2356 = vpop.f32.mrb[0].mxu0
        %v2357 = vadd.f32 0.0, %v2356
        %v2358 = vpop.f32.mrb[0].mxu0
        %v2359 = vpop.f32.mrb[0].mxu0
        %v2360 = vadd.f32 0.0, %v2359
        %v2361 = vpop.f32.mrb[0].mxu0
        %2362 = vmatprep.mubr.bf16.mxu0 0
        %2363 = vmatmul.mubr.bf16.gmra.mrb[0].mxu0 %v1942
        %v2364 = vpop.f32.mrb[0].mxu0
        %v2365 = vadd.f32 0.0, %v2364
        %v2366 = vpop.f32.mrb[0].mxu0
        %v2367 = vpop.f32.mrb[0].mxu0
        %v2368 = vadd.f32 0.0, %v2367
        %v2369 = vpop.f32.mrb[0].mxu0
        %2370 = vmatprep.mubr.bf16.mxu0 0
        %2371 = vmatmul.mubr.bf16.gmra.mrb[0].mxu0 %v1943
        %v2372 = vpop.f32.mrb[0].mxu0
        %v2373 = vadd.f32 0.0, %v2372
        %v2374 = vpop.f32.mrb[0].mxu0
        %v2375 = vpop.f32.mrb[0].mxu0
        %v2376 = vadd.f32 0.0, %v2375
        %v2377 = vpop.f32.mrb[0].mxu0
        %2378 = vmatprep.mubr.bf16.mxu0 0
        %2379 = vmatmul.mubr.bf16.gmra.mrb[0].mxu0 %v1944
        %v2380 = vpop.f32.mrb[0].mxu0
        %v2381 = vadd.f32 0.0, %v2380
        %v2382 = vpop.f32.mrb[0].mxu0
        %v2383 = vpop.f32.mrb[0].mxu0
        %v2384 = vadd.f32 0.0, %v2383
        %v2385 = vpop.f32.mrb[0].mxu0
        %2386 = vdwg.mxu0
        %v2387 = vlaneseq
        %v2388 = vshrl.u32 %v2387, 7
        %v2389 = vsub.s32 0, %v2388
        %v2390 = vrot.slane %v1475, %v2389
        %v2391 = vadd.f32 %v2140, %v2390
        %v2392 = vadd.f32 %v2144, %v2390
        %v2393 = vadd.f32 %v2150, %v2390
        %v2394 = vadd.f32 %v2154, %v2390
        %v2395 = vadd.f32 %v2160, %v2390
        %v2396 = vadd.f32 %v2164, %v2390
        %v2397 = vadd.f32 %v2170, %v2390
        %v2398 = vadd.f32 %v2174, %v2390
        %v2399 = vadd.f32 %v2180, %v2390
        %v2400 = vadd.f32 %v2184, %v2390
        %v2401 = vadd.f32 %v2190, %v2390
        %v2402 = vadd.f32 %v2194, %v2390
        %v2403 = vadd.f32 %v2200, %v2390
        %v2404 = vadd.f32 %v2204, %v2390
        %v2405 = vadd.f32 %v2210, %v2390
        %v2406 = vadd.f32 %v2214, %v2390
        %v2407 = vadd.f32 %v2220, %v2390
        %v2408 = vadd.f32 %v2224, %v2390
        %v2409 = vadd.f32 %v2230, %v2390
        %v2410 = vadd.f32 %v2234, %v2390
        %v2411 = vadd.f32 %v2240, %v2390
        %v2412 = vadd.f32 %v2244, %v2390
        %v2413 = vadd.f32 %v2250, %v2390
        %v2414 = vadd.f32 %v2254, %v2390
        %v2415 = vlaneseq
        %v2416 = vshrl.u32 %v2415, 7
        %v2417 = vsub.s32 0, %v2416
        %v2418 = vrot.slane %v1476, %v2417
        %v2419 = vadd.f32 %v2142, %v2418
        %v2420 = vadd.f32 %v2146, %v2418
        %v2421 = vadd.f32 %v2152, %v2418
        %v2422 = vadd.f32 %v2156, %v2418
        %v2423 = vadd.f32 %v2162, %v2418
        %v2424 = vadd.f32 %v2166, %v2418
        %v2425 = vadd.f32 %v2172, %v2418
        %v2426 = vadd.f32 %v2176, %v2418
        %v2427 = vadd.f32 %v2182, %v2418
        %v2428 = vadd.f32 %v2186, %v2418
        %v2429 = vadd.f32 %v2192, %v2418
        %v2430 = vadd.f32 %v2196, %v2418
        %v2431 = vadd.f32 %v2202, %v2418
        %v2432 = vadd.f32 %v2206, %v2418
        %v2433 = vadd.f32 %v2212, %v2418
        %v2434 = vadd.f32 %v2216, %v2418
        %v2435 = vadd.f32 %v2222, %v2418
        %v2436 = vadd.f32 %v2226, %v2418
        %v2437 = vadd.f32 %v2232, %v2418
        %v2438 = vadd.f32 %v2236, %v2418
        %v2439 = vadd.f32 %v2242, %v2418
        %v2440 = vadd.f32 %v2246, %v2418
        %v2441 = vadd.f32 %v2252, %v2418
        %v2442 = vadd.f32 %v2256, %v2418
        %v2443 = vlaneseq
        %v2444 = vshrl.u32 %v2443, 7
        %v2445 = vsub.s32 0, %v2444
        %v2446 = vrot.slane %v1477, %v2445
        %v2447 = vadd.f32 %v2293, %v2446
        %v2448 = vadd.f32 %v2296, %v2446
        %v2449 = vadd.f32 %v2301, %v2446
        %v2450 = vadd.f32 %v2304, %v2446
        %v2451 = vadd.f32 %v2309, %v2446
        %v2452 = vadd.f32 %v2312, %v2446
        %v2453 = vadd.f32 %v2317, %v2446
        %v2454 = vadd.f32 %v2320, %v2446
        %v2455 = vadd.f32 %v2325, %v2446
        %v2456 = vadd.f32 %v2328, %v2446
        %v2457 = vadd.f32 %v2333, %v2446
        %v2458 = vadd.f32 %v2336, %v2446
        %v2459 = vadd.f32 %v2341, %v2446
        %v2460 = vadd.f32 %v2344, %v2446
        %v2461 = vadd.f32 %v2349, %v2446
        %v2462 = vadd.f32 %v2352, %v2446
        %v2463 = vadd.f32 %v2357, %v2446
        %v2464 = vadd.f32 %v2360, %v2446
        %v2465 = vadd.f32 %v2365, %v2446
        %v2466 = vadd.f32 %v2368, %v2446
        %v2467 = vadd.f32 %v2373, %v2446
        %v2468 = vadd.f32 %v2376, %v2446
        %v2469 = vadd.f32 %v2381, %v2446
        %v2470 = vadd.f32 %v2384, %v2446
        %v2471 = vmul.f32 %v2447, %v1235
        %v2472 = vmul.f32 %v2448, %v1237
        %v2473 = vmul.f32 %v2449, %v1239
        %v2474 = vmul.f32 %v2450, %v1241
        %v2475 = vmul.f32 %v2451, %v1243
        %v2476 = vmul.f32 %v2452, %v1245
        %v2477 = vmul.f32 %v2453, %v1247
        %v2478 = vmul.f32 %v2454, %v1249
        %v2479 = vmul.f32 %v2455, %v1251
        %v2480 = vmul.f32 %v2456, %v1253
        %v2481 = vmul.f32 %v2457, %v1255
        %v2482 = vmul.f32 %v2458, %v1257
        %v2483 = vmul.f32 %v2459, %v1259
        %v2484 = vmul.f32 %v2460, %v1261
        %v2485 = vmul.f32 %v2461, %v1263
        %v2486 = vmul.f32 %v2462, %v1265
        %v2487 = vmul.f32 %v2463, %v1267
        %v2488 = vmul.f32 %v2464, %v1269
        %v2489 = vmul.f32 %v2465, %v1271
        %v2490 = vmul.f32 %v2466, %v1273
        %v2491 = vmul.f32 %v2467, %v1275
        %v2492 = vmul.f32 %v2468, %v1277
        %v2493 = vmul.f32 %v2469, %v1279
        %v2494 = vmul.f32 %v2470, %v1281
        %v2495 = vadd.f32 %v421, %v2391
        %v2496 = vadd.f32 %v422, %v2392
        %v2497 = vadd.f32 %v423, %v2393
        %v2498 = vadd.f32 %v424, %v2394
        %v2499 = vadd.f32 %v425, %v2395
        %v2500 = vadd.f32 %v426, %v2396
        %v2501 = vadd.f32 %v427, %v2397
        %v2502 = vadd.f32 %v428, %v2398
        %v2503 = vadd.f32 %v429, %v2399
        %v2504 = vadd.f32 %v430, %v2400
        %v2505 = vadd.f32 %v431, %v2401
        %v2506 = vadd.f32 %v432, %v2402
        %v2507 = vadd.f32 %v433, %v2403
        %v2508 = vadd.f32 %v434, %v2404
        %v2509 = vadd.f32 %v435, %v2405
        %v2510 = vadd.f32 %v436, %v2406
        %v2511 = vadd.f32 %v437, %v2407
        %v2512 = vadd.f32 %v438, %v2408
        %v2513 = vadd.f32 %v439, %v2409
        %v2514 = vadd.f32 %v440, %v2410
        %v2515 = vadd.f32 %v441, %v2411
        %v2516 = vadd.f32 %v442, %v2412
        %v2517 = vadd.f32 %v443, %v2413
        %v2518 = vadd.f32 %v444, %v2414
        %v2519 = vadd.f32 %v2495, %v2471
        %v2520 = vadd.f32 %v2496, %v2472
        %v2521 = vadd.f32 %v2497, %v2473
        %v2522 = vadd.f32 %v2498, %v2474
        %v2523 = vadd.f32 %v2499, %v2475
        %v2524 = vadd.f32 %v2500, %v2476
        %v2525 = vadd.f32 %v2501, %v2477
        %v2526 = vadd.f32 %v2502, %v2478
        %v2527 = vadd.f32 %v2503, %v2479
        %v2528 = vadd.f32 %v2504, %v2480
        %v2529 = vadd.f32 %v2505, %v2481
        %v2530 = vadd.f32 %v2506, %v2482
        %v2531 = vadd.f32 %v2507, %v2483
        %v2532 = vadd.f32 %v2508, %v2484
        %v2533 = vadd.f32 %v2509, %v2485
        %v2534 = vadd.f32 %v2510, %v2486
        %v2535 = vadd.f32 %v2511, %v2487
        %v2536 = vadd.f32 %v2512, %v2488
        %v2537 = vadd.f32 %v2513, %v2489
        %v2538 = vadd.f32 %v2514, %v2490
        %v2539 = vadd.f32 %v2515, %v2491
        %v2540 = vadd.f32 %v2516, %v2492
        %v2541 = vadd.f32 %v2517, %v2493
        %v2542 = vadd.f32 %v2518, %v2494
        %2543 = vadd.xlane.f32.xlu0 %v2519
        %v2544 = vpop.xlane.xlu0 %2543
        %2545 = vadd.xlane.f32.xlu0 %v2520
        %v2546 = vpop.xlane.xlu0 %2545
        %2547 = vadd.xlane.f32.xlu0 %v2521
        %v2548 = vpop.xlane.xlu0 %2547
        %2549 = vadd.xlane.f32.xlu0 %v2522
        %v2550 = vpop.xlane.xlu0 %2549
        %2551 = vadd.xlane.f32.xlu0 %v2523
        %v2552 = vpop.xlane.xlu0 %2551
        %2553 = vadd.xlane.f32.xlu0 %v2524
        %v2554 = vpop.xlane.xlu0 %2553
        %2555 = vadd.xlane.f32.xlu0 %v2525
        %v2556 = vpop.xlane.xlu0 %2555
        %2557 = vadd.xlane.f32.xlu0 %v2526
        %v2558 = vpop.xlane.xlu0 %2557
        %2559 = vadd.xlane.f32.xlu0 %v2527
        %v2560 = vpop.xlane.xlu0 %2559
        %2561 = vadd.xlane.f32.xlu0 %v2528
        %v2562 = vpop.xlane.xlu0 %2561
        %2563 = vadd.xlane.f32.xlu0 %v2529
        %v2564 = vpop.xlane.xlu0 %2563
        %2565 = vadd.xlane.f32.xlu0 %v2530
        %v2566 = vpop.xlane.xlu0 %2565
        %2567 = vadd.xlane.f32.xlu0 %v2531
        %v2568 = vpop.xlane.xlu0 %2567
        %2569 = vadd.xlane.f32.xlu0 %v2532
        %v2570 = vpop.xlane.xlu0 %2569
        %2571 = vadd.xlane.f32.xlu0 %v2533
        %v2572 = vpop.xlane.xlu0 %2571
        %2573 = vadd.xlane.f32.xlu0 %v2534
        %v2574 = vpop.xlane.xlu0 %2573
        %2575 = vadd.xlane.f32.xlu0 %v2535
        %v2576 = vpop.xlane.xlu0 %2575
        %2577 = vadd.xlane.f32.xlu0 %v2536
        %v2578 = vpop.xlane.xlu0 %2577
        %2579 = vadd.xlane.f32.xlu0 %v2537
        %v2580 = vpop.xlane.xlu0 %2579
        %2581 = vadd.xlane.f32.xlu0 %v2538
        %v2582 = vpop.xlane.xlu0 %2581
        %2583 = vadd.xlane.f32.xlu0 %v2539
        %v2584 = vpop.xlane.xlu0 %2583
        %2585 = vadd.xlane.f32.xlu0 %v2540
        %v2586 = vpop.xlane.xlu0 %2585
        %2587 = vadd.xlane.f32.xlu0 %v2541
        %v2588 = vpop.xlane.xlu0 %2587
        %2589 = vadd.xlane.f32.xlu0 %v2542
        %v2590 = vpop.xlane.xlu0 %2589
        %v2591 = vrcp.pop 128.0
        %v2592 = vmul.f32 %v2544, %v2591
        %v2593 = vmul.f32 %v2546, %v2591
        %v2594 = vmul.f32 %v2548, %v2591
        %v2595 = vmul.f32 %v2550, %v2591
        %v2596 = vmul.f32 %v2552, %v2591
        %v2597 = vmul.f32 %v2554, %v2591
        %v2598 = vmul.f32 %v2556, %v2591
        %v2599 = vmul.f32 %v2558, %v2591
        %v2600 = vmul.f32 %v2560, %v2591
        %v2601 = vmul.f32 %v2562, %v2591
        %v2602 = vmul.f32 %v2564, %v2591
        %v2603 = vmul.f32 %v2566, %v2591
        %v2604 = vmul.f32 %v2568, %v2591
        %v2605 = vmul.f32 %v2570, %v2591
        %v2606 = vmul.f32 %v2572, %v2591
        %v2607 = vmul.f32 %v2574, %v2591
        %v2608 = vmul.f32 %v2576, %v2591
        %v2609 = vmul.f32 %v2578, %v2591
        %v2610 = vmul.f32 %v2580, %v2591
        %v2611 = vmul.f32 %v2582, %v2591
        %v2612 = vmul.f32 %v2584, %v2591
        %v2613 = vmul.f32 %v2586, %v2591
        %v2614 = vmul.f32 %v2588, %v2591
        %v2615 = vmul.f32 %v2590, %v2591
        %v2616 = vsub.f32 %v2519, %v2592
        %v2617 = vsub.f32 %v2520, %v2593
        %v2618 = vsub.f32 %v2521, %v2594
        %v2619 = vsub.f32 %v2522, %v2595
        %v2620 = vsub.f32 %v2523, %v2596
        %v2621 = vsub.f32 %v2524, %v2597
        %v2622 = vsub.f32 %v2525, %v2598
        %v2623 = vsub.f32 %v2526, %v2599
        %v2624 = vsub.f32 %v2527, %v2600
        %v2625 = vsub.f32 %v2528, %v2601
        %v2626 = vsub.f32 %v2529, %v2602
        %v2627 = vsub.f32 %v2530, %v2603
        %v2628 = vsub.f32 %v2531, %v2604
        %v2629 = vsub.f32 %v2532, %v2605
        %v2630 = vsub.f32 %v2533, %v2606
        %v2631 = vsub.f32 %v2534, %v2607
        %v2632 = vsub.f32 %v2535, %v2608
        %v2633 = vsub.f32 %v2536, %v2609
        %v2634 = vsub.f32 %v2537, %v2610
        %v2635 = vsub.f32 %v2538, %v2611
        %v2636 = vsub.f32 %v2539, %v2612
        %v2637 = vsub.f32 %v2540, %v2613
        %v2638 = vsub.f32 %v2541, %v2614
        %v2639 = vsub.f32 %v2542, %v2615
        %v2640 = vmul.f32 %v2616, %v2616
        %v2641 = vmul.f32 %v2617, %v2617
        %v2642 = vmul.f32 %v2618, %v2618
        %v2643 = vmul.f32 %v2619, %v2619
        %v2644 = vmul.f32 %v2620, %v2620
        %v2645 = vmul.f32 %v2621, %v2621
        %v2646 = vmul.f32 %v2622, %v2622
        %v2647 = vmul.f32 %v2623, %v2623
        %v2648 = vmul.f32 %v2624, %v2624
        %v2649 = vmul.f32 %v2625, %v2625
        %v2650 = vmul.f32 %v2626, %v2626
        %v2651 = vmul.f32 %v2627, %v2627
        %v2652 = vmul.f32 %v2628, %v2628
        %v2653 = vmul.f32 %v2629, %v2629
        %v2654 = vmul.f32 %v2630, %v2630
        %v2655 = vmul.f32 %v2631, %v2631
        %v2656 = vmul.f32 %v2632, %v2632
        %v2657 = vmul.f32 %v2633, %v2633
        %v2658 = vmul.f32 %v2634, %v2634
        %v2659 = vmul.f32 %v2635, %v2635
        %v2660 = vmul.f32 %v2636, %v2636
        %v2661 = vmul.f32 %v2637, %v2637
        %v2662 = vmul.f32 %v2638, %v2638
        %v2663 = vmul.f32 %v2639, %v2639
        %2664 = vadd.xlane.f32.xlu0 %v2640
        %v2665 = vpop.xlane.xlu0 %2664
        %2666 = vadd.xlane.f32.xlu0 %v2641
        %v2667 = vpop.xlane.xlu0 %2666
        %2668 = vadd.xlane.f32.xlu0 %v2642
        %v2669 = vpop.xlane.xlu0 %2668
        %2670 = vadd.xlane.f32.xlu0 %v2643
        %v2671 = vpop.xlane.xlu0 %2670
        %2672 = vadd.xlane.f32.xlu0 %v2644
        %v2673 = vpop.xlane.xlu0 %2672
        %2674 = vadd.xlane.f32.xlu0 %v2645
        %v2675 = vpop.xlane.xlu0 %2674
        %2676 = vadd.xlane.f32.xlu0 %v2646
        %v2677 = vpop.xlane.xlu0 %2676
        %2678 = vadd.xlane.f32.xlu0 %v2647
        %v2679 = vpop.xlane.xlu0 %2678
        %2680 = vadd.xlane.f32.xlu0 %v2648
        %v2681 = vpop.xlane.xlu0 %2680
        %2682 = vadd.xlane.f32.xlu0 %v2649
        %v2683 = vpop.xlane.xlu0 %2682
        %2684 = vadd.xlane.f32.xlu0 %v2650
        %v2685 = vpop.xlane.xlu0 %2684
        %2686 = vadd.xlane.f32.xlu0 %v2651
        %v2687 = vpop.xlane.xlu0 %2686
        %2688 = vadd.xlane.f32.xlu0 %v2652
        %v2689 = vpop.xlane.xlu0 %2688
        %2690 = vadd.xlane.f32.xlu0 %v2653
        %v2691 = vpop.xlane.xlu0 %2690
        %2692 = vadd.xlane.f32.xlu0 %v2654
        %v2693 = vpop.xlane.xlu0 %2692
        %2694 = vadd.xlane.f32.xlu0 %v2655
        %v2695 = vpop.xlane.xlu0 %2694
        %2696 = vadd.xlane.f32.xlu0 %v2656
        %v2697 = vpop.xlane.xlu0 %2696
        %2698 = vadd.xlane.f32.xlu0 %v2657
        %v2699 = vpop.xlane.xlu0 %2698
        %2700 = vadd.xlane.f32.xlu0 %v2658
        %v2701 = vpop.xlane.xlu0 %2700
        %2702 = vadd.xlane.f32.xlu0 %v2659
        %v2703 = vpop.xlane.xlu0 %2702
        %2704 = vadd.xlane.f32.xlu0 %v2660
        %v2705 = vpop.xlane.xlu0 %2704
        %2706 = vadd.xlane.f32.xlu0 %v2661
        %v2707 = vpop.xlane.xlu0 %2706
        %2708 = vadd.xlane.f32.xlu0 %v2662
        %v2709 = vpop.xlane.xlu0 %2708
        %2710 = vadd.xlane.f32.xlu0 %v2663
        %v2711 = vpop.xlane.xlu0 %2710
        %v2712 = vmul.f32 %v2665, %v2591
        %v2713 = vmul.f32 %v2667, %v2591
        %v2714 = vmul.f32 %v2669, %v2591
        %v2715 = vmul.f32 %v2671, %v2591
        %v2716 = vmul.f32 %v2673, %v2591
        %v2717 = vmul.f32 %v2675, %v2591
        %v2718 = vmul.f32 %v2677, %v2591
        %v2719 = vmul.f32 %v2679, %v2591
        %v2720 = vmul.f32 %v2681, %v2591
        %v2721 = vmul.f32 %v2683, %v2591
        %v2722 = vmul.f32 %v2685, %v2591
        %v2723 = vmul.f32 %v2687, %v2591
        %v2724 = vmul.f32 %v2689, %v2591
        %v2725 = vmul.f32 %v2691, %v2591
        %v2726 = vmul.f32 %v2693, %v2591
        %v2727 = vmul.f32 %v2695, %v2591
        %v2728 = vmul.f32 %v2697, %v2591
        %v2729 = vmul.f32 %v2699, %v2591
        %v2730 = vmul.f32 %v2701, %v2591
        %v2731 = vmul.f32 %v2703, %v2591
        %v2732 = vmul.f32 %v2705, %v2591
        %v2733 = vmul.f32 %v2707, %v2591
        %v2734 = vmul.f32 %v2709, %v2591
        %v2735 = vmul.f32 %v2711, %v2591
        %v2736 = vadd.f32 %v2712, 1e-05
        %v2737 = vadd.f32 %v2713, 1e-05
        %v2738 = vadd.f32 %v2714, 1e-05
        %v2739 = vadd.f32 %v2715, 1e-05
        %v2740 = vadd.f32 %v2716, 1e-05
        %v2741 = vadd.f32 %v2717, 1e-05
        %v2742 = vadd.f32 %v2718, 1e-05
        %v2743 = vadd.f32 %v2719, 1e-05
        %v2744 = vadd.f32 %v2720, 1e-05
        %v2745 = vadd.f32 %v2721, 1e-05
        %v2746 = vadd.f32 %v2722, 1e-05
        %v2747 = vadd.f32 %v2723, 1e-05
        %v2748 = vadd.f32 %v2724, 1e-05
        %v2749 = vadd.f32 %v2725, 1e-05
        %v2750 = vadd.f32 %v2726, 1e-05
        %v2751 = vadd.f32 %v2727, 1e-05
        %v2752 = vadd.f32 %v2728, 1e-05
        %v2753 = vadd.f32 %v2729, 1e-05
        %v2754 = vadd.f32 %v2730, 1e-05
        %v2755 = vadd.f32 %v2731, 1e-05
        %v2756 = vadd.f32 %v2732, 1e-05
        %v2757 = vadd.f32 %v2733, 1e-05
        %v2758 = vadd.f32 %v2734, 1e-05
        %v2759 = vadd.f32 %v2735, 1e-05
        %v2760 = vrsqrt.pop %v2736
        %v2761 = vrsqrt.pop %v2737
        %v2762 = vrsqrt.pop %v2738
        %v2763 = vrsqrt.pop %v2739
        %v2764 = vrsqrt.pop %v2740
        %v2765 = vrsqrt.pop %v2741
        %v2766 = vrsqrt.pop %v2742
        %v2767 = vrsqrt.pop %v2743
        %v2768 = vrsqrt.pop %v2744
        %v2769 = vrsqrt.pop %v2745
        %v2770 = vrsqrt.pop %v2746
        %v2771 = vrsqrt.pop %v2747
        %v2772 = vrsqrt.pop %v2748
        %v2773 = vrsqrt.pop %v2749
        %v2774 = vrsqrt.pop %v2750
        %v2775 = vrsqrt.pop %v2751
        %v2776 = vrsqrt.pop %v2752
        %v2777 = vrsqrt.pop %v2753
        %v2778 = vrsqrt.pop %v2754
        %v2779 = vrsqrt.pop %v2755
        %v2780 = vrsqrt.pop %v2756
        %v2781 = vrsqrt.pop %v2757
        %v2782 = vrsqrt.pop %v2758
        %v2783 = vrsqrt.pop %v2759
        %v2784 = vmul.f32 %v2616, %v2760
        %v2785 = vmul.f32 %v2617, %v2761
        %v2786 = vmul.f32 %v2618, %v2762
        %v2787 = vmul.f32 %v2619, %v2763
        %v2788 = vmul.f32 %v2620, %v2764
        %v2789 = vmul.f32 %v2621, %v2765
        %v2790 = vmul.f32 %v2622, %v2766
        %v2791 = vmul.f32 %v2623, %v2767
        %v2792 = vmul.f32 %v2624, %v2768
        %v2793 = vmul.f32 %v2625, %v2769
        %v2794 = vmul.f32 %v2626, %v2770
        %v2795 = vmul.f32 %v2627, %v2771
        %v2796 = vmul.f32 %v2628, %v2772
        %v2797 = vmul.f32 %v2629, %v2773
        %v2798 = vmul.f32 %v2630, %v2774
        %v2799 = vmul.f32 %v2631, %v2775
        %v2800 = vmul.f32 %v2632, %v2776
        %v2801 = vmul.f32 %v2633, %v2777
        %v2802 = vmul.f32 %v2634, %v2778
        %v2803 = vmul.f32 %v2635, %v2779
        %v2804 = vmul.f32 %v2636, %v2780
        %v2805 = vmul.f32 %v2637, %v2781
        %v2806 = vmul.f32 %v2638, %v2782
        %v2807 = vmul.f32 %v2639, %v2783
        %v2808 = vlaneseq
        %v2809 = vshrl.u32 %v2808, 7
        %v2810 = vsub.s32 0, %v2809
        %v2811 = vrot.slane %v1478, %v2810
        %v2812 = vmul.f32 %v2784, %v2811
        %v2813 = vmul.f32 %v2785, %v2811
        %v2814 = vmul.f32 %v2786, %v2811
        %v2815 = vmul.f32 %v2787, %v2811
        %v2816 = vmul.f32 %v2788, %v2811
        %v2817 = vmul.f32 %v2789, %v2811
        %v2818 = vmul.f32 %v2790, %v2811
        %v2819 = vmul.f32 %v2791, %v2811
        %v2820 = vmul.f32 %v2792, %v2811
        %v2821 = vmul.f32 %v2793, %v2811
        %v2822 = vmul.f32 %v2794, %v2811
        %v2823 = vmul.f32 %v2795, %v2811
        %v2824 = vmul.f32 %v2796, %v2811
        %v2825 = vmul.f32 %v2797, %v2811
        %v2826 = vmul.f32 %v2798, %v2811
        %v2827 = vmul.f32 %v2799, %v2811
        %v2828 = vmul.f32 %v2800, %v2811
        %v2829 = vmul.f32 %v2801, %v2811
        %v2830 = vmul.f32 %v2802, %v2811
        %v2831 = vmul.f32 %v2803, %v2811
        %v2832 = vmul.f32 %v2804, %v2811
        %v2833 = vmul.f32 %v2805, %v2811
        %v2834 = vmul.f32 %v2806, %v2811
        %v2835 = vmul.f32 %v2807, %v2811
        %v2836 = vlaneseq
        %v2837 = vshrl.u32 %v2836, 7
        %v2838 = vsub.s32 0, %v2837
        %v2839 = vrot.slane %v1479, %v2838
        %v2840 = vadd.f32 %v2812, %v2839
        %v2841 = vadd.f32 %v2813, %v2839
        %v2842 = vadd.f32 %v2814, %v2839
        %v2843 = vadd.f32 %v2815, %v2839
        %v2844 = vadd.f32 %v2816, %v2839
        %v2845 = vadd.f32 %v2817, %v2839
        %v2846 = vadd.f32 %v2818, %v2839
        %v2847 = vadd.f32 %v2819, %v2839
        %v2848 = vadd.f32 %v2820, %v2839
        %v2849 = vadd.f32 %v2821, %v2839
        %v2850 = vadd.f32 %v2822, %v2839
        %v2851 = vadd.f32 %v2823, %v2839
        %v2852 = vadd.f32 %v2824, %v2839
        %v2853 = vadd.f32 %v2825, %v2839
        %v2854 = vadd.f32 %v2826, %v2839
        %v2855 = vadd.f32 %v2827, %v2839
        %v2856 = vadd.f32 %v2828, %v2839
        %v2857 = vadd.f32 %v2829, %v2839
        %v2858 = vadd.f32 %v2830, %v2839
        %v2859 = vadd.f32 %v2831, %v2839
        %v2860 = vadd.f32 %v2832, %v2839
        %v2861 = vadd.f32 %v2833, %v2839
        %v2862 = vadd.f32 %v2834, %v2839
        %v2863 = vadd.f32 %v2835, %v2839
        %2864 = vst [vmem:[%s408] sm:$0xff] %v2840
        %2865 = vst [vmem:[%s408 + $0x8] sm:$0xff] %v2841
        %2866 = vst [vmem:[%s408 + $0x10] sm:$0xff] %v2842
        %2867 = vst [vmem:[%s408 + $0x18] sm:$0xff] %v2843
        %2868 = vst [vmem:[%s408 + $0x20] sm:$0xff] %v2844
        %2869 = vst [vmem:[%s408 + $0x28] sm:$0xff] %v2845
        %2870 = vst [vmem:[%s408 + $0x30] sm:$0xff] %v2846
        %2871 = vst [vmem:[%s408 + $0x38] sm:$0xff] %v2847
        %2872 = vst [vmem:[%s408 + $0x40] sm:$0xff] %v2848
        %2873 = vst [vmem:[%s408 + $0x48] sm:$0xff] %v2849
        %2874 = vst [vmem:[%s408 + $0x50] sm:$0xff] %v2850
        %2875 = vst [vmem:[%s408 + $0x58] sm:$0xff] %v2851
        %2876 = vst [vmem:[%s408 + $0x60] sm:$0xff] %v2852
        %2877 = vst [vmem:[%s408 + $0x68] sm:$0xff] %v2853
        %2878 = vst [vmem:[%s408 + $0x70] sm:$0xff] %v2854
        %2879 = vst [vmem:[%s408 + $0x78] sm:$0xff] %v2855
        %2880 = vst [vmem:[%s408 + $0x80] sm:$0xff] %v2856
        %2881 = vst [vmem:[%s408 + $0x88] sm:$0xff] %v2857
        %2882 = vst [vmem:[%s408 + $0x90] sm:$0xff] %v2858
        %2883 = vst [vmem:[%s408 + $0x98] sm:$0xff] %v2859
        %2884 = vst [vmem:[%s408 + $0xa0] sm:$0xff] %v2860
        %2885 = vst [vmem:[%s408 + $0xa8] sm:$0xff] %v2861
        %2886 = vst [vmem:[%s408 + $0xb0] sm:$0xff] %v2862
        %2887 = vst [vmem:[%s408 + $0xb8] sm:$0xff] %v2863
        %v2888 = vld [vmem:[%s363] sm:$0xff]
        %v2889 = vld [vmem:[%s363 + $0x8] sm:$0xff]
        %v2890 = vld [vmem:[%s363 + $0x10] sm:$0xff]
        %v2891 = vld [vmem:[%s363 + $0x18] sm:$0xff]
        %v2892 = vld [vmem:[%s363 + $0x20] sm:$0xff]
        %v2893 = vld [vmem:[%s363 + $0x28] sm:$0xff]
        %v2894 = vld [vmem:[%s363 + $0x30] sm:$0xff]
        %v2895 = vld [vmem:[%s363 + $0x38] sm:$0xff]
        %v2896 = vld [vmem:[%s363 + $0x40] sm:$0xff]
        %v2897 = vld [vmem:[%s363 + $0x48] sm:$0xff]
        %v2898 = vld [vmem:[%s363 + $0x50] sm:$0xff]
        %v2899 = vld [vmem:[%s363 + $0x58] sm:$0xff]
        %v2900 = vld [vmem:[%s363 + $0x60] sm:$0xff]
        %v2901 = vld [vmem:[%s363 + $0x68] sm:$0xff]
        %v2902 = vld [vmem:[%s363 + $0x70] sm:$0xff]
        %v2903 = vld [vmem:[%s363 + $0x78] sm:$0xff]
        %v2904 = vld [vmem:[%s363 + $0x80] sm:$0xff]
        %v2905 = vld [vmem:[%s363 + $0x88] sm:$0xff]
        %v2906 = vld [vmem:[%s363 + $0x90] sm:$0xff]
        %v2907 = vld [vmem:[%s363 + $0x98] sm:$0xff]
        %v2908 = vld [vmem:[%s363 + $0xa0] sm:$0xff]
        %v2909 = vld [vmem:[%s363 + $0xa8] sm:$0xff]
        %v2910 = vld [vmem:[%s363 + $0xb0] sm:$0xff]
        %v2911 = vld [vmem:[%s363 + $0xb8] sm:$0xff]
        %v2912 = vld [vmem:[%s363 + $0xc0] sm:$0xff]
        %v2913 = vld [vmem:[%s363 + $0xc8] sm:$0xff]
        %v2914 = vld [vmem:[%s363 + $0xd0] sm:$0xff]
        %v2915 = vld [vmem:[%s363 + $0xd8] sm:$0xff]
        %v2916 = vld [vmem:[%s363 + $0xe0] sm:$0xff]
        %v2917 = vld [vmem:[%s363 + $0xe8] sm:$0xff]
        %v2918 = vld [vmem:[%s363 + $0xf0] sm:$0xff]
        %v2919 = vld [vmem:[%s363 + $0xf8] sm:$0xff]
        %v2920 = vld [vmem:[%s363 + $0x100] sm:$0xff]
        %v2921 = vld [vmem:[%s363 + $0x108] sm:$0xff]
        %v2922 = vld [vmem:[%s363 + $0x110] sm:$0xff]
        %v2923 = vld [vmem:[%s363 + $0x118] sm:$0xff]
        %v2924 = vld [vmem:[%s363 + $0x120] sm:$0xff]
        %v2925 = vld [vmem:[%s363 + $0x128] sm:$0xff]
        %v2926 = vld [vmem:[%s363 + $0x130] sm:$0xff]
        %v2927 = vld [vmem:[%s363 + $0x138] sm:$0xff]
        %v2928 = vld [vmem:[%s363 + $0x140] sm:$0xff]
        %v2929 = vld [vmem:[%s363 + $0x148] sm:$0xff]
        %v2930 = vld [vmem:[%s363 + $0x150] sm:$0xff]
        %v2931 = vld [vmem:[%s363 + $0x158] sm:$0xff]
        %v2932 = vld [vmem:[%s363 + $0x160] sm:$0xff]
        %v2933 = vld [vmem:[%s363 + $0x168] sm:$0xff]
        %v2934 = vld [vmem:[%s363 + $0x170] sm:$0xff]
        %v2935 = vld [vmem:[%s363 + $0x178] sm:$0xff]
        %v2936 = vld [vmem:[%s363 + $0x180] sm:$0xff]
        %v2937 = vld [vmem:[%s363 + $0x188] sm:$0xff]
        %v2938 = vld [vmem:[%s363 + $0x190] sm:$0xff]
        %v2939 = vld [vmem:[%s363 + $0x198] sm:$0xff]
        %v2940 = vld [vmem:[%s363 + $0x1a0] sm:$0xff]
        %v2941 = vld [vmem:[%s363 + $0x1a8] sm:$0xff]
        %v2942 = vld [vmem:[%s363 + $0x1b0] sm:$0xff]
        %v2943 = vld [vmem:[%s363 + $0x1b8] sm:$0xff]
        %v2944 = vld [vmem:[%s363 + $0x1c0] sm:$0xff]
        %v2945 = vld [vmem:[%s363 + $0x1c8] sm:$0xff]
        %v2946 = vld [vmem:[%s363 + $0x1d0] sm:$0xff]
        %v2947 = vld [vmem:[%s363 + $0x1d8] sm:$0xff]
        %v2948 = vld [vmem:[%s363 + $0x1e0] sm:$0xff]
        %v2949 = vld [vmem:[%s363 + $0x1e8] sm:$0xff]
        %v2950 = vld [vmem:[%s363 + $0x1f0] sm:$0xff]
        %v2951 = vld [vmem:[%s363 + $0x1f8] sm:$0xff]
        %v2952 = vld [vmem:[%s363 + $0x200] sm:$0xff]
        %v2953 = vld [vmem:[%s363 + $0x208] sm:$0xff]
        %v2954 = vld [vmem:[%s363 + $0x210] sm:$0xff]
        %v2955 = vld [vmem:[%s363 + $0x218] sm:$0xff]
        %v2956 = vld [vmem:[%s363 + $0x220] sm:$0xff]
        %v2957 = vld [vmem:[%s363 + $0x228] sm:$0xff]
        %v2958 = vld [vmem:[%s363 + $0x230] sm:$0xff]
        %v2959 = vld [vmem:[%s363 + $0x238] sm:$0xff]
        %v2960 = vmul.f32 %v2419, %v686
        %v2961 = vmul.f32 %v2420, %v690
        %v2962 = vmul.f32 %v2421, %v696
        %v2963 = vmul.f32 %v2422, %v700
        %v2964 = vmul.f32 %v2423, %v706
        %v2965 = vmul.f32 %v2424, %v710
        %v2966 = vmul.f32 %v2425, %v716
        %v2967 = vmul.f32 %v2426, %v720
        %v2968 = vmul.f32 %v2427, %v726
        %v2969 = vmul.f32 %v2428, %v730
        %v2970 = vmul.f32 %v2429, %v736
        %v2971 = vmul.f32 %v2430, %v740
        %v2972 = vmul.f32 %v2431, %v746
        %v2973 = vmul.f32 %v2432, %v750
        %v2974 = vmul.f32 %v2433, %v756
        %v2975 = vmul.f32 %v2434, %v760
        %v2976 = vmul.f32 %v2435, %v766
        %v2977 = vmul.f32 %v2436, %v770
        %v2978 = vmul.f32 %v2437, %v776
        %v2979 = vmul.f32 %v2438, %v780
        %v2980 = vmul.f32 %v2439, %v786
        %v2981 = vmul.f32 %v2440, %v790
        %v2982 = vmul.f32 %v2441, %v796
        %v2983 = vmul.f32 %v2442, %v800
        %v2984 = vmul.f32 %v2419, %v806
        %v2985 = vmul.f32 %v2420, %v810
        %v2986 = vmul.f32 %v2421, %v816
        %v2987 = vmul.f32 %v2422, %v820
        %v2988 = vmul.f32 %v2423, %v826
        %v2989 = vmul.f32 %v2424, %v830
        %v2990 = vmul.f32 %v2425, %v836
        %v2991 = vmul.f32 %v2426, %v840
        %v2992 = vmul.f32 %v2427, %v846
        %v2993 = vmul.f32 %v2428, %v850
        %v2994 = vmul.f32 %v2429, %v856
        %v2995 = vmul.f32 %v2430, %v860
        %v2996 = vmul.f32 %v2431, %v866
        %v2997 = vmul.f32 %v2432, %v870
        %v2998 = vmul.f32 %v2433, %v876
        %v2999 = vmul.f32 %v2434, %v880
        %v3000 = vmul.f32 %v2435, %v886
        %v3001 = vmul.f32 %v2436, %v890
        %v3002 = vmul.f32 %v2437, %v896
        %v3003 = vmul.f32 %v2438, %v900
        %v3004 = vmul.f32 %v2439, %v906
        %v3005 = vmul.f32 %v2440, %v910
        %v3006 = vmul.f32 %v2441, %v916
        %v3007 = vmul.f32 %v2442, %v920
        %v3008 = vmul.f32 %v2419, %v926
        %v3009 = vmul.f32 %v2420, %v930
        %v3010 = vmul.f32 %v2421, %v936
        %v3011 = vmul.f32 %v2422, %v940
        %v3012 = vmul.f32 %v2423, %v946
        %v3013 = vmul.f32 %v2424, %v950
        %v3014 = vmul.f32 %v2425, %v956
        %v3015 = vmul.f32 %v2426, %v960
        %v3016 = vmul.f32 %v2427, %v966
        %v3017 = vmul.f32 %v2428, %v970
        %v3018 = vmul.f32 %v2429, %v976
        %v3019 = vmul.f32 %v2430, %v980
        %v3020 = vmul.f32 %v2431, %v986
        %v3021 = vmul.f32 %v2432, %v990
        %v3022 = vmul.f32 %v2433, %v996
        %v3023 = vmul.f32 %v2434, %v1000
        %v3024 = vmul.f32 %v2435, %v1006
        %v3025 = vmul.f32 %v2436, %v1010
        %v3026 = vmul.f32 %v2437, %v1016
        %v3027 = vmul.f32 %v2438, %v1020
        %v3028 = vmul.f32 %v2439, %v1026
        %v3029 = vmul.f32 %v2440, %v1030
        %v3030 = vmul.f32 %v2441, %v1036
        %v3031 = vmul.f32 %v2442, %v1040
        %v3032 = vadd.f32 %v2888, %v2960
        %v3033 = vadd.f32 %v2889, %v2961
        %v3034 = vadd.f32 %v2890, %v2962
        %v3035 = vadd.f32 %v2891, %v2963
        %v3036 = vadd.f32 %v2892, %v2964
        %v3037 = vadd.f32 %v2893, %v2965
        %v3038 = vadd.f32 %v2894, %v2966
        %v3039 = vadd.f32 %v2895, %v2967
        %v3040 = vadd.f32 %v2896, %v2968
        %v3041 = vadd.f32 %v2897, %v2969
        %v3042 = vadd.f32 %v2898, %v2970
        %v3043 = vadd.f32 %v2899, %v2971
        %v3044 = vadd.f32 %v2900, %v2972
        %v3045 = vadd.f32 %v2901, %v2973
        %v3046 = vadd.f32 %v2902, %v2974
        %v3047 = vadd.f32 %v2903, %v2975
        %v3048 = vadd.f32 %v2904, %v2976
        %v3049 = vadd.f32 %v2905, %v2977
        %v3050 = vadd.f32 %v2906, %v2978
        %v3051 = vadd.f32 %v2907, %v2979
        %v3052 = vadd.f32 %v2908, %v2980
        %v3053 = vadd.f32 %v2909, %v2981
        %v3054 = vadd.f32 %v2910, %v2982
        %v3055 = vadd.f32 %v2911, %v2983
        %v3056 = vadd.f32 %v2912, %v2984
        %v3057 = vadd.f32 %v2913, %v2985
        %v3058 = vadd.f32 %v2914, %v2986
        %v3059 = vadd.f32 %v2915, %v2987
        %v3060 = vadd.f32 %v2916, %v2988
        %v3061 = vadd.f32 %v2917, %v2989
        %v3062 = vadd.f32 %v2918, %v2990
        %v3063 = vadd.f32 %v2919, %v2991
        %v3064 = vadd.f32 %v2920, %v2992
        %v3065 = vadd.f32 %v2921, %v2993
        %v3066 = vadd.f32 %v2922, %v2994
        %v3067 = vadd.f32 %v2923, %v2995
        %v3068 = vadd.f32 %v2924, %v2996
        %v3069 = vadd.f32 %v2925, %v2997
        %v3070 = vadd.f32 %v2926, %v2998
        %v3071 = vadd.f32 %v2927, %v2999
        %v3072 = vadd.f32 %v2928, %v3000
        %v3073 = vadd.f32 %v2929, %v3001
        %v3074 = vadd.f32 %v2930, %v3002
        %v3075 = vadd.f32 %v2931, %v3003
        %v3076 = vadd.f32 %v2932, %v3004
        %v3077 = vadd.f32 %v2933, %v3005
        %v3078 = vadd.f32 %v2934, %v3006
        %v3079 = vadd.f32 %v2935, %v3007
        %v3080 = vadd.f32 %v2936, %v3008
        %v3081 = vadd.f32 %v2937, %v3009
        %v3082 = vadd.f32 %v2938, %v3010
        %v3083 = vadd.f32 %v2939, %v3011
        %v3084 = vadd.f32 %v2940, %v3012
        %v3085 = vadd.f32 %v2941, %v3013
        %v3086 = vadd.f32 %v2942, %v3014
        %v3087 = vadd.f32 %v2943, %v3015
        %v3088 = vadd.f32 %v2944, %v3016
        %v3089 = vadd.f32 %v2945, %v3017
        %v3090 = vadd.f32 %v2946, %v3018
        %v3091 = vadd.f32 %v2947, %v3019
        %v3092 = vadd.f32 %v2948, %v3020
        %v3093 = vadd.f32 %v2949, %v3021
        %v3094 = vadd.f32 %v2950, %v3022
        %v3095 = vadd.f32 %v2951, %v3023
        %v3096 = vadd.f32 %v2952, %v3024
        %v3097 = vadd.f32 %v2953, %v3025
        %v3098 = vadd.f32 %v2954, %v3026
        %v3099 = vadd.f32 %v2955, %v3027
        %v3100 = vadd.f32 %v2956, %v3028
        %v3101 = vadd.f32 %v2957, %v3029
        %v3102 = vadd.f32 %v2958, %v3030
        %v3103 = vadd.f32 %v2959, %v3031
        %v3104 = vmul.f32 %v3032, %v3032
        %v3105 = vmul.f32 %v3033, %v3033
        %v3106 = vmul.f32 %v3034, %v3034
        %v3107 = vmul.f32 %v3035, %v3035
        %v3108 = vmul.f32 %v3036, %v3036
        %v3109 = vmul.f32 %v3037, %v3037
        %v3110 = vmul.f32 %v3038, %v3038
        %v3111 = vmul.f32 %v3039, %v3039
        %v3112 = vmul.f32 %v3040, %v3040
        %v3113 = vmul.f32 %v3041, %v3041
        %v3114 = vmul.f32 %v3042, %v3042
        %v3115 = vmul.f32 %v3043, %v3043
        %v3116 = vmul.f32 %v3044, %v3044
        %v3117 = vmul.f32 %v3045, %v3045
        %v3118 = vmul.f32 %v3046, %v3046
        %v3119 = vmul.f32 %v3047, %v3047
        %v3120 = vmul.f32 %v3048, %v3048
        %v3121 = vmul.f32 %v3049, %v3049
        %v3122 = vmul.f32 %v3050, %v3050
        %v3123 = vmul.f32 %v3051, %v3051
        %v3124 = vmul.f32 %v3052, %v3052
        %v3125 = vmul.f32 %v3053, %v3053
        %v3126 = vmul.f32 %v3054, %v3054
        %v3127 = vmul.f32 %v3055, %v3055
        %v3128 = vmul.f32 %v3056, %v3056
        %v3129 = vmul.f32 %v3057, %v3057
        %v3130 = vmul.f32 %v3058, %v3058
        %v3131 = vmul.f32 %v3059, %v3059
        %v3132 = vmul.f32 %v3060, %v3060
        %v3133 = vmul.f32 %v3061, %v3061
        %v3134 = vmul.f32 %v3062, %v3062
        %v3135 = vmul.f32 %v3063, %v3063
        %v3136 = vmul.f32 %v3064, %v3064
        %v3137 = vmul.f32 %v3065, %v3065
        %v3138 = vmul.f32 %v3066, %v3066
        %v3139 = vmul.f32 %v3067, %v3067
        %v3140 = vmul.f32 %v3068, %v3068
        %v3141 = vmul.f32 %v3069, %v3069
        %v3142 = vmul.f32 %v3070, %v3070
        %v3143 = vmul.f32 %v3071, %v3071
        %v3144 = vmul.f32 %v3072, %v3072
        %v3145 = vmul.f32 %v3073, %v3073
        %v3146 = vmul.f32 %v3074, %v3074
        %v3147 = vmul.f32 %v3075, %v3075
        %v3148 = vmul.f32 %v3076, %v3076
        %v3149 = vmul.f32 %v3077, %v3077
        %v3150 = vmul.f32 %v3078, %v3078
        %v3151 = vmul.f32 %v3079, %v3079
        %v3152 = vmul.f32 %v3080, %v3080
        %v3153 = vmul.f32 %v3081, %v3081
        %v3154 = vmul.f32 %v3082, %v3082
        %v3155 = vmul.f32 %v3083, %v3083
        %v3156 = vmul.f32 %v3084, %v3084
        %v3157 = vmul.f32 %v3085, %v3085
        %v3158 = vmul.f32 %v3086, %v3086
        %v3159 = vmul.f32 %v3087, %v3087
        %v3160 = vmul.f32 %v3088, %v3088
        %v3161 = vmul.f32 %v3089, %v3089
        %v3162 = vmul.f32 %v3090, %v3090
        %v3163 = vmul.f32 %v3091, %v3091
        %v3164 = vmul.f32 %v3092, %v3092
        %v3165 = vmul.f32 %v3093, %v3093
        %v3166 = vmul.f32 %v3094, %v3094
        %v3167 = vmul.f32 %v3095, %v3095
        %v3168 = vmul.f32 %v3096, %v3096
        %v3169 = vmul.f32 %v3097, %v3097
        %v3170 = vmul.f32 %v3098, %v3098
        %v3171 = vmul.f32 %v3099, %v3099
        %v3172 = vmul.f32 %v3100, %v3100
        %v3173 = vmul.f32 %v3101, %v3101
        %v3174 = vmul.f32 %v3102, %v3102
        %v3175 = vmul.f32 %v3103, %v3103
        %v3176 = vadd.f32 %v3104, %v3128
        %v3177 = vadd.f32 %v3176, %v3152
        %v3178 = vadd.f32 %v3105, %v3129
        %v3179 = vadd.f32 %v3178, %v3153
        %v3180 = vadd.f32 %v3106, %v3130
        %v3181 = vadd.f32 %v3180, %v3154
        %v3182 = vadd.f32 %v3107, %v3131
        %v3183 = vadd.f32 %v3182, %v3155
        %v3184 = vadd.f32 %v3108, %v3132
        %v3185 = vadd.f32 %v3184, %v3156
        %v3186 = vadd.f32 %v3109, %v3133
        %v3187 = vadd.f32 %v3186, %v3157
        %v3188 = vadd.f32 %v3110, %v3134
        %v3189 = vadd.f32 %v3188, %v3158
        %v3190 = vadd.f32 %v3111, %v3135
        %v3191 = vadd.f32 %v3190, %v3159
        %v3192 = vadd.f32 %v3112, %v3136
        %v3193 = vadd.f32 %v3192, %v3160
        %v3194 = vadd.f32 %v3113, %v3137
        %v3195 = vadd.f32 %v3194, %v3161
        %v3196 = vadd.f32 %v3114, %v3138
        %v3197 = vadd.f32 %v3196, %v3162
        %v3198 = vadd.f32 %v3115, %v3139
        %v3199 = vadd.f32 %v3198, %v3163
        %v3200 = vadd.f32 %v3116, %v3140
        %v3201 = vadd.f32 %v3200, %v3164
        %v3202 = vadd.f32 %v3117, %v3141
        %v3203 = vadd.f32 %v3202, %v3165
        %v3204 = vadd.f32 %v3118, %v3142
        %v3205 = vadd.f32 %v3204, %v3166
        %v3206 = vadd.f32 %v3119, %v3143
        %v3207 = vadd.f32 %v3206, %v3167
        %v3208 = vadd.f32 %v3120, %v3144
        %v3209 = vadd.f32 %v3208, %v3168
        %v3210 = vadd.f32 %v3121, %v3145
        %v3211 = vadd.f32 %v3210, %v3169
        %v3212 = vadd.f32 %v3122, %v3146
        %v3213 = vadd.f32 %v3212, %v3170
        %v3214 = vadd.f32 %v3123, %v3147
        %v3215 = vadd.f32 %v3214, %v3171
        %v3216 = vadd.f32 %v3124, %v3148
        %v3217 = vadd.f32 %v3216, %v3172
        %v3218 = vadd.f32 %v3125, %v3149
        %v3219 = vadd.f32 %v3218, %v3173
        %v3220 = vadd.f32 %v3126, %v3150
        %v3221 = vadd.f32 %v3220, %v3174
        %v3222 = vadd.f32 %v3127, %v3151
        %v3223 = vadd.f32 %v3222, %v3175
        %v3224 = vadd.f32 %v3177, 1e-08
        %v3225 = vadd.f32 %v3179, 1e-08
        %v3226 = vadd.f32 %v3181, 1e-08
        %v3227 = vadd.f32 %v3183, 1e-08
        %v3228 = vadd.f32 %v3185, 1e-08
        %v3229 = vadd.f32 %v3187, 1e-08
        %v3230 = vadd.f32 %v3189, 1e-08
        %v3231 = vadd.f32 %v3191, 1e-08
        %v3232 = vadd.f32 %v3193, 1e-08
        %v3233 = vadd.f32 %v3195, 1e-08
        %v3234 = vadd.f32 %v3197, 1e-08
        %v3235 = vadd.f32 %v3199, 1e-08
        %v3236 = vadd.f32 %v3201, 1e-08
        %v3237 = vadd.f32 %v3203, 1e-08
        %v3238 = vadd.f32 %v3205, 1e-08
        %v3239 = vadd.f32 %v3207, 1e-08
        %v3240 = vadd.f32 %v3209, 1e-08
        %v3241 = vadd.f32 %v3211, 1e-08
        %v3242 = vadd.f32 %v3213, 1e-08
        %v3243 = vadd.f32 %v3215, 1e-08
        %v3244 = vadd.f32 %v3217, 1e-08
        %v3245 = vadd.f32 %v3219, 1e-08
        %v3246 = vadd.f32 %v3221, 1e-08
        %v3247 = vadd.f32 %v3223, 1e-08
        %v3248 = vrsqrt.pop %v3224
        %v3249 = vrsqrt.pop %v3225
        %v3250 = vrsqrt.pop %v3226
        %v3251 = vrsqrt.pop %v3227
        %v3252 = vrsqrt.pop %v3228
        %v3253 = vrsqrt.pop %v3229
        %v3254 = vrsqrt.pop %v3230
        %v3255 = vrsqrt.pop %v3231
        %v3256 = vrsqrt.pop %v3232
        %v3257 = vrsqrt.pop %v3233
        %v3258 = vrsqrt.pop %v3234
        %v3259 = vrsqrt.pop %v3235
        %v3260 = vrsqrt.pop %v3236
        %v3261 = vrsqrt.pop %v3237
        %v3262 = vrsqrt.pop %v3238
        %v3263 = vrsqrt.pop %v3239
        %v3264 = vrsqrt.pop %v3240
        %v3265 = vrsqrt.pop %v3241
        %v3266 = vrsqrt.pop %v3242
        %v3267 = vrsqrt.pop %v3243
        %v3268 = vrsqrt.pop %v3244
        %v3269 = vrsqrt.pop %v3245
        %v3270 = vrsqrt.pop %v3246
        %v3271 = vrsqrt.pop %v3247
        %v3272 = vmul.f32 %v3032, %v3248
        %v3273 = vmul.f32 %v3033, %v3249
        %v3274 = vmul.f32 %v3034, %v3250
        %v3275 = vmul.f32 %v3035, %v3251
        %v3276 = vmul.f32 %v3036, %v3252
        %v3277 = vmul.f32 %v3037, %v3253
        %v3278 = vmul.f32 %v3038, %v3254
        %v3279 = vmul.f32 %v3039, %v3255
        %v3280 = vmul.f32 %v3040, %v3256
        %v3281 = vmul.f32 %v3041, %v3257
        %v3282 = vmul.f32 %v3042, %v3258
        %v3283 = vmul.f32 %v3043, %v3259
        %v3284 = vmul.f32 %v3044, %v3260
        %v3285 = vmul.f32 %v3045, %v3261
        %v3286 = vmul.f32 %v3046, %v3262
        %v3287 = vmul.f32 %v3047, %v3263
        %v3288 = vmul.f32 %v3048, %v3264
        %v3289 = vmul.f32 %v3049, %v3265
        %v3290 = vmul.f32 %v3050, %v3266
        %v3291 = vmul.f32 %v3051, %v3267
        %v3292 = vmul.f32 %v3052, %v3268
        %v3293 = vmul.f32 %v3053, %v3269
        %v3294 = vmul.f32 %v3054, %v3270
        %v3295 = vmul.f32 %v3055, %v3271
        %v3296 = vmul.f32 %v3056, %v3248
        %v3297 = vmul.f32 %v3057, %v3249
        %v3298 = vmul.f32 %v3058, %v3250
        %v3299 = vmul.f32 %v3059, %v3251
        %v3300 = vmul.f32 %v3060, %v3252
        %v3301 = vmul.f32 %v3061, %v3253
        %v3302 = vmul.f32 %v3062, %v3254
        %v3303 = vmul.f32 %v3063, %v3255
        %v3304 = vmul.f32 %v3064, %v3256
        %v3305 = vmul.f32 %v3065, %v3257
        %v3306 = vmul.f32 %v3066, %v3258
        %v3307 = vmul.f32 %v3067, %v3259
        %v3308 = vmul.f32 %v3068, %v3260
        %v3309 = vmul.f32 %v3069, %v3261
        %v3310 = vmul.f32 %v3070, %v3262
        %v3311 = vmul.f32 %v3071, %v3263
        %v3312 = vmul.f32 %v3072, %v3264
        %v3313 = vmul.f32 %v3073, %v3265
        %v3314 = vmul.f32 %v3074, %v3266
        %v3315 = vmul.f32 %v3075, %v3267
        %v3316 = vmul.f32 %v3076, %v3268
        %v3317 = vmul.f32 %v3077, %v3269
        %v3318 = vmul.f32 %v3078, %v3270
        %v3319 = vmul.f32 %v3079, %v3271
        %v3320 = vmul.f32 %v3080, %v3248
        %v3321 = vmul.f32 %v3081, %v3249
        %v3322 = vmul.f32 %v3082, %v3250
        %v3323 = vmul.f32 %v3083, %v3251
        %v3324 = vmul.f32 %v3084, %v3252
        %v3325 = vmul.f32 %v3085, %v3253
        %v3326 = vmul.f32 %v3086, %v3254
        %v3327 = vmul.f32 %v3087, %v3255
        %v3328 = vmul.f32 %v3088, %v3256
        %v3329 = vmul.f32 %v3089, %v3257
        %v3330 = vmul.f32 %v3090, %v3258
        %v3331 = vmul.f32 %v3091, %v3259
        %v3332 = vmul.f32 %v3092, %v3260
        %v3333 = vmul.f32 %v3093, %v3261
        %v3334 = vmul.f32 %v3094, %v3262
        %v3335 = vmul.f32 %v3095, %v3263
        %v3336 = vmul.f32 %v3096, %v3264
        %v3337 = vmul.f32 %v3097, %v3265
        %v3338 = vmul.f32 %v3098, %v3266
        %v3339 = vmul.f32 %v3099, %v3267
        %v3340 = vmul.f32 %v3100, %v3268
        %v3341 = vmul.f32 %v3101, %v3269
        %v3342 = vmul.f32 %v3102, %v3270
        %v3343 = vmul.f32 %v3103, %v3271
        %3344 = vst [vmem:[%s415] sm:$0xff] %v3272
        %3345 = vst [vmem:[%s415 + $0x8] sm:$0xff] %v3273
        %3346 = vst [vmem:[%s415 + $0x10] sm:$0xff] %v3274
        %3347 = vst [vmem:[%s415 + $0x18] sm:$0xff] %v3275
        %3348 = vst [vmem:[%s415 + $0x20] sm:$0xff] %v3276
        %3349 = vst [vmem:[%s415 + $0x28] sm:$0xff] %v3277
        %3350 = vst [vmem:[%s415 + $0x30] sm:$0xff] %v3278
        %3351 = vst [vmem:[%s415 + $0x38] sm:$0xff] %v3279
        %3352 = vst [vmem:[%s415 + $0x40] sm:$0xff] %v3280
        %3353 = vst [vmem:[%s415 + $0x48] sm:$0xff] %v3281
        %3354 = vst [vmem:[%s415 + $0x50] sm:$0xff] %v3282
        %3355 = vst [vmem:[%s415 + $0x58] sm:$0xff] %v3283
        %3356 = vst [vmem:[%s415 + $0x60] sm:$0xff] %v3284
        %3357 = vst [vmem:[%s415 + $0x68] sm:$0xff] %v3285
        %3358 = vst [vmem:[%s415 + $0x70] sm:$0xff] %v3286
        %3359 = vst [vmem:[%s415 + $0x78] sm:$0xff] %v3287
        %3360 = vst [vmem:[%s415 + $0x80] sm:$0xff] %v3288
        %3361 = vst [vmem:[%s415 + $0x88] sm:$0xff] %v3289
        %3362 = vst [vmem:[%s415 + $0x90] sm:$0xff] %v3290
        %3363 = vst [vmem:[%s415 + $0x98] sm:$0xff] %v3291
        %3364 = vst [vmem:[%s415 + $0xa0] sm:$0xff] %v3292
        %3365 = vst [vmem:[%s415 + $0xa8] sm:$0xff] %v3293
        %3366 = vst [vmem:[%s415 + $0xb0] sm:$0xff] %v3294
        %3367 = vst [vmem:[%s415 + $0xb8] sm:$0xff] %v3295
        %3368 = vst [vmem:[%s415 + $0xc0] sm:$0xff] %v3296
        %3369 = vst [vmem:[%s415 + $0xc8] sm:$0xff] %v3297
        %3370 = vst [vmem:[%s415 + $0xd0] sm:$0xff] %v3298
        %3371 = vst [vmem:[%s415 + $0xd8] sm:$0xff] %v3299
        %3372 = vst [vmem:[%s415 + $0xe0] sm:$0xff] %v3300
        %3373 = vst [vmem:[%s415 + $0xe8] sm:$0xff] %v3301
        %3374 = vst [vmem:[%s415 + $0xf0] sm:$0xff] %v3302
        %3375 = vst [vmem:[%s415 + $0xf8] sm:$0xff] %v3303
        %3376 = vst [vmem:[%s415 + $0x100] sm:$0xff] %v3304
        %3377 = vst [vmem:[%s415 + $0x108] sm:$0xff] %v3305
        %3378 = vst [vmem:[%s415 + $0x110] sm:$0xff] %v3306
        %3379 = vst [vmem:[%s415 + $0x118] sm:$0xff] %v3307
        %3380 = vst [vmem:[%s415 + $0x120] sm:$0xff] %v3308
        %3381 = vst [vmem:[%s415 + $0x128] sm:$0xff] %v3309
        %3382 = vst [vmem:[%s415 + $0x130] sm:$0xff] %v3310
        %3383 = vst [vmem:[%s415 + $0x138] sm:$0xff] %v3311
        %3384 = vst [vmem:[%s415 + $0x140] sm:$0xff] %v3312
        %3385 = vst [vmem:[%s415 + $0x148] sm:$0xff] %v3313
        %3386 = vst [vmem:[%s415 + $0x150] sm:$0xff] %v3314
        %3387 = vst [vmem:[%s415 + $0x158] sm:$0xff] %v3315
        %3388 = vst [vmem:[%s415 + $0x160] sm:$0xff] %v3316
        %3389 = vst [vmem:[%s415 + $0x168] sm:$0xff] %v3317
        %3390 = vst [vmem:[%s415 + $0x170] sm:$0xff] %v3318
        %3391 = vst [vmem:[%s415 + $0x178] sm:$0xff] %v3319
        %3392 = vst [vmem:[%s415 + $0x180] sm:$0xff] %v3320
        %3393 = vst [vmem:[%s415 + $0x188] sm:$0xff] %v3321
        %3394 = vst [vmem:[%s415 + $0x190] sm:$0xff] %v3322
        %3395 = vst [vmem:[%s415 + $0x198] sm:$0xff] %v3323
        %3396 = vst [vmem:[%s415 + $0x1a0] sm:$0xff] %v3324
        %3397 = vst [vmem:[%s415 + $0x1a8] sm:$0xff] %v3325
        %3398 = vst [vmem:[%s415 + $0x1b0] sm:$0xff] %v3326
        %3399 = vst [vmem:[%s415 + $0x1b8] sm:$0xff] %v3327
        %3400 = vst [vmem:[%s415 + $0x1c0] sm:$0xff] %v3328
        %3401 = vst [vmem:[%s415 + $0x1c8] sm:$0xff] %v3329
        %3402 = vst [vmem:[%s415 + $0x1d0] sm:$0xff] %v3330
        %3403 = vst [vmem:[%s415 + $0x1d8] sm:$0xff] %v3331
        %3404 = vst [vmem:[%s415 + $0x1e0] sm:$0xff] %v3332
        %3405 = vst [vmem:[%s415 + $0x1e8] sm:$0xff] %v3333
        %3406 = vst [vmem:[%s415 + $0x1f0] sm:$0xff] %v3334
        %3407 = vst [vmem:[%s415 + $0x1f8] sm:$0xff] %v3335
        %3408 = vst [vmem:[%s415 + $0x200] sm:$0xff] %v3336
        %3409 = vst [vmem:[%s415 + $0x208] sm:$0xff] %v3337
        %3410 = vst [vmem:[%s415 + $0x210] sm:$0xff] %v3338
        %3411 = vst [vmem:[%s415 + $0x218] sm:$0xff] %v3339
        %3412 = vst [vmem:[%s415 + $0x220] sm:$0xff] %v3340
        %3413 = vst [vmem:[%s415 + $0x228] sm:$0xff] %v3341
        %3414 = vst [vmem:[%s415 + $0x230] sm:$0xff] %v3342
        %3415 = vst [vmem:[%s415 + $0x238] sm:$0xff] %v3343
        %s3416 = sand.u32 %s176, 1
        %s3417 = scalar_lea.sflag [#allocation4], %s3416
        %s3418 = sand.u32 %s176, 1
        %s3419 = smul.addr %s3418, 192
        %s3420 = scalar_lea.vmem [#allocation11], %s3419
        %s3421 = sand.u32 %s202, 1
        %s3422 = scalar_lea.sflag [#allocation13], %s3421
        %s3423 = sand.u32 %s202, 1
        %s3424 = smul.addr %s3423, 576
        %s3425 = scalar_lea.vmem [#allocation12], %s3424
        // Predicated region
        $region65: #{tpu_custom_call.1} parent=43 // pred_check
          %p3426 = pneg %p186
        $region66: #{tpu_custom_call.1} parent=43 // pred_check_branch
          %3428 = sbr.rel (%p3426) target = $region68
        $region67: #{tpu_custom_call.1} parent=43 // pred_region
          %s3429 = smul.u32 24, %s32
          %s3431 = ssub.s32 3072, 3072
          %3432 = vsyncadd %s3417, %s3431
          %s3433 = smul.addr %s3429, 128
          %s3434 = scalar_lea.hbm %s6, %s3433
          %s3435 = sshll.u32 %s3420, 4
          %s3436 = int_to_ptr.vmem [resolvable:$true] %s3435
          %3441 = dma.vmem_to_hbm [thread:$0]  %s3436, 3072, %s3434, %s3417, 128, 128, 8
        $region68: #{tpu_custom_call.1} parent=43 // pred_fallthru
          _
        // Predicated region
        $region69: #{tpu_custom_call.1} parent=43 // pred_check
          %p3442 = pneg %p212
        $region70: #{tpu_custom_call.1} parent=43 // pred_check_branch
          %3444 = sbr.rel (%p3442) target = $region72
        $region71: #{tpu_custom_call.1} parent=43 // pred_region
          #allocation17 [shape = 'u32[6]{0}', space=smem, size = 0x18, scoped, tag = 'DMA stride descriptor']
          %s3445 = smul.u32 24, %s32
          %s3447 = ssub.s32 9216, 9216
          %3448 = vsyncadd %s3422, %s3447
          %s3449 = smul.addr %s3445, 128
          %s3450 = scalar_lea.hbm %s7, %s3449
          %s3452 = sshll.u32 1, 14
          %s3453 = sxor.u32 4294967295, %s3452
          %s3456 = sshll.u32 7, 18
          %s3457 = sxor.u32 4294967295, %s3456
          %s3458 = sand.u32 0, %s3457
          %s3460 = sor.u32 %s3458, 0
          %s3462 = sshll.u32 3, 24
          %s3463 = sxor.u32 4294967295, %s3462
          %s3464 = sand.u32 %s3460, %s3463
          %s3466 = sor.u32 %s3464, 0
          %s3467 = sshll.u32 %s3425, 4
          %s3468 = int_to_ptr.vmem [resolvable:$true] %s3467
          %3474 = sst [smem:[#allocation17]] 3072
          %s3475 = scalar_lea.smem [#allocation17], 1
          %3476 = sst [smem:[%s3475]] 6144
          %s3477 = scalar_lea.smem [#allocation17], 2
          %3478 = sst [smem:[%s3477]] 24
          %s3479 = scalar_lea.smem [#allocation17], 3
          %3480 = sst [smem:[%s3479]] 128
          %s3481 = scalar_lea.smem [#allocation17], 4
          %3482 = sst [smem:[%s3481]] 128
          %s3483 = scalar_lea.smem [#allocation17], 5
          %3484 = sst [smem:[%s3483]] 8
          %3486 = dma.general %s3468, 9216, %s3450, %s3422, [#allocation16], [#allocation17], %s3466, 0
        $region72: #{tpu_custom_call.1} parent=43 // pred_fallthru
          _
      $region44: #{tpu_custom_call.1} parent=5 // pred_fallthru
        _
      %p3487 = scmp.le.s32.totalorder 2, %s27
      // Predicated region
      $region73: #{tpu_custom_call.1} parent=5 // pred_check
        %p3488 = pneg %p3487
      $region74: #{tpu_custom_call.1} parent=5 // pred_check_branch
        %3490 = sbr.rel (%p3488) target = $region76
      $region75: #{tpu_custom_call.1} parent=5 // pred_region
        %s3491 = ssub.s32 %s27, 2
        // Predicated region
        $region77: #{tpu_custom_call.1} parent=75 // pred_check
          %p3492 = pneg %p192
        $region78: #{tpu_custom_call.1} parent=75 // pred_check_branch
          %3494 = sbr.rel (%p3492) target = $region80
        $region79: #{tpu_custom_call.1} parent=75 // pred_region
          %s3495 = sand.u32 %s177, 1
          %s3496 = scalar_lea.sflag [#allocation4], %s3495
          %s3497 = sand.u32 %s177, 1
          %s3498 = smul.addr %s3497, 192
          %s3499 = scalar_lea.vmem [#allocation11], %s3498
          %3500 = dma.done %s3496, 3072
        $region80: #{tpu_custom_call.1} parent=75 // pred_fallthru
          _
        // Predicated region
        $region81: #{tpu_custom_call.1} parent=75 // pred_check
          %p3501 = pneg %p218
        $region82: #{tpu_custom_call.1} parent=75 // pred_check_branch
          %3503 = sbr.rel (%p3501) target = $region84
        $region83: #{tpu_custom_call.1} parent=75 // pred_region
          %s3504 = sand.u32 %s203, 1
          %s3505 = scalar_lea.sflag [#allocation13], %s3504
          %s3506 = sand.u32 %s203, 1
          %s3507 = smul.addr %s3506, 576
          %s3508 = scalar_lea.vmem [#allocation12], %s3507
          %3509 = dma.done %s3505, 9216
        $region84: #{tpu_custom_call.1} parent=75 // pred_fallthru
          _
      $region76: #{tpu_custom_call.1} parent=5 // pred_fallthru
        _
    $region6: #{tpu_custom_call.1} parent=1 // loop_footer
      %s31 = sadd.s32 1, %s27
    $region7: #{tpu_custom_call.1} parent=1 // loop_footer_branch
      %26 = sbr.rel target = $region3
    $region8: #{tpu_custom_call.1} parent=1 // loop_exit
      _
    %3510 = vsyncpa [#allocation3], 1
    %s3511 = scalar_lea.sflag [#allocation3], 1
    %3512 = vsyncpa %s3511, 1
    %3513 = vsyncpa [#allocation6], 1
    %s3514 = scalar_lea.sflag [#allocation6], 1
    %3515 = vsyncpa %s3514, 1
    %3516 = vsyncpa [#allocation9], 1
    %3517 = vsyncpa [#allocation4], 1
    %s3518 = scalar_lea.sflag [#allocation4], 1
    %3519 = vsyncpa %s3518, 1
    %3520 = vsyncpa [#allocation13], 1
    %s3521 = scalar_lea.sflag [#allocation13], 1
    %3522 = vsyncpa %s3521, 1

</llo_original>
